<compile_context>
chip_gen: v5e
topology: v5e:2x2
jax: 0.10.0
libtpu: 0.0.40
codegen_flags: <defaults>
</compile_context>

<pallas_src>
import functools

import jax
import jax.numpy as jnp
from jax import lax
from jax.experimental import pallas as pl
from jax.experimental.pallas import tpu as pltpu


C_PAD = 128        # every channel width (8..64) padded to one full 128-lane vreg
NUM_CLASSES = 2


# ---------------------------------------------------------------------------
# Fused network kernel: 6 basic blocks + bn2/bn3 + avg-pool + head.
# One grid step per batch *chunk*; all params are packed and broadcast.
# ---------------------------------------------------------------------------
def _make_fused_kernel(block_meta, head_meta, S, T, T_PAD):
    M_ROWS = S * T_PAD          # rows per step = samples_per_step * padded frames

    def kernel(x_ref, w_conv_ref, bn_ref, w_fc_ref, b_fc_ref, o_ref):
        # Per-sample frame index of every row (T_PAD is a power of 2).
        row = lax.broadcasted_iota(jnp.int32, (M_ROWS, 1), 0)
        t_loc = row & (T_PAD - 1)
        left_ok = t_loc > 0            # x[t-1] exists within the same sample
        right_ok = t_loc < (T - 1)     # x[t+1] exists within the same sample
        valid = t_loc < T              # real (non-padding) frame
        lane = lax.broadcasted_iota(jnp.int32, (1, C_PAD), 1)

        def bn_row(i):                 # (1, 128) f32, static slice
            return bn_ref[i:i + 1, :]

        def conv3_bn(x, wi, si, ti):
            # im2col via XLU sublane rolls + per-sample boundary mask, then one
            # MXU contraction against the tap-stacked weight (K = 3*128).
            xl = jnp.where(left_ok, pltpu.roll(x, 1, axis=0), 0.0)
            xr = jnp.where(right_ok, pltpu.roll(x, M_ROWS - 1, axis=0), 0.0)
            xcat = jnp.concatenate(
                [xl.astype(jnp.bfloat16), x.astype(jnp.bfloat16),
                 xr.astype(jnp.bfloat16)], axis=-1)            # (M, 384) bf16
            acc = jnp.dot(xcat, w_conv_ref[wi],
                          preferred_element_type=jnp.float32)
            return acc * bn_row(si) + bn_row(ti)               # folded BN, f32

        x = x_ref[0]                                           # (M_ROWS, 128) f32

        for m in block_meta:
            if m["has_proj"]:                                  # 1x1 projection shortcut
                w_full = w_conv_ref[m["ws"]]                   # (384, 128) bf16
                wsc = w_full[C_PAD:2 * C_PAD, :]               # center tap holds 1x1 w
                sc = (jnp.dot(x.astype(jnp.bfloat16), wsc,
                              preferred_element_type=jnp.float32)
                      * bn_row(m["ss"]) + bn_row(m["ts"]))
            else:
                sc = x
            h = jnp.maximum(conv3_bn(x, m["w1"], m["s1"], m["t1"]), 0.0)
            x = jnp.maximum(conv3_bn(h, m["w2"], m["s2"], m["t2"]) + sc, 0.0)

        # AdaptiveAvgPool2d((64,1)) == mean over time; BN is affine so
        # bn(mean_t(z)) == mean_t(bn(z)) exactly.  Mask padding rows first.
        xm = jnp.where(valid, x, 0.0)
        pooled = xm.reshape(S, T_PAD, C_PAD).sum(axis=1) * (1.0 / T)   # (S, 128)
        p1 = pooled * bn_row(head_meta["s_bn2"]) + bn_row(head_meta["t_bn2"])
        p2 = pooled * bn_row(head_meta["s_bn3"]) + bn_row(head_meta["t_bn3"])
        feats = jnp.concatenate([p1, p2, p2], axis=-1).astype(jnp.bfloat16)  # (S, 384)

        w1 = w_fc_ref[0:3 * C_PAD, :]                          # (384, 128) bf16
        w2 = w_fc_ref[3 * C_PAD:, :]                           # (128, 128) bf16
        h1 = jnp.maximum(
            jnp.dot(feats, w1, preferred_element_type=jnp.float32)
            + b_fc_ref[0:1, :], 0.0)
        logits = (jnp.dot(h1.astype(jnp.bfloat16), w2,
                          preferred_element_type=jnp.float32)
                  + b_fc_ref[1:2, :])                          # (S, 128)
        logits = jnp.where(lane < NUM_CLASSES, logits, -1e30)  # mask padded lanes
        mx = jnp.max(logits, axis=-1, keepdims=True)
        e = jnp.exp(logits - mx)
        o_ref[0] = e / jnp.sum(e, axis=-1, keepdims=True)      # lane-dense softmax

    return kernel


def fused_forward(feats, params, samples_per_step=None):
    """feats: (B, T, C) f32 MFCC features, C <= C_PAD. Returns (B, 2) softmax."""
    B, T, C = feats.shape
    T_PAD = max(8, 1 << max(1, T - 1).bit_length())        # pow2, sublane aligned
    S = B if samples_per_step is None else max(1, min(samples_per_step, B))
    B_pad = -(-B // S) * S
    num_steps = B_pad // S
    M_ROWS = S * T_PAD

    # Lane-pad channels + pad time/batch, then fold batch into the M dimension.
    x = jnp.zeros((B_pad, T_PAD, C_PAD), jnp.float32)
    x = x.at[:B, :T, :C].set(feats.astype(jnp.float32))
    x = x.reshape(num_steps, M_ROWS, C_PAD)

    w_conv, bn = params["w_conv"], params["bn"]
    w_fc, b_fc = params["w_fc"], params["b_fc"]

    kernel = _make_fused_kernel(params["block_meta"], params["head_meta"],
                                S, T, T_PAD)
    out = pl.pallas_call(
        kernel,
        grid=(num_steps,),
        in_specs=[
            pl.BlockSpec((1, M_ROWS, C_PAD), lambda i: (i, 0, 0)),
            pl.BlockSpec(w_conv.shape, lambda i: (0, 0, 0)),
            pl.BlockSpec(bn.shape, lambda i: (0, 0)),
            pl.BlockSpec(w_fc.shape, lambda i: (0, 0)),
            pl.BlockSpec(b_fc.shape, lambda i: (0, 0)),
        ],
        out_specs=pl.BlockSpec((1, S, C_PAD), lambda i: (i, 0, 0)),
        out_shape=jax.ShapeDtypeStruct((num_steps, S, C_PAD), jnp.float32),
        compiler_params=pltpu.CompilerParams(
            dimension_semantics=("arbitrary",)),
    )(x, w_conv, bn, w_fc, b_fc)
    return out.reshape(B_pad, C_PAD)[:B, :NUM_CLASSES]


# ---------------------------------------------------------------------------
# MFCC front-end (plain JAX glue; FFT has no Pallas equivalent)
# TODO(synk): torchaudio MFCC reproduced with rfft, HTK mel fbank, power->dB
# (top_db=80, per-sample max) and ortho DCT-II; exact bit-parity with
# torchaudio's STFT accumulation order is not guaranteed.
# ---------------------------------------------------------------------------
def mfcc_frontend(x, *, sr, n_mfcc, n_mels, n_fft=2048, win_length=2048,
                  hop=512, pad=128):
    x = x.astype(jnp.float32)
    x = jnp.pad(x, ((0, 0), (pad, pad)))                                 # Spectrogram pad
    x = jnp.pad(x, ((0, 0), (n_fft // 2, n_fft // 2)), mode="reflect")   # center=True
    n_frames = 1 + (x.shape[1] - n_fft) // hop
    idx = jnp.arange(n_frames)[:, None] * hop + jnp.arange(n_fft)[None, :]
    frames = x[:, idx]                                                   # (B, T, n_fft)
    win = 0.5 * (1.0 - jnp.cos(2.0 * jnp.pi * jnp.arange(win_length) / win_length))
    spec = jnp.fft.rfft(frames * win, n=n_fft, axis=-1)                  # (B, T, F)
    power = jnp.real(spec) ** 2 + jnp.imag(spec) ** 2

    # HTK mel filterbank, norm=None, f_min=0, f_max=sr/2
    def hz_to_mel(f):
        return 2595.0 * jnp.log10(1.0 + f / 700.0)

    def mel_to_hz(m):
        return 700.0 * (10.0 ** (m / 2595.0) - 1.0)

    m_pts = jnp.linspace(hz_to_mel(0.0), hz_to_mel(sr / 2.0), n_mels + 2)
    f_pts = mel_to_hz(m_pts)
    all_freqs = jnp.linspace(0.0, sr / 2.0, n_fft // 2 + 1)
    f_diff = f_pts[1:] - f_pts[:-1]
    slopes = f_pts[None, :] - all_freqs[:, None]
    down = -slopes[:, :-2] / f_diff[:-1]
    up = slopes[:, 2:] / f_diff[1:]
    fb = jnp.maximum(0.0, jnp.minimum(down, up))                         # (F, n_mels)
    mel = power @ fb                                                     # (B, T, n_mels)

    # power -> dB, top_db = 80 (per-sample reference max)
    db = 10.0 * jnp.log10(jnp.maximum(mel, 1e-10))
    db = jnp.maximum(db, jnp.max(db, axis=(1, 2), keepdims=True) - 80.0)

    # DCT-II, ortho norm
    nm = jnp.arange(n_mels, dtype=jnp.float32)
    kc = jnp.arange(n_mfcc, dtype=jnp.float32)
    dct = jnp.cos(jnp.pi / n_mels * (nm[:, None] + 0.5) * kc[None, :])
    dct = dct * jnp.sqrt(2.0 / n_mels)
    dct = dct.at[:, 0].multiply(1.0 / jnp.sqrt(2.0))
    return db @ dct                                                      # (B, T, n_mfcc)


# ---------------------------------------------------------------------------
# Deterministic synthetic parameters, packed into 4 stacked kernel operands.
# ---------------------------------------------------------------------------
def _bn_fold(key, c, eps=1e-5):
    k1, k2, k3, k4 = jax.random.split(key, 4)
    gamma = 1.0 + 0.1 * jax.random.normal(k1, (c,), jnp.float32)
    beta = 0.1 * jax.random.normal(k2, (c,), jnp.float32)
    rmean = 0.1 * jax.random.normal(k3, (c,), jnp.float32)
    rvar = 1.0 + 0.1 * jnp.abs(jax.random.normal(k4, (c,), jnp.float32))
    scale = gamma / jnp.sqrt(rvar + eps)
    shift = beta - rmean * scale
    s = jnp.zeros((C_PAD,), jnp.float32).at[:c].set(scale)
    t = jnp.zeros((C_PAD,), jnp.float32).at[:c].set(shift)   # padded lanes stay exactly 0
    return s, t


def _conv3_w(key, cout, cin):
    w = jax.random.normal(key, (cout, cin, 3), jnp.float32) * jnp.sqrt(2.0 / (cin * 3))
    wp = jnp.zeros((3 * C_PAD, C_PAD), jnp.float32)
    for k in range(3):                                   # tap-stacked im2col weight
        wp = wp.at[k * C_PAD:k * C_PAD + cin, :cout].set(w[:, :, k].T)
    return wp.astype(jnp.bfloat16)


def _conv1_w(key, cout, cin):
    # 1x1 projection weight embedded in the *center tap* of a (384, 128) slot.
    w = jax.random.normal(key, (cout, cin), jnp.float32) * jnp.sqrt(2.0 / cin)
    wp = jnp.zeros((3 * C_PAD, C_PAD), jnp.float32).at[C_PAD:C_PAD + cin, :cout].set(w.T)
    return wp.astype(jnp.bfloat16)


def _linear(key, fan_in, fan_out):
    k1, k2 = jax.random.split(key)
    bound = 1.0 / jnp.sqrt(jnp.float32(fan_in))
    w = jax.random.uniform(k1, (fan_in, fan_out), jnp.float32, -bound, bound)
    b = jax.random.uniform(k2, (fan_out,), jnp.float32, -bound, bound)
    return w, b


def init_params(key, nmfcc, k=1):
    widths = [int(32 * k), int(48 * k), int(64 * k)]
    chain, cin = [], nmfcc
    for w_ in widths:
        chain.append((cin, w_))
        chain.append((w_, w_))
        cin = w_
    keys = jax.random.split(key, len(chain) + 4)

    conv_ws, bn_rows, block_meta = [], [], []
    for i, (ci, co) in enumerate(chain):
        ks = jax.random.split(keys[i], 6)
        m = {"has_proj": ci != co}
        m["w1"] = len(conv_ws); conv_ws.append(_conv3_w(ks[0], co, ci))
        s, t = _bn_fold(ks[1], co)
        m["s1"] = len(bn_rows); bn_rows.append(s)
        m["t1"] = len(bn_rows); bn_rows.append(t)
        m["w2"] = len(conv_ws); conv_ws.append(_conv3_w(ks[2], co, co))
        s, t = _bn_fold(ks[3], co)
        m["s2"] = len(bn_rows); bn_rows.append(s)
        m["t2"] = len(bn_rows); bn_rows.append(t)
        if m["has_proj"]:
            m["ws"] = len(conv_ws); conv_ws.append(_conv1_w(ks[4], co, ci))
            s, t = _bn_fold(ks[5], co)
            m["ss"] = len(bn_rows); bn_rows.append(s)
            m["ts"] = len(bn_rows); bn_rows.append(t)
        block_meta.append(m)

    c = widths[-1]
    head = {}
    s, t = _bn_fold(keys[len(chain)], c)
    head["s_bn2"] = len(bn_rows); bn_rows.append(s)
    head["t_bn2"] = len(bn_rows); bn_rows.append(t)
    s, t = _bn_fold(keys[len(chain) + 1], c)
    head["s_bn3"] = len(bn_rows); bn_rows.append(s)
    head["t_bn3"] = len(bn_rows); bn_rows.append(t)

    w1, b1 = _linear(keys[len(chain) + 2], 3 * c, c)
    w2, b2 = _linear(keys[len(chain) + 3], c, 2)
    # fc1 consumes the (S, 3*C_PAD) lane-padded pooled features [p1|p2|p2]
    w1p = jnp.zeros((3 * C_PAD, C_PAD), jnp.float32)
    for j in range(3):
        w1p = w1p.at[j * C_PAD:j * C_PAD + c, :c].set(w1[j * c:(j + 1) * c, :])
    b1p = jnp.zeros((C_PAD,), jnp.float32).at[:c].set(b1)
    w2p = jnp.zeros((C_PAD, C_PAD), jnp.float32).at[:c, :NUM_CLASSES].set(w2)
    b2p = jnp.zeros((C_PAD,), jnp.float32).at[:NUM_CLASSES].set(b2)

    return {
        "w_conv": jnp.stack(conv_ws),                                  # (15, 384, 128) bf16
        "bn": jnp.stack(bn_rows),                                      # (34, 128) f32
        "w_fc": jnp.concatenate([w1p, w2p], axis=0).astype(jnp.bfloat16),  # (512, 128) bf16
        "b_fc": jnp.stack([b1p, b2p]),                                 # (2, 128) f32
        "block_meta": tuple(block_meta),
        "head_meta": head,
    }


# ---------------------------------------------------------------------------
# Full forward pass
# TODO(synk): the MFCC front-end runs as separate XLA ops; once the fused
# kernel is us-scale it may dominate end-to-end latency.
# ---------------------------------------------------------------------------
def resnet5_big_forward(x, params, *, sr, n_mfcc, n_mels):
    feats = mfcc_frontend(x, sr=sr, n_mfcc=n_mfcc, n_mels=n_mels)   # (B, T, n_mfcc)
    return fused_forward(feats, params)                             # (B, 2) softmax


if __name__ == "__main__":
    key = jax.random.PRNGKey(0)
    k_audio, k_params = jax.random.split(key)

    B, SR, L = 2, 8000, 4096          # raw audio: 0.512 s @ 8 kHz
    NMFCC, NMELS = 8, 40              # args.nmfcc / args.nmels

    x = 0.1 * jax.random.normal(k_audio, (B, L), dtype=jnp.float32)
    params = init_params(k_params, nmfcc=NMFCC)

    fwd = jax.jit(functools.partial(resnet5_big_forward, params=params,
                                    sr=SR, n_mfcc=NMFCC, n_mels=NMELS))
    out = jax.block_until_ready(fwd(x))

    assert out.shape == (B, 2)
    assert bool(jnp.all(jnp.isfinite(out)))
    assert bool(jnp.allclose(jnp.sum(out, axis=1), 1.0, atol=1e-5))  # softmax rows
    print("KERNEL_OK")
</pallas_src>

<mosaic_0001>
module attributes {stable_mosaic.version = 11 : i64} {
  func.func @kernel(%arg0: i32, %arg1: memref<1x32x128xf32, #tpu.memory_space<vmem>>, %arg2: memref<15x384x128xbf16, #tpu.memory_space<vmem>>, %arg3: memref<34x128xf32, #tpu.memory_space<vmem>>, %arg4: memref<512x128xbf16, #tpu.memory_space<vmem>>, %arg5: memref<2x128xf32, #tpu.memory_space<vmem>>, %arg6: memref<1x2x128xf32, #tpu.memory_space<vmem>>) attributes {dimension_semantics = [#tpu.dimension_semantics<arbitrary>], iteration_bounds = array<i64: 1>, scalar_prefetch = 0 : i64, scratch_operands = 0 : i64, tpu.core_type = #tpu.core_type<tc>, window_params = [{transform_indices = @transform_0, window_bounds = array<i64: 1, 32, 128>}, {pipeline_mode = #tpu.pipeline_mode<synchronous>, transform_indices = @transform_1, window_bounds = array<i64: 15, 384, 128>}, {pipeline_mode = #tpu.pipeline_mode<synchronous>, transform_indices = @transform_2, window_bounds = array<i64: 34, 128>}, {pipeline_mode = #tpu.pipeline_mode<synchronous>, transform_indices = @transform_3, window_bounds = array<i64: 512, 128>}, {pipeline_mode = #tpu.pipeline_mode<synchronous>, transform_indices = @transform_4, window_bounds = array<i64: 2, 128>}, {transform_indices = @transform_5, window_bounds = array<i64: 1, 2, 128>}]} {
    %0 = tpu.iota {dimensions = array<i32: 0>} : vector<32x1xi32>
    %c15_i32 = arith.constant 15 : i32
    %1 = vector.broadcast %c15_i32 : i32 to vector<32x1xi32>
    %2 = arith.andi %0, %1 : vector<32x1xi32>
    %c0_i32 = arith.constant 0 : i32
    %3 = vector.broadcast %c0_i32 : i32 to vector<32x1xi32>
    %4 = arith.cmpi sgt, %2, %3 : vector<32x1xi32>
    %c8_i32 = arith.constant 8 : i32
    %5 = vector.broadcast %c8_i32 : i32 to vector<32x1xi32>
    %6 = arith.cmpi slt, %2, %5 : vector<32x1xi32>
    %c9_i32 = arith.constant 9 : i32
    %7 = vector.broadcast %c9_i32 : i32 to vector<32x1xi32>
    %8 = arith.cmpi slt, %2, %7 : vector<32x1xi32>
    %9 = tpu.iota {dimensions = array<i32: 1>} : vector<1x128xi32>
    %c0 = arith.constant 0 : index
    %c0_0 = arith.constant 0 : index
    %c0_1 = arith.constant 0 : index
    %10 = vector.load %arg1[%c0, %c0_0, %c0_1] : memref<1x32x128xf32, #tpu.memory_space<vmem>>, vector<1x32x128xf32>
    %11 = vector.shape_cast %10 : vector<1x32x128xf32> to vector<32x128xf32>
    %c2 = arith.constant 2 : index
    %c0_2 = arith.constant 0 : index
    %c0_3 = arith.constant 0 : index
    %12 = vector.load %arg2[%c2, %c0_2, %c0_3] : memref<15x384x128xbf16, #tpu.memory_space<vmem>>, vector<1x384x128xbf16>
    %13 = vector.shape_cast %12 : vector<1x384x128xbf16> to vector<384x128xbf16>
    %14 = vector.extract_strided_slice %13 {offsets = [128, 0], sizes = [128, 128], strides = [1, 1]} : vector<384x128xbf16> to vector<128x128xbf16>
    %15 = arith.truncf %11 : vector<32x128xf32> to vector<32x128xbf16>
    %cst = arith.constant dense<0.000000e+00> : vector<32x128xf32>
    %16 = tpu.matmul %15, %14, %cst {dimension_numbers = #tpu.dot_dimension_numbers<[1], [0], [0], [1], [0, 0, 1, 1], [], []>} : vector<32x128xbf16>, vector<128x128xbf16>, vector<32x128xf32> -> vector<32x128xf32>
    %c4 = arith.constant 4 : index
    %c0_4 = arith.constant 0 : index
    %17 = vector.load %arg3[%c4, %c0_4] : memref<34x128xf32, #tpu.memory_space<vmem>>, vector<1x128xf32>
    %18 = vector.broadcast %17 : vector<1x128xf32> to vector<32x128xf32>
    %19 = arith.mulf %16, %18 : vector<32x128xf32>
    %c5 = arith.constant 5 : index
    %c0_5 = arith.constant 0 : index
    %20 = vector.load %arg3[%c5, %c0_5] : memref<34x128xf32, #tpu.memory_space<vmem>>, vector<1x128xf32>
    %21 = vector.broadcast %20 : vector<1x128xf32> to vector<32x128xf32>
    %22 = arith.addf %19, %21 : vector<32x128xf32>
    %c1_i32 = arith.constant 1 : i32
    %23 = tpu.dynamic_rotate %11 by %c1_i32 dim 0 : vector<32x128xf32>, i32 -> vector<32x128xf32>
    %cst_6 = arith.constant 0.000000e+00 : f32
    %24 = vector.shape_cast %4 : vector<32x1xi1> to vector<32x1xi1>
    %25 = vector.broadcast %24 : vector<32x1xi1> to vector<32x128xi1>
    %26 = vector.broadcast %cst_6 : f32 to vector<32x128xf32>
    %27 = arith.select %25, %23, %26 : vector<32x128xi1>, vector<32x128xf32>
    %c31_i32 = arith.constant 31 : i32
    %28 = tpu.dynamic_rotate %11 by %c31_i32 dim 0 : vector<32x128xf32>, i32 -> vector<32x128xf32>
    %cst_7 = arith.constant 0.000000e+00 : f32
    %29 = vector.shape_cast %6 : vector<32x1xi1> to vector<32x1xi1>
    %30 = vector.broadcast %29 : vector<32x1xi1> to vector<32x128xi1>
    %31 = vector.broadcast %cst_7 : f32 to vector<32x128xf32>
    %32 = arith.select %30, %28, %31 : vector<32x128xi1>, vector<32x128xf32>
    %33 = arith.truncf %27 : vector<32x128xf32> to vector<32x128xbf16>
    %34 = arith.truncf %11 : vector<32x128xf32> to vector<32x128xbf16>
    %35 = arith.truncf %32 : vector<32x128xf32> to vector<32x128xbf16>
    %36 = tpu.concatenate %33, %34, %35 in 1 : vector<32x128xbf16>, vector<32x128xbf16>, vector<32x128xbf16> -> vector<32x384xbf16>
    %c0_8 = arith.constant 0 : index
    %c0_9 = arith.constant 0 : index
    %c0_10 = arith.constant 0 : index
    %37 = vector.load %arg2[%c0_8, %c0_9, %c0_10] : memref<15x384x128xbf16, #tpu.memory_space<vmem>>, vector<1x384x128xbf16>
    %38 = vector.shape_cast %37 : vector<1x384x128xbf16> to vector<384x128xbf16>
    %cst_11 = arith.constant dense<0.000000e+00> : vector<32x128xf32>
    %39 = tpu.matmul %36, %38, %cst_11 {dimension_numbers = #tpu.dot_dimension_numbers<[1], [0], [0], [1], [0, 0, 1, 1], [], []>} : vector<32x384xbf16>, vector<384x128xbf16>, vector<32x128xf32> -> vector<32x128xf32>
    %c0_12 = arith.constant 0 : index
    %c0_13 = arith.constant 0 : index
    %40 = vector.load %arg3[%c0_12, %c0_13] : memref<34x128xf32, #tpu.memory_space<vmem>>, vector<1x128xf32>
    %41 = vector.broadcast %40 : vector<1x128xf32> to vector<32x128xf32>
    %42 = arith.mulf %39, %41 : vector<32x128xf32>
    %c1 = arith.constant 1 : index
    %c0_14 = arith.constant 0 : index
    %43 = vector.load %arg3[%c1, %c0_14] : memref<34x128xf32, #tpu.memory_space<vmem>>, vector<1x128xf32>
    %44 = vector.broadcast %43 : vector<1x128xf32> to vector<32x128xf32>
    %45 = arith.addf %42, %44 : vector<32x128xf32>
    %cst_15 = arith.constant 0.000000e+00 : f32
    %46 = vector.broadcast %cst_15 : f32 to vector<32x128xf32>
    %47 = arith.maximumf %45, %46 : vector<32x128xf32>
    %c1_i32_16 = arith.constant 1 : i32
    %48 = tpu.dynamic_rotate %47 by %c1_i32_16 dim 0 : vector<32x128xf32>, i32 -> vector<32x128xf32>
    %cst_17 = arith.constant 0.000000e+00 : f32
    %49 = vector.shape_cast %4 : vector<32x1xi1> to vector<32x1xi1>
    %50 = vector.broadcast %49 : vector<32x1xi1> to vector<32x128xi1>
    %51 = vector.broadcast %cst_17 : f32 to vector<32x128xf32>
    %52 = arith.select %50, %48, %51 : vector<32x128xi1>, vector<32x128xf32>
    %c31_i32_18 = arith.constant 31 : i32
    %53 = tpu.dynamic_rotate %47 by %c31_i32_18 dim 0 : vector<32x128xf32>, i32 -> vector<32x128xf32>
    %cst_19 = arith.constant 0.000000e+00 : f32
    %54 = vector.shape_cast %6 : vector<32x1xi1> to vector<32x1xi1>
    %55 = vector.broadcast %54 : vector<32x1xi1> to vector<32x128xi1>
    %56 = vector.broadcast %cst_19 : f32 to vector<32x128xf32>
    %57 = arith.select %55, %53, %56 : vector<32x128xi1>, vector<32x128xf32>
    %58 = arith.truncf %52 : vector<32x128xf32> to vector<32x128xbf16>
    %59 = arith.truncf %47 : vector<32x128xf32> to vector<32x128xbf16>
    %60 = arith.truncf %57 : vector<32x128xf32> to vector<32x128xbf16>
    %61 = tpu.concatenate %58, %59, %60 in 1 : vector<32x128xbf16>, vector<32x128xbf16>, vector<32x128xbf16> -> vector<32x384xbf16>
    %c1_20 = arith.constant 1 : index
    %c0_21 = arith.constant 0 : index
    %c0_22 = arith.constant 0 : index
    %62 = vector.load %arg2[%c1_20, %c0_21, %c0_22] : memref<15x384x128xbf16, #tpu.memory_space<vmem>>, vector<1x384x128xbf16>
    %63 = vector.shape_cast %62 : vector<1x384x128xbf16> to vector<384x128xbf16>
    %cst_23 = arith.constant dense<0.000000e+00> : vector<32x128xf32>
    %64 = tpu.matmul %61, %63, %cst_23 {dimension_numbers = #tpu.dot_dimension_numbers<[1], [0], [0], [1], [0, 0, 1, 1], [], []>} : vector<32x384xbf16>, vector<384x128xbf16>, vector<32x128xf32> -> vector<32x128xf32>
    %c2_24 = arith.constant 2 : index
    %c0_25 = arith.constant 0 : index
    %65 = vector.load %arg3[%c2_24, %c0_25] : memref<34x128xf32, #tpu.memory_space<vmem>>, vector<1x128xf32>
    %66 = vector.broadcast %65 : vector<1x128xf32> to vector<32x128xf32>
    %67 = arith.mulf %64, %66 : vector<32x128xf32>
    %c3 = arith.constant 3 : index
    %c0_26 = arith.constant 0 : index
    %68 = vector.load %arg3[%c3, %c0_26] : memref<34x128xf32, #tpu.memory_space<vmem>>, vector<1x128xf32>
    %69 = vector.broadcast %68 : vector<1x128xf32> to vector<32x128xf32>
    %70 = arith.addf %67, %69 : vector<32x128xf32>
    %71 = arith.addf %70, %22 : vector<32x128xf32>
    %cst_27 = arith.constant 0.000000e+00 : f32
    %72 = vector.broadcast %cst_27 : f32 to vector<32x128xf32>
    %73 = arith.maximumf %71, %72 : vector<32x128xf32>
    %c1_i32_28 = arith.constant 1 : i32
    %74 = tpu.dynamic_rotate %73 by %c1_i32_28 dim 0 : vector<32x128xf32>, i32 -> vector<32x128xf32>
    %cst_29 = arith.constant 0.000000e+00 : f32
    %75 = vector.shape_cast %4 : vector<32x1xi1> to vector<32x1xi1>
    %76 = vector.broadcast %75 : vector<32x1xi1> to vector<32x128xi1>
    %77 = vector.broadcast %cst_29 : f32 to vector<32x128xf32>
    %78 = arith.select %76, %74, %77 : vector<32x128xi1>, vector<32x128xf32>
    %c31_i32_30 = arith.constant 31 : i32
    %79 = tpu.dynamic_rotate %73 by %c31_i32_30 dim 0 : vector<32x128xf32>, i32 -> vector<32x128xf32>
    %cst_31 = arith.constant 0.000000e+00 : f32
    %80 = vector.shape_cast %6 : vector<32x1xi1> to vector<32x1xi1>
    %81 = vector.broadcast %80 : vector<32x1xi1> to vector<32x128xi1>
    %82 = vector.broadcast %cst_31 : f32 to vector<32x128xf32>
    %83 = arith.select %81, %79, %82 : vector<32x128xi1>, vector<32x128xf32>
    %84 = arith.truncf %78 : vector<32x128xf32> to vector<32x128xbf16>
    %85 = arith.truncf %73 : vector<32x128xf32> to vector<32x128xbf16>
    %86 = arith.truncf %83 : vector<32x128xf32> to vector<32x128xbf16>
    %87 = tpu.concatenate %84, %85, %86 in 1 : vector<32x128xbf16>, vector<32x128xbf16>, vector<32x128xbf16> -> vector<32x384xbf16>
    %c3_32 = arith.constant 3 : index
    %c0_33 = arith.constant 0 : index
    %c0_34 = arith.constant 0 : index
    %88 = vector.load %arg2[%c3_32, %c0_33, %c0_34] : memref<15x384x128xbf16, #tpu.memory_space<vmem>>, vector<1x384x128xbf16>
    %89 = vector.shape_cast %88 : vector<1x384x128xbf16> to vector<384x128xbf16>
    %cst_35 = arith.constant dense<0.000000e+00> : vector<32x128xf32>
    %90 = tpu.matmul %87, %89, %cst_35 {dimension_numbers = #tpu.dot_dimension_numbers<[1], [0], [0], [1], [0, 0, 1, 1], [], []>} : vector<32x384xbf16>, vector<384x128xbf16>, vector<32x128xf32> -> vector<32x128xf32>
    %c6 = arith.constant 6 : index
    %c0_36 = arith.constant 0 : index
    %91 = vector.load %arg3[%c6, %c0_36] : memref<34x128xf32, #tpu.memory_space<vmem>>, vector<1x128xf32>
    %92 = vector.broadcast %91 : vector<1x128xf32> to vector<32x128xf32>
    %93 = arith.mulf %90, %92 : vector<32x128xf32>
    %c7 = arith.constant 7 : index
    %c0_37 = arith.constant 0 : index
    %94 = vector.load %arg3[%c7, %c0_37] : memref<34x128xf32, #tpu.memory_space<vmem>>, vector<1x128xf32>
    %95 = vector.broadcast %94 : vector<1x128xf32> to vector<32x128xf32>
    %96 = arith.addf %93, %95 : vector<32x128xf32>
    %cst_38 = arith.constant 0.000000e+00 : f32
    %97 = vector.broadcast %cst_38 : f32 to vector<32x128xf32>
    %98 = arith.maximumf %96, %97 : vector<32x128xf32>
    %c1_i32_39 = arith.constant 1 : i32
    %99 = tpu.dynamic_rotate %98 by %c1_i32_39 dim 0 : vector<32x128xf32>, i32 -> vector<32x128xf32>
    %cst_40 = arith.constant 0.000000e+00 : f32
    %100 = vector.shape_cast %4 : vector<32x1xi1> to vector<32x1xi1>
    %101 = vector.broadcast %100 : vector<32x1xi1> to vector<32x128xi1>
    %102 = vector.broadcast %cst_40 : f32 to vector<32x128xf32>
    %103 = arith.select %101, %99, %102 : vector<32x128xi1>, vector<32x128xf32>
    %c31_i32_41 = arith.constant 31 : i32
    %104 = tpu.dynamic_rotate %98 by %c31_i32_41 dim 0 : vector<32x128xf32>, i32 -> vector<32x128xf32>
    %cst_42 = arith.constant 0.000000e+00 : f32
    %105 = vector.shape_cast %6 : vector<32x1xi1> to vector<32x1xi1>
    %106 = vector.broadcast %105 : vector<32x1xi1> to vector<32x128xi1>
    %107 = vector.broadcast %cst_42 : f32 to vector<32x128xf32>
    %108 = arith.select %106, %104, %107 : vector<32x128xi1>, vector<32x128xf32>
    %109 = arith.truncf %103 : vector<32x128xf32> to vector<32x128xbf16>
    %110 = arith.truncf %98 : vector<32x128xf32> to vector<32x128xbf16>
    %111 = arith.truncf %108 : vector<32x128xf32> to vector<32x128xbf16>
    %112 = tpu.concatenate %109, %110, %111 in 1 : vector<32x128xbf16>, vector<32x128xbf16>, vector<32x128xbf16> -> vector<32x384xbf16>
    %c4_43 = arith.constant 4 : index
    %c0_44 = arith.constant 0 : index
    %c0_45 = arith.constant 0 : index
    %113 = vector.load %arg2[%c4_43, %c0_44, %c0_45] : memref<15x384x128xbf16, #tpu.memory_space<vmem>>, vector<1x384x128xbf16>
    %114 = vector.shape_cast %113 : vector<1x384x128xbf16> to vector<384x128xbf16>
    %cst_46 = arith.constant dense<0.000000e+00> : vector<32x128xf32>
    %115 = tpu.matmul %112, %114, %cst_46 {dimension_numbers = #tpu.dot_dimension_numbers<[1], [0], [0], [1], [0, 0, 1, 1], [], []>} : vector<32x384xbf16>, vector<384x128xbf16>, vector<32x128xf32> -> vector<32x128xf32>
    %c8 = arith.constant 8 : index
    %c0_47 = arith.constant 0 : index
    %116 = vector.load %arg3[%c8, %c0_47] : memref<34x128xf32, #tpu.memory_space<vmem>>, vector<1x128xf32>
    %117 = vector.broadcast %116 : vector<1x128xf32> to vector<32x128xf32>
    %118 = arith.mulf %115, %117 : vector<32x128xf32>
    %c9 = arith.constant 9 : index
    %c0_48 = arith.constant 0 : index
    %119 = vector.load %arg3[%c9, %c0_48] : memref<34x128xf32, #tpu.memory_space<vmem>>, vector<1x128xf32>
    %120 = vector.broadcast %119 : vector<1x128xf32> to vector<32x128xf32>
    %121 = arith.addf %118, %120 : vector<32x128xf32>
    %122 = arith.addf %121, %73 : vector<32x128xf32>
    %cst_49 = arith.constant 0.000000e+00 : f32
    %123 = vector.broadcast %cst_49 : f32 to vector<32x128xf32>
    %124 = arith.maximumf %122, %123 : vector<32x128xf32>
    %c7_50 = arith.constant 7 : index
    %c0_51 = arith.constant 0 : index
    %c0_52 = arith.constant 0 : index
    %125 = vector.load %arg2[%c7_50, %c0_51, %c0_52] : memref<15x384x128xbf16, #tpu.memory_space<vmem>>, vector<1x384x128xbf16>
    %126 = vector.shape_cast %125 : vector<1x384x128xbf16> to vector<384x128xbf16>
    %127 = vector.extract_strided_slice %126 {offsets = [128, 0], sizes = [128, 128], strides = [1, 1]} : vector<384x128xbf16> to vector<128x128xbf16>
    %128 = arith.truncf %124 : vector<32x128xf32> to vector<32x128xbf16>
    %cst_53 = arith.constant dense<0.000000e+00> : vector<32x128xf32>
    %129 = tpu.matmul %128, %127, %cst_53 {dimension_numbers = #tpu.dot_dimension_numbers<[1], [0], [0], [1], [0, 0, 1, 1], [], []>} : vector<32x128xbf16>, vector<128x128xbf16>, vector<32x128xf32> -> vector<32x128xf32>
    %c14 = arith.constant 14 : index
    %c0_54 = arith.constant 0 : index
    %130 = vector.load %arg3[%c14, %c0_54] : memref<34x128xf32, #tpu.memory_space<vmem>>, vector<1x128xf32>
    %131 = vector.broadcast %130 : vector<1x128xf32> to vector<32x128xf32>
    %132 = arith.mulf %129, %131 : vector<32x128xf32>
    %c15 = arith.constant 15 : index
    %c0_55 = arith.constant 0 : index
    %133 = vector.load %arg3[%c15, %c0_55] : memref<34x128xf32, #tpu.memory_space<vmem>>, vector<1x128xf32>
    %134 = vector.broadcast %133 : vector<1x128xf32> to vector<32x128xf32>
    %135 = arith.addf %132, %134 : vector<32x128xf32>
    %c1_i32_56 = arith.constant 1 : i32
    %136 = tpu.dynamic_rotate %124 by %c1_i32_56 dim 0 : vector<32x128xf32>, i32 -> vector<32x128xf32>
    %cst_57 = arith.constant 0.000000e+00 : f32
    %137 = vector.shape_cast %4 : vector<32x1xi1> to vector<32x1xi1>
    %138 = vector.broadcast %137 : vector<32x1xi1> to vector<32x128xi1>
    %139 = vector.broadcast %cst_57 : f32 to vector<32x128xf32>
    %140 = arith.select %138, %136, %139 : vector<32x128xi1>, vector<32x128xf32>
    %c31_i32_58 = arith.constant 31 : i32
    %141 = tpu.dynamic_rotate %124 by %c31_i32_58 dim 0 : vector<32x128xf32>, i32 -> vector<32x128xf32>
    %cst_59 = arith.constant 0.000000e+00 : f32
    %142 = vector.shape_cast %6 : vector<32x1xi1> to vector<32x1xi1>
    %143 = vector.broadcast %142 : vector<32x1xi1> to vector<32x128xi1>
    %144 = vector.broadcast %cst_59 : f32 to vector<32x128xf32>
    %145 = arith.select %143, %141, %144 : vector<32x128xi1>, vector<32x128xf32>
    %146 = arith.truncf %140 : vector<32x128xf32> to vector<32x128xbf16>
    %147 = arith.truncf %124 : vector<32x128xf32> to vector<32x128xbf16>
    %148 = arith.truncf %145 : vector<32x128xf32> to vector<32x128xbf16>
    %149 = tpu.concatenate %146, %147, %148 in 1 : vector<32x128xbf16>, vector<32x128xbf16>, vector<32x128xbf16> -> vector<32x384xbf16>
    %c5_60 = arith.constant 5 : index
    %c0_61 = arith.constant 0 : index
    %c0_62 = arith.constant 0 : index
    %150 = vector.load %arg2[%c5_60, %c0_61, %c0_62] : memref<15x384x128xbf16, #tpu.memory_space<vmem>>, vector<1x384x128xbf16>
    %151 = vector.shape_cast %150 : vector<1x384x128xbf16> to vector<384x128xbf16>
    %cst_63 = arith.constant dense<0.000000e+00> : vector<32x128xf32>
    %152 = tpu.matmul %149, %151, %cst_63 {dimension_numbers = #tpu.dot_dimension_numbers<[1], [0], [0], [1], [0, 0, 1, 1], [], []>} : vector<32x384xbf16>, vector<384x128xbf16>, vector<32x128xf32> -> vector<32x128xf32>
    %c10 = arith.constant 10 : index
    %c0_64 = arith.constant 0 : index
    %153 = vector.load %arg3[%c10, %c0_64] : memref<34x128xf32, #tpu.memory_space<vmem>>, vector<1x128xf32>
    %154 = vector.broadcast %153 : vector<1x128xf32> to vector<32x128xf32>
    %155 = arith.mulf %152, %154 : vector<32x128xf32>
    %c11 = arith.constant 11 : index
    %c0_65 = arith.constant 0 : index
    %156 = vector.load %arg3[%c11, %c0_65] : memref<34x128xf32, #tpu.memory_space<vmem>>, vector<1x128xf32>
    %157 = vector.broadcast %156 : vector<1x128xf32> to vector<32x128xf32>
    %158 = arith.addf %155, %157 : vector<32x128xf32>
    %cst_66 = arith.constant 0.000000e+00 : f32
    %159 = vector.broadcast %cst_66 : f32 to vector<32x128xf32>
    %160 = arith.maximumf %158, %159 : vector<32x128xf32>
    %c1_i32_67 = arith.constant 1 : i32
    %161 = tpu.dynamic_rotate %160 by %c1_i32_67 dim 0 : vector<32x128xf32>, i32 -> vector<32x128xf32>
    %cst_68 = arith.constant 0.000000e+00 : f32
    %162 = vector.shape_cast %4 : vector<32x1xi1> to vector<32x1xi1>
    %163 = vector.broadcast %162 : vector<32x1xi1> to vector<32x128xi1>
    %164 = vector.broadcast %cst_68 : f32 to vector<32x128xf32>
    %165 = arith.select %163, %161, %164 : vector<32x128xi1>, vector<32x128xf32>
    %c31_i32_69 = arith.constant 31 : i32
    %166 = tpu.dynamic_rotate %160 by %c31_i32_69 dim 0 : vector<32x128xf32>, i32 -> vector<32x128xf32>
    %cst_70 = arith.constant 0.000000e+00 : f32
    %167 = vector.shape_cast %6 : vector<32x1xi1> to vector<32x1xi1>
    %168 = vector.broadcast %167 : vector<32x1xi1> to vector<32x128xi1>
    %169 = vector.broadcast %cst_70 : f32 to vector<32x128xf32>
    %170 = arith.select %168, %166, %169 : vector<32x128xi1>, vector<32x128xf32>
    %171 = arith.truncf %165 : vector<32x128xf32> to vector<32x128xbf16>
    %172 = arith.truncf %160 : vector<32x128xf32> to vector<32x128xbf16>
    %173 = arith.truncf %170 : vector<32x128xf32> to vector<32x128xbf16>
    %174 = tpu.concatenate %171, %172, %173 in 1 : vector<32x128xbf16>, vector<32x128xbf16>, vector<32x128xbf16> -> vector<32x384xbf16>
    %c6_71 = arith.constant 6 : index
    %c0_72 = arith.constant 0 : index
    %c0_73 = arith.constant 0 : index
    %175 = vector.load %arg2[%c6_71, %c0_72, %c0_73] : memref<15x384x128xbf16, #tpu.memory_space<vmem>>, vector<1x384x128xbf16>
    %176 = vector.shape_cast %175 : vector<1x384x128xbf16> to vector<384x128xbf16>
    %cst_74 = arith.constant dense<0.000000e+00> : vector<32x128xf32>
    %177 = tpu.matmul %174, %176, %cst_74 {dimension_numbers = #tpu.dot_dimension_numbers<[1], [0], [0], [1], [0, 0, 1, 1], [], []>} : vector<32x384xbf16>, vector<384x128xbf16>, vector<32x128xf32> -> vector<32x128xf32>
    %c12 = arith.constant 12 : index
    %c0_75 = arith.constant 0 : index
    %178 = vector.load %arg3[%c12, %c0_75] : memref<34x128xf32, #tpu.memory_space<vmem>>, vector<1x128xf32>
    %179 = vector.broadcast %178 : vector<1x128xf32> to vector<32x128xf32>
    %180 = arith.mulf %177, %179 : vector<32x128xf32>
    %c13 = arith.constant 13 : index
    %c0_76 = arith.constant 0 : index
    %181 = vector.load %arg3[%c13, %c0_76] : memref<34x128xf32, #tpu.memory_space<vmem>>, vector<1x128xf32>
    %182 = vector.broadcast %181 : vector<1x128xf32> to vector<32x128xf32>
    %183 = arith.addf %180, %182 : vector<32x128xf32>
    %184 = arith.addf %183, %135 : vector<32x128xf32>
    %cst_77 = arith.constant 0.000000e+00 : f32
    %185 = vector.broadcast %cst_77 : f32 to vector<32x128xf32>
    %186 = arith.maximumf %184, %185 : vector<32x128xf32>
    %c1_i32_78 = arith.constant 1 : i32
    %187 = tpu.dynamic_rotate %186 by %c1_i32_78 dim 0 : vector<32x128xf32>, i32 -> vector<32x128xf32>
    %cst_79 = arith.constant 0.000000e+00 : f32
    %188 = vector.shape_cast %4 : vector<32x1xi1> to vector<32x1xi1>
    %189 = vector.broadcast %188 : vector<32x1xi1> to vector<32x128xi1>
    %190 = vector.broadcast %cst_79 : f32 to vector<32x128xf32>
    %191 = arith.select %189, %187, %190 : vector<32x128xi1>, vector<32x128xf32>
    %c31_i32_80 = arith.constant 31 : i32
    %192 = tpu.dynamic_rotate %186 by %c31_i32_80 dim 0 : vector<32x128xf32>, i32 -> vector<32x128xf32>
    %cst_81 = arith.constant 0.000000e+00 : f32
    %193 = vector.shape_cast %6 : vector<32x1xi1> to vector<32x1xi1>
    %194 = vector.broadcast %193 : vector<32x1xi1> to vector<32x128xi1>
    %195 = vector.broadcast %cst_81 : f32 to vector<32x128xf32>
    %196 = arith.select %194, %192, %195 : vector<32x128xi1>, vector<32x128xf32>
    %197 = arith.truncf %191 : vector<32x128xf32> to vector<32x128xbf16>
    %198 = arith.truncf %186 : vector<32x128xf32> to vector<32x128xbf16>
    %199 = arith.truncf %196 : vector<32x128xf32> to vector<32x128xbf16>
    %200 = tpu.concatenate %197, %198, %199 in 1 : vector<32x128xbf16>, vector<32x128xbf16>, vector<32x128xbf16> -> vector<32x384xbf16>
    %c8_82 = arith.constant 8 : index
    %c0_83 = arith.constant 0 : index
    %c0_84 = arith.constant 0 : index
    %201 = vector.load %arg2[%c8_82, %c0_83, %c0_84] : memref<15x384x128xbf16, #tpu.memory_space<vmem>>, vector<1x384x128xbf16>
    %202 = vector.shape_cast %201 : vector<1x384x128xbf16> to vector<384x128xbf16>
    %cst_85 = arith.constant dense<0.000000e+00> : vector<32x128xf32>
    %203 = tpu.matmul %200, %202, %cst_85 {dimension_numbers = #tpu.dot_dimension_numbers<[1], [0], [0], [1], [0, 0, 1, 1], [], []>} : vector<32x384xbf16>, vector<384x128xbf16>, vector<32x128xf32> -> vector<32x128xf32>
    %c16 = arith.constant 16 : index
    %c0_86 = arith.constant 0 : index
    %204 = vector.load %arg3[%c16, %c0_86] : memref<34x128xf32, #tpu.memory_space<vmem>>, vector<1x128xf32>
    %205 = vector.broadcast %204 : vector<1x128xf32> to vector<32x128xf32>
    %206 = arith.mulf %203, %205 : vector<32x128xf32>
    %c17 = arith.constant 17 : index
    %c0_87 = arith.constant 0 : index
    %207 = vector.load %arg3[%c17, %c0_87] : memref<34x128xf32, #tpu.memory_space<vmem>>, vector<1x128xf32>
    %208 = vector.broadcast %207 : vector<1x128xf32> to vector<32x128xf32>
    %209 = arith.addf %206, %208 : vector<32x128xf32>
    %cst_88 = arith.constant 0.000000e+00 : f32
    %210 = vector.broadcast %cst_88 : f32 to vector<32x128xf32>
    %211 = arith.maximumf %209, %210 : vector<32x128xf32>
    %c1_i32_89 = arith.constant 1 : i32
    %212 = tpu.dynamic_rotate %211 by %c1_i32_89 dim 0 : vector<32x128xf32>, i32 -> vector<32x128xf32>
    %cst_90 = arith.constant 0.000000e+00 : f32
    %213 = vector.shape_cast %4 : vector<32x1xi1> to vector<32x1xi1>
    %214 = vector.broadcast %213 : vector<32x1xi1> to vector<32x128xi1>
    %215 = vector.broadcast %cst_90 : f32 to vector<32x128xf32>
    %216 = arith.select %214, %212, %215 : vector<32x128xi1>, vector<32x128xf32>
    %c31_i32_91 = arith.constant 31 : i32
    %217 = tpu.dynamic_rotate %211 by %c31_i32_91 dim 0 : vector<32x128xf32>, i32 -> vector<32x128xf32>
    %cst_92 = arith.constant 0.000000e+00 : f32
    %218 = vector.shape_cast %6 : vector<32x1xi1> to vector<32x1xi1>
    %219 = vector.broadcast %218 : vector<32x1xi1> to vector<32x128xi1>
    %220 = vector.broadcast %cst_92 : f32 to vector<32x128xf32>
    %221 = arith.select %219, %217, %220 : vector<32x128xi1>, vector<32x128xf32>
    %222 = arith.truncf %216 : vector<32x128xf32> to vector<32x128xbf16>
    %223 = arith.truncf %211 : vector<32x128xf32> to vector<32x128xbf16>
    %224 = arith.truncf %221 : vector<32x128xf32> to vector<32x128xbf16>
    %225 = tpu.concatenate %222, %223, %224 in 1 : vector<32x128xbf16>, vector<32x128xbf16>, vector<32x128xbf16> -> vector<32x384xbf16>
    %c9_93 = arith.constant 9 : index
    %c0_94 = arith.constant 0 : index
    %c0_95 = arith.constant 0 : index
    %226 = vector.load %arg2[%c9_93, %c0_94, %c0_95] : memref<15x384x128xbf16, #tpu.memory_space<vmem>>, vector<1x384x128xbf16>
    %227 = vector.shape_cast %226 : vector<1x384x128xbf16> to vector<384x128xbf16>
    %cst_96 = arith.constant dense<0.000000e+00> : vector<32x128xf32>
    %228 = tpu.matmul %225, %227, %cst_96 {dimension_numbers = #tpu.dot_dimension_numbers<[1], [0], [0], [1], [0, 0, 1, 1], [], []>} : vector<32x384xbf16>, vector<384x128xbf16>, vector<32x128xf32> -> vector<32x128xf32>
    %c18 = arith.constant 18 : index
    %c0_97 = arith.constant 0 : index
    %229 = vector.load %arg3[%c18, %c0_97] : memref<34x128xf32, #tpu.memory_space<vmem>>, vector<1x128xf32>
    %230 = vector.broadcast %229 : vector<1x128xf32> to vector<32x128xf32>
    %231 = arith.mulf %228, %230 : vector<32x128xf32>
    %c19 = arith.constant 19 : index
    %c0_98 = arith.constant 0 : index
    %232 = vector.load %arg3[%c19, %c0_98] : memref<34x128xf32, #tpu.memory_space<vmem>>, vector<1x128xf32>
    %233 = vector.broadcast %232 : vector<1x128xf32> to vector<32x128xf32>
    %234 = arith.addf %231, %233 : vector<32x128xf32>
    %235 = arith.addf %234, %186 : vector<32x128xf32>
    %cst_99 = arith.constant 0.000000e+00 : f32
    %236 = vector.broadcast %cst_99 : f32 to vector<32x128xf32>
    %237 = arith.maximumf %235, %236 : vector<32x128xf32>
    %c12_100 = arith.constant 12 : index
    %c0_101 = arith.constant 0 : index
    %c0_102 = arith.constant 0 : index
    %238 = vector.load %arg2[%c12_100, %c0_101, %c0_102] : memref<15x384x128xbf16, #tpu.memory_space<vmem>>, vector<1x384x128xbf16>
    %239 = vector.shape_cast %238 : vector<1x384x128xbf16> to vector<384x128xbf16>
    %240 = vector.extract_strided_slice %239 {offsets = [128, 0], sizes = [128, 128], strides = [1, 1]} : vector<384x128xbf16> to vector<128x128xbf16>
    %241 = arith.truncf %237 : vector<32x128xf32> to vector<32x128xbf16>
    %cst_103 = arith.constant dense<0.000000e+00> : vector<32x128xf32>
    %242 = tpu.matmul %241, %240, %cst_103 {dimension_numbers = #tpu.dot_dimension_numbers<[1], [0], [0], [1], [0, 0, 1, 1], [], []>} : vector<32x128xbf16>, vector<128x128xbf16>, vector<32x128xf32> -> vector<32x128xf32>
    %c24 = arith.constant 24 : index
    %c0_104 = arith.constant 0 : index
    %243 = vector.load %arg3[%c24, %c0_104] : memref<34x128xf32, #tpu.memory_space<vmem>>, vector<1x128xf32>
    %244 = vector.broadcast %243 : vector<1x128xf32> to vector<32x128xf32>
    %245 = arith.mulf %242, %244 : vector<32x128xf32>
    %c25 = arith.constant 25 : index
    %c0_105 = arith.constant 0 : index
    %246 = vector.load %arg3[%c25, %c0_105] : memref<34x128xf32, #tpu.memory_space<vmem>>, vector<1x128xf32>
    %247 = vector.broadcast %246 : vector<1x128xf32> to vector<32x128xf32>
    %248 = arith.addf %245, %247 : vector<32x128xf32>
    %c1_i32_106 = arith.constant 1 : i32
    %249 = tpu.dynamic_rotate %237 by %c1_i32_106 dim 0 : vector<32x128xf32>, i32 -> vector<32x128xf32>
    %cst_107 = arith.constant 0.000000e+00 : f32
    %250 = vector.shape_cast %4 : vector<32x1xi1> to vector<32x1xi1>
    %251 = vector.broadcast %250 : vector<32x1xi1> to vector<32x128xi1>
    %252 = vector.broadcast %cst_107 : f32 to vector<32x128xf32>
    %253 = arith.select %251, %249, %252 : vector<32x128xi1>, vector<32x128xf32>
    %c31_i32_108 = arith.constant 31 : i32
    %254 = tpu.dynamic_rotate %237 by %c31_i32_108 dim 0 : vector<32x128xf32>, i32 -> vector<32x128xf32>
    %cst_109 = arith.constant 0.000000e+00 : f32
    %255 = vector.shape_cast %6 : vector<32x1xi1> to vector<32x1xi1>
    %256 = vector.broadcast %255 : vector<32x1xi1> to vector<32x128xi1>
    %257 = vector.broadcast %cst_109 : f32 to vector<32x128xf32>
    %258 = arith.select %256, %254, %257 : vector<32x128xi1>, vector<32x128xf32>
    %259 = arith.truncf %253 : vector<32x128xf32> to vector<32x128xbf16>
    %260 = arith.truncf %237 : vector<32x128xf32> to vector<32x128xbf16>
    %261 = arith.truncf %258 : vector<32x128xf32> to vector<32x128xbf16>
    %262 = tpu.concatenate %259, %260, %261 in 1 : vector<32x128xbf16>, vector<32x128xbf16>, vector<32x128xbf16> -> vector<32x384xbf16>
    %c10_110 = arith.constant 10 : index
    %c0_111 = arith.constant 0 : index
    %c0_112 = arith.constant 0 : index
    %263 = vector.load %arg2[%c10_110, %c0_111, %c0_112] : memref<15x384x128xbf16, #tpu.memory_space<vmem>>, vector<1x384x128xbf16>
    %264 = vector.shape_cast %263 : vector<1x384x128xbf16> to vector<384x128xbf16>
    %cst_113 = arith.constant dense<0.000000e+00> : vector<32x128xf32>
    %265 = tpu.matmul %262, %264, %cst_113 {dimension_numbers = #tpu.dot_dimension_numbers<[1], [0], [0], [1], [0, 0, 1, 1], [], []>} : vector<32x384xbf16>, vector<384x128xbf16>, vector<32x128xf32> -> vector<32x128xf32>
    %c20 = arith.constant 20 : index
    %c0_114 = arith.constant 0 : index
    %266 = vector.load %arg3[%c20, %c0_114] : memref<34x128xf32, #tpu.memory_space<vmem>>, vector<1x128xf32>
    %267 = vector.broadcast %266 : vector<1x128xf32> to vector<32x128xf32>
    %268 = arith.mulf %265, %267 : vector<32x128xf32>
    %c21 = arith.constant 21 : index
    %c0_115 = arith.constant 0 : index
    %269 = vector.load %arg3[%c21, %c0_115] : memref<34x128xf32, #tpu.memory_space<vmem>>, vector<1x128xf32>
    %270 = vector.broadcast %269 : vector<1x128xf32> to vector<32x128xf32>
    %271 = arith.addf %268, %270 : vector<32x128xf32>
    %cst_116 = arith.constant 0.000000e+00 : f32
    %272 = vector.broadcast %cst_116 : f32 to vector<32x128xf32>
    %273 = arith.maximumf %271, %272 : vector<32x128xf32>
    %c1_i32_117 = arith.constant 1 : i32
    %274 = tpu.dynamic_rotate %273 by %c1_i32_117 dim 0 : vector<32x128xf32>, i32 -> vector<32x128xf32>
    %cst_118 = arith.constant 0.000000e+00 : f32
    %275 = vector.shape_cast %4 : vector<32x1xi1> to vector<32x1xi1>
    %276 = vector.broadcast %275 : vector<32x1xi1> to vector<32x128xi1>
    %277 = vector.broadcast %cst_118 : f32 to vector<32x128xf32>
    %278 = arith.select %276, %274, %277 : vector<32x128xi1>, vector<32x128xf32>
    %c31_i32_119 = arith.constant 31 : i32
    %279 = tpu.dynamic_rotate %273 by %c31_i32_119 dim 0 : vector<32x128xf32>, i32 -> vector<32x128xf32>
    %cst_120 = arith.constant 0.000000e+00 : f32
    %280 = vector.shape_cast %6 : vector<32x1xi1> to vector<32x1xi1>
    %281 = vector.broadcast %280 : vector<32x1xi1> to vector<32x128xi1>
    %282 = vector.broadcast %cst_120 : f32 to vector<32x128xf32>
    %283 = arith.select %281, %279, %282 : vector<32x128xi1>, vector<32x128xf32>
    %284 = arith.truncf %278 : vector<32x128xf32> to vector<32x128xbf16>
    %285 = arith.truncf %273 : vector<32x128xf32> to vector<32x128xbf16>
    %286 = arith.truncf %283 : vector<32x128xf32> to vector<32x128xbf16>
    %287 = tpu.concatenate %284, %285, %286 in 1 : vector<32x128xbf16>, vector<32x128xbf16>, vector<32x128xbf16> -> vector<32x384xbf16>
    %c11_121 = arith.constant 11 : index
    %c0_122 = arith.constant 0 : index
    %c0_123 = arith.constant 0 : index
    %288 = vector.load %arg2[%c11_121, %c0_122, %c0_123] : memref<15x384x128xbf16, #tpu.memory_space<vmem>>, vector<1x384x128xbf16>
    %289 = vector.shape_cast %288 : vector<1x384x128xbf16> to vector<384x128xbf16>
    %cst_124 = arith.constant dense<0.000000e+00> : vector<32x128xf32>
    %290 = tpu.matmul %287, %289, %cst_124 {dimension_numbers = #tpu.dot_dimension_numbers<[1], [0], [0], [1], [0, 0, 1, 1], [], []>} : vector<32x384xbf16>, vector<384x128xbf16>, vector<32x128xf32> -> vector<32x128xf32>
    %c22 = arith.constant 22 : index
    %c0_125 = arith.constant 0 : index
    %291 = vector.load %arg3[%c22, %c0_125] : memref<34x128xf32, #tpu.memory_space<vmem>>, vector<1x128xf32>
    %292 = vector.broadcast %291 : vector<1x128xf32> to vector<32x128xf32>
    %293 = arith.mulf %290, %292 : vector<32x128xf32>
    %c23 = arith.constant 23 : index
    %c0_126 = arith.constant 0 : index
    %294 = vector.load %arg3[%c23, %c0_126] : memref<34x128xf32, #tpu.memory_space<vmem>>, vector<1x128xf32>
    %295 = vector.broadcast %294 : vector<1x128xf32> to vector<32x128xf32>
    %296 = arith.addf %293, %295 : vector<32x128xf32>
    %297 = arith.addf %296, %248 : vector<32x128xf32>
    %cst_127 = arith.constant 0.000000e+00 : f32
    %298 = vector.broadcast %cst_127 : f32 to vector<32x128xf32>
    %299 = arith.maximumf %297, %298 : vector<32x128xf32>
    %c1_i32_128 = arith.constant 1 : i32
    %300 = tpu.dynamic_rotate %299 by %c1_i32_128 dim 0 : vector<32x128xf32>, i32 -> vector<32x128xf32>
    %cst_129 = arith.constant 0.000000e+00 : f32
    %301 = vector.shape_cast %4 : vector<32x1xi1> to vector<32x1xi1>
    %302 = vector.broadcast %301 : vector<32x1xi1> to vector<32x128xi1>
    %303 = vector.broadcast %cst_129 : f32 to vector<32x128xf32>
    %304 = arith.select %302, %300, %303 : vector<32x128xi1>, vector<32x128xf32>
    %c31_i32_130 = arith.constant 31 : i32
    %305 = tpu.dynamic_rotate %299 by %c31_i32_130 dim 0 : vector<32x128xf32>, i32 -> vector<32x128xf32>
    %cst_131 = arith.constant 0.000000e+00 : f32
    %306 = vector.shape_cast %6 : vector<32x1xi1> to vector<32x1xi1>
    %307 = vector.broadcast %306 : vector<32x1xi1> to vector<32x128xi1>
    %308 = vector.broadcast %cst_131 : f32 to vector<32x128xf32>
    %309 = arith.select %307, %305, %308 : vector<32x128xi1>, vector<32x128xf32>
    %310 = arith.truncf %304 : vector<32x128xf32> to vector<32x128xbf16>
    %311 = arith.truncf %299 : vector<32x128xf32> to vector<32x128xbf16>
    %312 = arith.truncf %309 : vector<32x128xf32> to vector<32x128xbf16>
    %313 = tpu.concatenate %310, %311, %312 in 1 : vector<32x128xbf16>, vector<32x128xbf16>, vector<32x128xbf16> -> vector<32x384xbf16>
    %c13_132 = arith.constant 13 : index
    %c0_133 = arith.constant 0 : index
    %c0_134 = arith.constant 0 : index
    %314 = vector.load %arg2[%c13_132, %c0_133, %c0_134] : memref<15x384x128xbf16, #tpu.memory_space<vmem>>, vector<1x384x128xbf16>
    %315 = vector.shape_cast %314 : vector<1x384x128xbf16> to vector<384x128xbf16>
    %cst_135 = arith.constant dense<0.000000e+00> : vector<32x128xf32>
    %316 = tpu.matmul %313, %315, %cst_135 {dimension_numbers = #tpu.dot_dimension_numbers<[1], [0], [0], [1], [0, 0, 1, 1], [], []>} : vector<32x384xbf16>, vector<384x128xbf16>, vector<32x128xf32> -> vector<32x128xf32>
    %c26 = arith.constant 26 : index
    %c0_136 = arith.constant 0 : index
    %317 = vector.load %arg3[%c26, %c0_136] : memref<34x128xf32, #tpu.memory_space<vmem>>, vector<1x128xf32>
    %318 = vector.broadcast %317 : vector<1x128xf32> to vector<32x128xf32>
    %319 = arith.mulf %316, %318 : vector<32x128xf32>
    %c27 = arith.constant 27 : index
    %c0_137 = arith.constant 0 : index
    %320 = vector.load %arg3[%c27, %c0_137] : memref<34x128xf32, #tpu.memory_space<vmem>>, vector<1x128xf32>
    %321 = vector.broadcast %320 : vector<1x128xf32> to vector<32x128xf32>
    %322 = arith.addf %319, %321 : vector<32x128xf32>
    %cst_138 = arith.constant 0.000000e+00 : f32
    %323 = vector.broadcast %cst_138 : f32 to vector<32x128xf32>
    %324 = arith.maximumf %322, %323 : vector<32x128xf32>
    %c1_i32_139 = arith.constant 1 : i32
    %325 = tpu.dynamic_rotate %324 by %c1_i32_139 dim 0 : vector<32x128xf32>, i32 -> vector<32x128xf32>
    %cst_140 = arith.constant 0.000000e+00 : f32
    %326 = vector.shape_cast %4 : vector<32x1xi1> to vector<32x1xi1>
    %327 = vector.broadcast %326 : vector<32x1xi1> to vector<32x128xi1>
    %328 = vector.broadcast %cst_140 : f32 to vector<32x128xf32>
    %329 = arith.select %327, %325, %328 : vector<32x128xi1>, vector<32x128xf32>
    %c31_i32_141 = arith.constant 31 : i32
    %330 = tpu.dynamic_rotate %324 by %c31_i32_141 dim 0 : vector<32x128xf32>, i32 -> vector<32x128xf32>
    %cst_142 = arith.constant 0.000000e+00 : f32
    %331 = vector.shape_cast %6 : vector<32x1xi1> to vector<32x1xi1>
    %332 = vector.broadcast %331 : vector<32x1xi1> to vector<32x128xi1>
    %333 = vector.broadcast %cst_142 : f32 to vector<32x128xf32>
    %334 = arith.select %332, %330, %333 : vector<32x128xi1>, vector<32x128xf32>
    %335 = arith.truncf %329 : vector<32x128xf32> to vector<32x128xbf16>
    %336 = arith.truncf %324 : vector<32x128xf32> to vector<32x128xbf16>
    %337 = arith.truncf %334 : vector<32x128xf32> to vector<32x128xbf16>
    %338 = tpu.concatenate %335, %336, %337 in 1 : vector<32x128xbf16>, vector<32x128xbf16>, vector<32x128xbf16> -> vector<32x384xbf16>
    %c14_143 = arith.constant 14 : index
    %c0_144 = arith.constant 0 : index
    %c0_145 = arith.constant 0 : index
    %339 = vector.load %arg2[%c14_143, %c0_144, %c0_145] : memref<15x384x128xbf16, #tpu.memory_space<vmem>>, vector<1x384x128xbf16>
    %340 = vector.shape_cast %339 : vector<1x384x128xbf16> to vector<384x128xbf16>
    %cst_146 = arith.constant dense<0.000000e+00> : vector<32x128xf32>
    %341 = tpu.matmul %338, %340, %cst_146 {dimension_numbers = #tpu.dot_dimension_numbers<[1], [0], [0], [1], [0, 0, 1, 1], [], []>} : vector<32x384xbf16>, vector<384x128xbf16>, vector<32x128xf32> -> vector<32x128xf32>
    %c28 = arith.constant 28 : index
    %c0_147 = arith.constant 0 : index
    %342 = vector.load %arg3[%c28, %c0_147] : memref<34x128xf32, #tpu.memory_space<vmem>>, vector<1x128xf32>
    %343 = vector.broadcast %342 : vector<1x128xf32> to vector<32x128xf32>
    %344 = arith.mulf %341, %343 : vector<32x128xf32>
    %c29 = arith.constant 29 : index
    %c0_148 = arith.constant 0 : index
    %345 = vector.load %arg3[%c29, %c0_148] : memref<34x128xf32, #tpu.memory_space<vmem>>, vector<1x128xf32>
    %346 = vector.broadcast %345 : vector<1x128xf32> to vector<32x128xf32>
    %347 = arith.addf %344, %346 : vector<32x128xf32>
    %348 = arith.addf %347, %299 : vector<32x128xf32>
    %cst_149 = arith.constant 0.000000e+00 : f32
    %349 = vector.broadcast %cst_149 : f32 to vector<32x128xf32>
    %350 = arith.maximumf %348, %349 : vector<32x128xf32>
    %cst_150 = arith.constant 0.000000e+00 : f32
    %351 = vector.shape_cast %8 : vector<32x1xi1> to vector<32x1xi1>
    %352 = vector.broadcast %351 : vector<32x1xi1> to vector<32x128xi1>
    %353 = vector.broadcast %cst_150 : f32 to vector<32x128xf32>
    %354 = arith.select %352, %350, %353 : vector<32x128xi1>, vector<32x128xf32>
    %355 = vector.shape_cast %354 : vector<32x128xf32> to vector<2x16x128xf32>
    %cst_151 = arith.constant dense<0.000000e+00> : vector<2x128xf32>
    %356 = vector.multi_reduction <add>, %355, %cst_151 [1] : vector<2x16x128xf32> to vector<2x128xf32>
    %cst_152 = arith.constant 0.111111112 : f32
    %357 = vector.broadcast %cst_152 : f32 to vector<2x128xf32>
    %358 = arith.mulf %356, %357 : vector<2x128xf32>
    %c30 = arith.constant 30 : index
    %c0_153 = arith.constant 0 : index
    %359 = vector.load %arg3[%c30, %c0_153] : memref<34x128xf32, #tpu.memory_space<vmem>>, vector<1x128xf32>
    %360 = vector.broadcast %359 : vector<1x128xf32> to vector<2x128xf32>
    %361 = arith.mulf %358, %360 : vector<2x128xf32>
    %c31 = arith.constant 31 : index
    %c0_154 = arith.constant 0 : index
    %362 = vector.load %arg3[%c31, %c0_154] : memref<34x128xf32, #tpu.memory_space<vmem>>, vector<1x128xf32>
    %363 = vector.broadcast %362 : vector<1x128xf32> to vector<2x128xf32>
    %364 = arith.addf %361, %363 : vector<2x128xf32>
    %c32 = arith.constant 32 : index
    %c0_155 = arith.constant 0 : index
    %365 = vector.load %arg3[%c32, %c0_155] : memref<34x128xf32, #tpu.memory_space<vmem>>, vector<1x128xf32>
    %366 = vector.broadcast %365 : vector<1x128xf32> to vector<2x128xf32>
    %367 = arith.mulf %358, %366 : vector<2x128xf32>
    %c33 = arith.constant 33 : index
    %c0_156 = arith.constant 0 : index
    %368 = vector.load %arg3[%c33, %c0_156] : memref<34x128xf32, #tpu.memory_space<vmem>>, vector<1x128xf32>
    %369 = vector.broadcast %368 : vector<1x128xf32> to vector<2x128xf32>
    %370 = arith.addf %367, %369 : vector<2x128xf32>
    %371 = tpu.concatenate %364, %370, %370 in 1 : vector<2x128xf32>, vector<2x128xf32>, vector<2x128xf32> -> vector<2x384xf32>
    %372 = arith.truncf %371 : vector<2x384xf32> to vector<2x384xbf16>
    %c0_157 = arith.constant 0 : index
    %c0_158 = arith.constant 0 : index
    %373 = vector.load %arg4[%c0_157, %c0_158] : memref<512x128xbf16, #tpu.memory_space<vmem>>, vector<384x128xbf16>
    %c384 = arith.constant 384 : index
    %c0_159 = arith.constant 0 : index
    %374 = vector.load %arg4[%c384, %c0_159] : memref<512x128xbf16, #tpu.memory_space<vmem>>, vector<128x128xbf16>
    %cst_160 = arith.constant dense<0.000000e+00> : vector<2x128xf32>
    %375 = tpu.matmul %372, %373, %cst_160 {dimension_numbers = #tpu.dot_dimension_numbers<[1], [0], [0], [1], [0, 0, 1, 1], [], []>} : vector<2x384xbf16>, vector<384x128xbf16>, vector<2x128xf32> -> vector<2x128xf32>
    %c0_161 = arith.constant 0 : index
    %c0_162 = arith.constant 0 : index
    %376 = vector.load %arg5[%c0_161, %c0_162] : memref<2x128xf32, #tpu.memory_space<vmem>>, vector<1x128xf32>
    %377 = vector.broadcast %376 : vector<1x128xf32> to vector<2x128xf32>
    %378 = arith.addf %375, %377 : vector<2x128xf32>
    %cst_163 = arith.constant 0.000000e+00 : f32
    %379 = vector.broadcast %cst_163 : f32 to vector<2x128xf32>
    %380 = arith.maximumf %378, %379 : vector<2x128xf32>
    %381 = arith.truncf %380 : vector<2x128xf32> to vector<2x128xbf16>
    %cst_164 = arith.constant dense<0.000000e+00> : vector<2x128xf32>
    %382 = tpu.matmul %381, %374, %cst_164 {dimension_numbers = #tpu.dot_dimension_numbers<[1], [0], [0], [1], [0, 0, 1, 1], [], []>} : vector<2x128xbf16>, vector<128x128xbf16>, vector<2x128xf32> -> vector<2x128xf32>
    %c1_165 = arith.constant 1 : index
    %c0_166 = arith.constant 0 : index
    %383 = vector.load %arg5[%c1_165, %c0_166] : memref<2x128xf32, #tpu.memory_space<vmem>>, vector<1x128xf32>
    %384 = vector.broadcast %383 : vector<1x128xf32> to vector<2x128xf32>
    %385 = arith.addf %382, %384 : vector<2x128xf32>
    %c2_i32 = arith.constant 2 : i32
    %386 = vector.broadcast %c2_i32 : i32 to vector<1x128xi32>
    %387 = arith.cmpi slt, %9, %386 : vector<1x128xi32>
    %cst_167 = arith.constant -1.000000e+30 : f32
    %388 = vector.shape_cast %387 : vector<1x128xi1> to vector<1x128xi1>
    %389 = vector.broadcast %388 : vector<1x128xi1> to vector<2x128xi1>
    %390 = vector.broadcast %cst_167 : f32 to vector<2x128xf32>
    %391 = arith.select %389, %385, %390 : vector<2x128xi1>, vector<2x128xf32>
    %cst_168 = arith.constant dense<0xFF800000> : vector<2xf32>
    %392 = vector.multi_reduction <maximumf>, %391, %cst_168 [1] : vector<2x128xf32> to vector<2xf32>
    %393 = vector.shape_cast %392 : vector<2xf32> to vector<2x1xf32>
    %394 = vector.broadcast %393 : vector<2x1xf32> to vector<2x128xf32>
    %395 = arith.subf %391, %394 : vector<2x128xf32>
    %396 = math.exp %395 : vector<2x128xf32>
    %cst_169 = arith.constant dense<0.000000e+00> : vector<2xf32>
    %397 = vector.multi_reduction <add>, %396, %cst_169 [1] : vector<2x128xf32> to vector<2xf32>
    %398 = vector.shape_cast %397 : vector<2xf32> to vector<2x1xf32>
    %399 = vector.broadcast %398 : vector<2x1xf32> to vector<2x128xf32>
    %400 = arith.divf %396, %399 : vector<2x128xf32>
    %c0_170 = arith.constant 0 : index
    %c0_171 = arith.constant 0 : index
    %c0_172 = arith.constant 0 : index
    %401 = vector.load %arg6[%c0_170, %c0_171, %c0_172] : memref<1x2x128xf32, #tpu.memory_space<vmem>>, vector<1x2x128xf32>
    %402 = vector.shape_cast %401 : vector<1x2x128xf32> to vector<2x128xf32>
    %403 = vector.shape_cast %400 : vector<2x128xf32> to vector<1x2x128xf32>
    tpu.vector_store %arg6[%c0_170, %c0_171, %c0_172], %403 {strides = array<i32>} : memref<1x2x128xf32, #tpu.memory_space<vmem>>, vector<1x2x128xf32>,
    return
  }
  func.func @transform_0(%arg0: i32) -> (i32, i32, i32) {
    %c0_i32 = arith.constant 0 : i32
    %c0_i32_0 = arith.constant 0 : i32
    %c0_i32_1 = arith.constant 0 : i32
    return %arg0, %c0_i32, %c0_i32_0 : i32, i32, i32
  }
  func.func @transform_1(%arg0: i32) -> (i32, i32, i32) {
    %c0_i32 = arith.constant 0 : i32
    %c0_i32_0 = arith.constant 0 : i32
    %c0_i32_1 = arith.constant 0 : i32
    %c0_i32_2 = arith.constant 0 : i32
    return %c0_i32, %c0_i32_0, %c0_i32_1 : i32, i32, i32
  }
  func.func @transform_2(%arg0: i32) -> (i32, i32) {
    %c0_i32 = arith.constant 0 : i32
    %c0_i32_0 = arith.constant 0 : i32
    %c0_i32_1 = arith.constant 0 : i32
    return %c0_i32, %c0_i32_0 : i32, i32
  }
  func.func @transform_3(%arg0: i32) -> (i32, i32) {
    %c0_i32 = arith.constant 0 : i32
    %c0_i32_0 = arith.constant 0 : i32
    %c0_i32_1 = arith.constant 0 : i32
    return %c0_i32, %c0_i32_0 : i32, i32
  }
  func.func @transform_4(%arg0: i32) -> (i32, i32) {
    %c0_i32 = arith.constant 0 : i32
    %c0_i32_0 = arith.constant 0 : i32
    %c0_i32_1 = arith.constant 0 : i32
    return %c0_i32, %c0_i32_0 : i32, i32
  }
  func.func @transform_5(%arg0: i32) -> (i32, i32, i32) {
    %c0_i32 = arith.constant 0 : i32
    %c0_i32_0 = arith.constant 0 : i32
    %c0_i32_1 = arith.constant 0 : i32
    return %arg0, %c0_i32, %c0_i32_0 : i32, i32, i32
  }
}

</mosaic_0001>

<llo_original>
// kernel: resnet5_big_forward.1
$region0: #{resnet5_big_forward.1}
  #allocation0 [shape = 'u32[]', space=smem, size = 0x4, offset = 0x4, fixed_abs, tag = 'smem constant byte address 0x4 - core index']
  #allocation1 [shape = 'u32[72,128]{1,0:T(1,128)}', space=vmem, size = 0x9000, scoped, tag = 'internal scratch']
  %s0 = inlined_call_operand.vmem [shape: f32[1,32,128], index: 0, kind: input, shape index: {}]
  %s1 = inlined_call_operand.vmem [shape: bf16[15,384,128], index: 1, kind: input, shape index: {}]
  %s2 = inlined_call_operand.vmem [shape: f32[34,128], index: 2, kind: input, shape index: {}]
  %s3 = inlined_call_operand.vmem [shape: bf16[512,128], index: 3, kind: input, shape index: {}]
  %s4 = inlined_call_operand.vmem [shape: f32[2,128], index: 4, kind: input, shape index: {}]
  %s5 = inlined_call_operand.hbm [shape: f32[1,2,128], index: 5, kind: output, shape index: {}]
  %s6 = sld [smem:[#allocation0]]
  $region30: #{resnet5_big_forward.1} parent=0
    _
  %s8 = ssub.s32 1, %s6
  %s9 = scalar_select 0, %s8, %s6
  $region1: #{resnet5_big_forward.1} parent=0
    #allocation2 [shape = 'u8[1024]{0}', space=vmem, size = 0x400, scoped, tag = 'output window, operand 0, single buffered']
    #allocation3 [shape = 's32[1]{0}', space=sflag, size = 0x4, scoped, tag = 'scoped memory for resnet5_big_forward.1']
    %10 = vsyncpa [#allocation3], 0
    // Predicated region
    $region2: #{resnet5_big_forward.1} parent=1 // pred_check
      _
    $region3: #{resnet5_big_forward.1} parent=1 // pred_check_branch
      %12 = sbr.rel (0) target = $region5
    $region4: #{resnet5_big_forward.1} parent=1 // pred_region
      _
    $region5: #{resnet5_big_forward.1} parent=1 // pred_fallthru
      _
    // Predicated region
    $region6: #{resnet5_big_forward.1} parent=1 // pred_check
      _
    $region7: #{resnet5_big_forward.1} parent=1 // pred_check_branch
      %14 = sbr.rel (0) target = $region9
    $region8: #{resnet5_big_forward.1} parent=1 // pred_region
      _
    $region9: #{resnet5_big_forward.1} parent=1 // pred_fallthru
      _
    // Predicated region
    $region10: #{resnet5_big_forward.1} parent=1 // pred_check
      _
    $region11: #{resnet5_big_forward.1} parent=1 // pred_check_branch
      %16 = sbr.rel (0) target = $region13
    $region12: #{resnet5_big_forward.1} parent=1 // pred_region
      _
    $region13: #{resnet5_big_forward.1} parent=1 // pred_fallthru
      _
    // Predicated region
    $region14: #{resnet5_big_forward.1} parent=1 // pred_check
      _
    $region15: #{resnet5_big_forward.1} parent=1 // pred_check_branch
      %18 = sbr.rel (0) target = $region17
    $region16: #{resnet5_big_forward.1} parent=1 // pred_region
      _
    $region17: #{resnet5_big_forward.1} parent=1 // pred_fallthru
      _
    // Predicated region
    $region18: #{resnet5_big_forward.1} parent=1 // pred_check
      _
    $region19: #{resnet5_big_forward.1} parent=1 // pred_check_branch
      %20 = sbr.rel (0) target = $region21
    $region20: #{resnet5_big_forward.1} parent=1 // pred_region
      _
    $region21: #{resnet5_big_forward.1} parent=1 // pred_fallthru
      _
    %v21 = vlaneseq
    %v22 = vshrl.u32 %v21, 7
    %v23 = vadd.s32 %v22, 8
    %v24 = vadd.s32 %v22, 16
    %v25 = vadd.s32 %v22, 24
    %v26 = vand.u32 %v22, 15
    %v27 = vand.u32 %v23, 15
    %v28 = vand.u32 %v24, 15
    %v29 = vand.u32 %v25, 15
    %vm30 = vcmp.gt.s32.totalorder %v26, 0
    %vm31 = vcmp.gt.s32.totalorder %v27, 0
    %vm32 = vcmp.gt.s32.totalorder %v28, 0
    %vm33 = vcmp.gt.s32.totalorder %v29, 0
    %vm34 = vcmp.lt.s32.totalorder %v26, 8
    %vm35 = vcmp.lt.s32.totalorder %v27, 8
    %vm36 = vcmp.lt.s32.totalorder %v28, 8
    %vm37 = vcmp.lt.s32.totalorder %v29, 8
    %vm38 = vcmp.lt.s32.totalorder %v26, 9
    %vm39 = vcmp.lt.s32.totalorder %v27, 9
    %vm40 = vcmp.lt.s32.totalorder %v28, 9
    %vm41 = vcmp.lt.s32.totalorder %v29, 9
    %v42 = vlaneseq
    %v43 = vand.u32 %v42, 127
    %v44 = vld [vmem:[%s0] sm:$0xff]
    %v45 = vld [vmem:[%s0 + $0x8] sm:$0xff]
    %v46 = vld [vmem:[%s0 + $0x10] sm:$0xff]
    %v47 = vld [vmem:[%s0 + $0x18] sm:$0xff]
    %s48 = scalar_lea.vmem %s1, 384
    %v49 = vld [vmem:[%s48 + $0x40] sm:$0xf]
    %v50 = vld [vmem:[%s48 + $0x44] sm:$0xf]
    %v51 = vld [vmem:[%s48 + $0x48] sm:$0xf]
    %v52 = vld [vmem:[%s48 + $0x4c] sm:$0xf]
    %v53 = vld [vmem:[%s48 + $0x50] sm:$0xf]
    %v54 = vld [vmem:[%s48 + $0x54] sm:$0xf]
    %v55 = vld [vmem:[%s48 + $0x58] sm:$0xf]
    %v56 = vld [vmem:[%s48 + $0x5c] sm:$0xf]
    %v57 = vld [vmem:[%s48 + $0x60] sm:$0xf]
    %v58 = vld [vmem:[%s48 + $0x64] sm:$0xf]
    %v59 = vld [vmem:[%s48 + $0x68] sm:$0xf]
    %v60 = vld [vmem:[%s48 + $0x6c] sm:$0xf]
    %v61 = vld [vmem:[%s48 + $0x70] sm:$0xf]
    %v62 = vld [vmem:[%s48 + $0x74] sm:$0xf]
    %v63 = vld [vmem:[%s48 + $0x78] sm:$0xf]
    %v64 = vld [vmem:[%s48 + $0x7c] sm:$0xf]
    %v65 = vpack.c.bf16 %v44, %v44
    %v66 = vpack.c.bf16 %v45, %v45
    %v67 = vpack.c.bf16 %v46, %v46
    %v68 = vpack.c.bf16 %v47, %v47
    %v73 = vunpack.c.l.b16 %v65
    %v74 = vunpack.c.l.b16 %v66
    %v75 = vunpack.c.l.b16 %v67
    %v76 = vunpack.c.l.b16 %v68
    %v77 = vpack.c.b16 %v74, %v73
    %v78 = vpack.c.b16 %v76, %v75
    %v97 = vunpack.c.l.b16 %v49
    %v98 = vunpack.c.l.b16 %v50
    %v99 = vunpack.c.l.b16 %v51
    %v100 = vunpack.c.l.b16 %v52
    %v101 = vunpack.c.l.b16 %v53
    %v102 = vunpack.c.l.b16 %v54
    %v103 = vunpack.c.l.b16 %v55
    %v104 = vunpack.c.l.b16 %v56
    %v105 = vunpack.c.l.b16 %v57
    %v106 = vunpack.c.l.b16 %v58
    %v107 = vunpack.c.l.b16 %v59
    %v108 = vunpack.c.l.b16 %v60
    %v109 = vunpack.c.l.b16 %v61
    %v110 = vunpack.c.l.b16 %v62
    %v111 = vunpack.c.l.b16 %v63
    %v112 = vunpack.c.l.b16 %v64
    %v113 = vpack.c.b16 %v98, %v97
    %v114 = vpack.c.b16 %v100, %v99
    %v115 = vpack.c.b16 %v102, %v101
    %v116 = vpack.c.b16 %v104, %v103
    %v117 = vpack.c.b16 %v106, %v105
    %v118 = vpack.c.b16 %v108, %v107
    %v119 = vpack.c.b16 %v110, %v109
    %v120 = vpack.c.b16 %v112, %v111
    %129 = vmatpush.bf16.msra.mxu0 %v120
    %130 = vmatpush.bf16.msra.mxu0 %v119
    %131 = vmatpush.bf16.msra.mxu0 %v118
    %132 = vmatpush.bf16.msra.mxu0 %v117
    %133 = vmatpush.bf16.msra.mxu0 %v116
    %134 = vmatpush.bf16.msra.mxu0 %v115
    %135 = vmatpush.bf16.msra.mxu0 %v114
    %136 = vmatpush.bf16.msra.mxu0 %v113
    %137 = vmatmul.bf16.gmra.mxu0 %v77
    %v138 = vpop.f32.mrf.mxu0
    %v139 = vadd.f32 0.0, %v138
    %v140 = vpop.f32.mrf.mxu0
    %v141 = vadd.f32 0.0, %v140
    %142 = vmatmul.bf16.gmra.mxu0 %v78
    %v143 = vpop.f32.mrf.mxu0
    %v144 = vadd.f32 0.0, %v143
    %v145 = vpop.f32.mrf.mxu0
    %v146 = vadd.f32 0.0, %v145
    %147 = vdwg.mxu0
    %v148 = vld [vmem:[%s2 + $0x4] sm:$0x1]
    %v149 = vperm.slane %v148, 0
    %v150 = vmul.f32 %v139, %v149
    %v151 = vmul.f32 %v141, %v149
    %v152 = vmul.f32 %v144, %v149
    %v153 = vmul.f32 %v146, %v149
    %v154 = vld [vmem:[%s2 + $0x5] sm:$0x1]
    %v155 = vperm.slane %v154, 0
    %v156 = vadd.f32 %v150, %v155
    %v157 = vadd.f32 %v151, %v155
    %v158 = vadd.f32 %v152, %v155
    %v159 = vadd.f32 %v153, %v155
    %v160 = vrot.slane %v44, 7
    %v161 = vrot.slane %v45, 7
    %v162 = vrot.slane %v46, 7
    %v163 = vrot.slane %v47, 7
    %vm164 = vcmp.lt.s32.totalorder %v22, 1
    %v165 = vsel %vm164, %v162, %v163
    %v166 = vsel %vm164, %v161, %v162
    %v167 = vsel %vm164, %v160, %v161
    %v168 = vsel %vm164, %v163, %v160
    %v169 = vsel %vm30, 1, 0
    %v170 = vsel %vm31, 1, 0
    %v171 = vsel %vm32, 1, 0
    %v172 = vsel %vm33, 1, 0
    %vm173 = vcmp.eq.s32.totalorder %v169, 1
    %vm174 = vcmp.eq.s32.totalorder %v170, 1
    %vm175 = vcmp.eq.s32.totalorder %v171, 1
    %vm176 = vcmp.eq.s32.totalorder %v172, 1
    %v177 = vsel %vm173, %v168, 0.0
    %v178 = vsel %vm174, %v167, 0.0
    %v179 = vsel %vm175, %v166, 0.0
    %v180 = vsel %vm176, %v165, 0.0
    %v181 = vrot.slane %v44, 1
    %v182 = vrot.slane %v45, 1
    %v183 = vrot.slane %v46, 1
    %v184 = vrot.slane %v47, 1
    %vm185 = vcmp.lt.s32.totalorder %v22, 7
    %v186 = vsel %vm185, %v183, %v184
    %v187 = vsel %vm185, %v182, %v183
    %v188 = vsel %vm185, %v181, %v182
    %v189 = vsel %vm185, %v184, %v181
    %v190 = vsel %vm34, 1, 0
    %v191 = vsel %vm35, 1, 0
    %v192 = vsel %vm36, 1, 0
    %v193 = vsel %vm37, 1, 0
    %vm194 = vcmp.eq.s32.totalorder %v190, 1
    %vm195 = vcmp.eq.s32.totalorder %v191, 1
    %vm196 = vcmp.eq.s32.totalorder %v192, 1
    %vm197 = vcmp.eq.s32.totalorder %v193, 1
    %v198 = vsel %vm194, %v188, 0.0
    %v199 = vsel %vm195, %v187, 0.0
    %v200 = vsel %vm196, %v186, 0.0
    %v201 = vsel %vm197, %v189, 0.0
    %v202 = vpack.c.bf16 %v177, %v177
    %v203 = vpack.c.bf16 %v178, %v178
    %v204 = vpack.c.bf16 %v179, %v179
    %v205 = vpack.c.bf16 %v180, %v180
    %v206 = vpack.c.bf16 %v198, %v198
    %v207 = vpack.c.bf16 %v199, %v199
    %v208 = vpack.c.bf16 %v200, %v200
    %v209 = vpack.c.bf16 %v201, %v201
    %v214 = vunpack.c.l.b16 %v202
    %v215 = vunpack.c.l.b16 %v203
    %v216 = vunpack.c.l.b16 %v204
    %v217 = vunpack.c.l.b16 %v205
    %v218 = vpack.c.b16 %v215, %v214
    %v219 = vpack.c.b16 %v217, %v216
    %v226 = vunpack.c.l.b16 %v206
    %v227 = vunpack.c.l.b16 %v207
    %v228 = vunpack.c.l.b16 %v208
    %v229 = vunpack.c.l.b16 %v209
    %v230 = vpack.c.b16 %v227, %v226
    %v231 = vpack.c.b16 %v229, %v228
    %v234 = vld [vmem:[%s1] sm:$0xf]
    %v235 = vld [vmem:[%s1 + $0x4] sm:$0xf]
    %v236 = vld [vmem:[%s1 + $0x8] sm:$0xf]
    %v237 = vld [vmem:[%s1 + $0xc] sm:$0xf]
    %v238 = vld [vmem:[%s1 + $0x10] sm:$0xf]
    %v239 = vld [vmem:[%s1 + $0x14] sm:$0xf]
    %v240 = vld [vmem:[%s1 + $0x18] sm:$0xf]
    %v241 = vld [vmem:[%s1 + $0x1c] sm:$0xf]
    %v242 = vld [vmem:[%s1 + $0x20] sm:$0xf]
    %v243 = vld [vmem:[%s1 + $0x24] sm:$0xf]
    %v244 = vld [vmem:[%s1 + $0x28] sm:$0xf]
    %v245 = vld [vmem:[%s1 + $0x2c] sm:$0xf]
    %v246 = vld [vmem:[%s1 + $0x30] sm:$0xf]
    %v247 = vld [vmem:[%s1 + $0x34] sm:$0xf]
    %v248 = vld [vmem:[%s1 + $0x38] sm:$0xf]
    %v249 = vld [vmem:[%s1 + $0x3c] sm:$0xf]
    %v250 = vld [vmem:[%s1 + $0x40] sm:$0xf]
    %v251 = vld [vmem:[%s1 + $0x44] sm:$0xf]
    %v252 = vld [vmem:[%s1 + $0x48] sm:$0xf]
    %v253 = vld [vmem:[%s1 + $0x4c] sm:$0xf]
    %v254 = vld [vmem:[%s1 + $0x50] sm:$0xf]
    %v255 = vld [vmem:[%s1 + $0x54] sm:$0xf]
    %v256 = vld [vmem:[%s1 + $0x58] sm:$0xf]
    %v257 = vld [vmem:[%s1 + $0x5c] sm:$0xf]
    %v258 = vld [vmem:[%s1 + $0x60] sm:$0xf]
    %v259 = vld [vmem:[%s1 + $0x64] sm:$0xf]
    %v260 = vld [vmem:[%s1 + $0x68] sm:$0xf]
    %v261 = vld [vmem:[%s1 + $0x6c] sm:$0xf]
    %v262 = vld [vmem:[%s1 + $0x70] sm:$0xf]
    %v263 = vld [vmem:[%s1 + $0x74] sm:$0xf]
    %v264 = vld [vmem:[%s1 + $0x78] sm:$0xf]
    %v265 = vld [vmem:[%s1 + $0x7c] sm:$0xf]
    %v266 = vld [vmem:[%s1 + $0x80] sm:$0xf]
    %v267 = vld [vmem:[%s1 + $0x84] sm:$0xf]
    %v268 = vld [vmem:[%s1 + $0x88] sm:$0xf]
    %v269 = vld [vmem:[%s1 + $0x8c] sm:$0xf]
    %v270 = vld [vmem:[%s1 + $0x90] sm:$0xf]
    %v271 = vld [vmem:[%s1 + $0x94] sm:$0xf]
    %v272 = vld [vmem:[%s1 + $0x98] sm:$0xf]
    %v273 = vld [vmem:[%s1 + $0x9c] sm:$0xf]
    %v274 = vld [vmem:[%s1 + $0xa0] sm:$0xf]
    %v275 = vld [vmem:[%s1 + $0xa4] sm:$0xf]
    %v276 = vld [vmem:[%s1 + $0xa8] sm:$0xf]
    %v277 = vld [vmem:[%s1 + $0xac] sm:$0xf]
    %v278 = vld [vmem:[%s1 + $0xb0] sm:$0xf]
    %v279 = vld [vmem:[%s1 + $0xb4] sm:$0xf]
    %v280 = vld [vmem:[%s1 + $0xb8] sm:$0xf]
    %v281 = vld [vmem:[%s1 + $0xbc] sm:$0xf]
    %v330 = vunpack.c.l.b16 %v234
    %v331 = vunpack.c.l.b16 %v235
    %v332 = vunpack.c.l.b16 %v236
    %v333 = vunpack.c.l.b16 %v237
    %v334 = vunpack.c.l.b16 %v238
    %v335 = vunpack.c.l.b16 %v239
    %v336 = vunpack.c.l.b16 %v240
    %v337 = vunpack.c.l.b16 %v241
    %v338 = vunpack.c.l.b16 %v242
    %v339 = vunpack.c.l.b16 %v243
    %v340 = vunpack.c.l.b16 %v244
    %v341 = vunpack.c.l.b16 %v245
    %v342 = vunpack.c.l.b16 %v246
    %v343 = vunpack.c.l.b16 %v247
    %v344 = vunpack.c.l.b16 %v248
    %v345 = vunpack.c.l.b16 %v249
    %v346 = vunpack.c.l.b16 %v250
    %v347 = vunpack.c.l.b16 %v251
    %v348 = vunpack.c.l.b16 %v252
    %v349 = vunpack.c.l.b16 %v253
    %v350 = vunpack.c.l.b16 %v254
    %v351 = vunpack.c.l.b16 %v255
    %v352 = vunpack.c.l.b16 %v256
    %v353 = vunpack.c.l.b16 %v257
    %v354 = vunpack.c.l.b16 %v258
    %v355 = vunpack.c.l.b16 %v259
    %v356 = vunpack.c.l.b16 %v260
    %v357 = vunpack.c.l.b16 %v261
    %v358 = vunpack.c.l.b16 %v262
    %v359 = vunpack.c.l.b16 %v263
    %v360 = vunpack.c.l.b16 %v264
    %v361 = vunpack.c.l.b16 %v265
    %v362 = vunpack.c.l.b16 %v266
    %v363 = vunpack.c.l.b16 %v267
    %v364 = vunpack.c.l.b16 %v268
    %v365 = vunpack.c.l.b16 %v269
    %v366 = vunpack.c.l.b16 %v270
    %v367 = vunpack.c.l.b16 %v271
    %v368 = vunpack.c.l.b16 %v272
    %v369 = vunpack.c.l.b16 %v273
    %v370 = vunpack.c.l.b16 %v274
    %v371 = vunpack.c.l.b16 %v275
    %v372 = vunpack.c.l.b16 %v276
    %v373 = vunpack.c.l.b16 %v277
    %v374 = vunpack.c.l.b16 %v278
    %v375 = vunpack.c.l.b16 %v279
    %v376 = vunpack.c.l.b16 %v280
    %v377 = vunpack.c.l.b16 %v281
    %v378 = vpack.c.b16 %v331, %v330
    %v379 = vpack.c.b16 %v333, %v332
    %v380 = vpack.c.b16 %v335, %v334
    %v381 = vpack.c.b16 %v337, %v336
    %v382 = vpack.c.b16 %v339, %v338
    %v383 = vpack.c.b16 %v341, %v340
    %v384 = vpack.c.b16 %v343, %v342
    %v385 = vpack.c.b16 %v345, %v344
    %v386 = vpack.c.b16 %v347, %v346
    %v387 = vpack.c.b16 %v349, %v348
    %v388 = vpack.c.b16 %v351, %v350
    %v389 = vpack.c.b16 %v353, %v352
    %v390 = vpack.c.b16 %v355, %v354
    %v391 = vpack.c.b16 %v357, %v356
    %v392 = vpack.c.b16 %v359, %v358
    %v393 = vpack.c.b16 %v361, %v360
    %v394 = vpack.c.b16 %v363, %v362
    %v395 = vpack.c.b16 %v365, %v364
    %v396 = vpack.c.b16 %v367, %v366
    %v397 = vpack.c.b16 %v369, %v368
    %v398 = vpack.c.b16 %v371, %v370
    %v399 = vpack.c.b16 %v373, %v372
    %v400 = vpack.c.b16 %v375, %v374
    %v401 = vpack.c.b16 %v377, %v376
    %426 = vmatpush.bf16.msra.mxu0 %v385
    %427 = vmatpush.bf16.msra.mxu0 %v384
    %428 = vmatpush.bf16.msra.mxu0 %v383
    %429 = vmatpush.bf16.msra.mxu0 %v382
    %430 = vmatpush.bf16.msra.mxu0 %v381
    %431 = vmatpush.bf16.msra.mxu0 %v380
    %432 = vmatpush.bf16.msra.mxu0 %v379
    %433 = vmatpush.bf16.msra.mxu0 %v378
    %434 = vmatmul.bf16.gmra.mxu0 %v218
    %v435 = vpop.f32.mrf.mxu0
    %v436 = vadd.f32 0.0, %v435
    %v437 = vpop.f32.mrf.mxu0
    %v438 = vadd.f32 0.0, %v437
    %439 = vmatmul.bf16.gmra.mxu0 %v219
    %v440 = vpop.f32.mrf.mxu0
    %v441 = vadd.f32 0.0, %v440
    %v442 = vpop.f32.mrf.mxu0
    %v443 = vadd.f32 0.0, %v442
    %444 = vdwg.mxu0
    %445 = vmatpush.bf16.msra.mxu0 %v393
    %446 = vmatpush.bf16.msra.mxu0 %v392
    %447 = vmatpush.bf16.msra.mxu0 %v391
    %448 = vmatpush.bf16.msra.mxu0 %v390
    %449 = vmatpush.bf16.msra.mxu0 %v389
    %450 = vmatpush.bf16.msra.mxu0 %v388
    %451 = vmatpush.bf16.msra.mxu0 %v387
    %452 = vmatpush.bf16.msra.mxu0 %v386
    %453 = vmatmul.bf16.gmra.mxu0 %v77
    %v454 = vpop.f32.mrf.mxu0
    %v455 = vadd.f32 %v436, %v454
    %v456 = vpop.f32.mrf.mxu0
    %v457 = vadd.f32 %v438, %v456
    %458 = vmatmul.bf16.gmra.mxu0 %v78
    %v459 = vpop.f32.mrf.mxu0
    %v460 = vadd.f32 %v441, %v459
    %v461 = vpop.f32.mrf.mxu0
    %v462 = vadd.f32 %v443, %v461
    %463 = vdwg.mxu0
    %464 = vmatpush.bf16.msra.mxu0 %v401
    %465 = vmatpush.bf16.msra.mxu0 %v400
    %466 = vmatpush.bf16.msra.mxu0 %v399
    %467 = vmatpush.bf16.msra.mxu0 %v398
    %468 = vmatpush.bf16.msra.mxu0 %v397
    %469 = vmatpush.bf16.msra.mxu0 %v396
    %470 = vmatpush.bf16.msra.mxu0 %v395
    %471 = vmatpush.bf16.msra.mxu0 %v394
    %472 = vmatmul.bf16.gmra.mxu0 %v230
    %v473 = vpop.f32.mrf.mxu0
    %v474 = vadd.f32 %v455, %v473
    %v475 = vpop.f32.mrf.mxu0
    %v476 = vadd.f32 %v457, %v475
    %477 = vmatmul.bf16.gmra.mxu0 %v231
    %v478 = vpop.f32.mrf.mxu0
    %v479 = vadd.f32 %v460, %v478
    %v480 = vpop.f32.mrf.mxu0
    %v481 = vadd.f32 %v462, %v480
    %482 = vdwg.mxu0
    %v483 = vld [vmem:[%s2] sm:$0x1]
    %v484 = vperm.slane %v483, 0
    %v485 = vmul.f32 %v474, %v484
    %v486 = vmul.f32 %v476, %v484
    %v487 = vmul.f32 %v479, %v484
    %v488 = vmul.f32 %v481, %v484
    %v489 = vld [vmem:[%s2 + $0x1] sm:$0x1]
    %v490 = vperm.slane %v489, 0
    %v491 = vadd.f32 %v485, %v490
    %v492 = vadd.f32 %v486, %v490
    %v493 = vadd.f32 %v487, %v490
    %v494 = vadd.f32 %v488, %v490
    %v495 = vmax.f32 %v491, 0.0
    %v496 = vmax.f32 %v492, 0.0
    %v497 = vmax.f32 %v493, 0.0
    %v498 = vmax.f32 %v494, 0.0
    %v499 = vrot.slane %v495, 7
    %v500 = vrot.slane %v496, 7
    %v501 = vrot.slane %v497, 7
    %v502 = vrot.slane %v498, 7
    %v503 = vsel %vm164, %v501, %v502
    %v504 = vsel %vm164, %v500, %v501
    %v505 = vsel %vm164, %v499, %v500
    %v506 = vsel %vm164, %v502, %v499
    %v507 = vsel %vm173, %v506, 0.0
    %v508 = vsel %vm174, %v505, 0.0
    %v509 = vsel %vm175, %v504, 0.0
    %v510 = vsel %vm176, %v503, 0.0
    %v511 = vrot.slane %v495, 1
    %v512 = vrot.slane %v496, 1
    %v513 = vrot.slane %v497, 1
    %v514 = vrot.slane %v498, 1
    %v515 = vsel %vm185, %v513, %v514
    %v516 = vsel %vm185, %v512, %v513
    %v517 = vsel %vm185, %v511, %v512
    %v518 = vsel %vm185, %v514, %v511
    %v519 = vsel %vm194, %v517, 0.0
    %v520 = vsel %vm195, %v516, 0.0
    %v521 = vsel %vm196, %v515, 0.0
    %v522 = vsel %vm197, %v518, 0.0
    %v523 = vpack.c.bf16 %v507, %v507
    %v524 = vpack.c.bf16 %v508, %v508
    %v525 = vpack.c.bf16 %v509, %v509
    %v526 = vpack.c.bf16 %v510, %v510
    %v527 = vpack.c.bf16 %v495, %v495
    %v528 = vpack.c.bf16 %v496, %v496
    %v529 = vpack.c.bf16 %v497, %v497
    %v530 = vpack.c.bf16 %v498, %v498
    %v531 = vpack.c.bf16 %v519, %v519
    %v532 = vpack.c.bf16 %v520, %v520
    %v533 = vpack.c.bf16 %v521, %v521
    %v534 = vpack.c.bf16 %v522, %v522
    %v539 = vunpack.c.l.b16 %v523
    %v540 = vunpack.c.l.b16 %v524
    %v541 = vunpack.c.l.b16 %v525
    %v542 = vunpack.c.l.b16 %v526
    %v543 = vpack.c.b16 %v540, %v539
    %v544 = vpack.c.b16 %v542, %v541
    %v551 = vunpack.c.l.b16 %v527
    %v552 = vunpack.c.l.b16 %v528
    %v553 = vunpack.c.l.b16 %v529
    %v554 = vunpack.c.l.b16 %v530
    %v555 = vpack.c.b16 %v552, %v551
    %v556 = vpack.c.b16 %v554, %v553
    %v563 = vunpack.c.l.b16 %v531
    %v564 = vunpack.c.l.b16 %v532
    %v565 = vunpack.c.l.b16 %v533
    %v566 = vunpack.c.l.b16 %v534
    %v567 = vpack.c.b16 %v564, %v563
    %v568 = vpack.c.b16 %v566, %v565
    %s571 = scalar_lea.vmem %s1, 192
    %v572 = vld [vmem:[%s571] sm:$0xf]
    %v573 = vld [vmem:[%s571 + $0x4] sm:$0xf]
    %v574 = vld [vmem:[%s571 + $0x8] sm:$0xf]
    %v575 = vld [vmem:[%s571 + $0xc] sm:$0xf]
    %v576 = vld [vmem:[%s571 + $0x10] sm:$0xf]
    %v577 = vld [vmem:[%s571 + $0x14] sm:$0xf]
    %v578 = vld [vmem:[%s571 + $0x18] sm:$0xf]
    %v579 = vld [vmem:[%s571 + $0x1c] sm:$0xf]
    %v580 = vld [vmem:[%s571 + $0x20] sm:$0xf]
    %v581 = vld [vmem:[%s571 + $0x24] sm:$0xf]
    %v582 = vld [vmem:[%s571 + $0x28] sm:$0xf]
    %v583 = vld [vmem:[%s571 + $0x2c] sm:$0xf]
    %v584 = vld [vmem:[%s571 + $0x30] sm:$0xf]
    %v585 = vld [vmem:[%s571 + $0x34] sm:$0xf]
    %v586 = vld [vmem:[%s571 + $0x38] sm:$0xf]
    %v587 = vld [vmem:[%s571 + $0x3c] sm:$0xf]
    %v588 = vld [vmem:[%s571 + $0x40] sm:$0xf]
    %v589 = vld [vmem:[%s571 + $0x44] sm:$0xf]
    %v590 = vld [vmem:[%s571 + $0x48] sm:$0xf]
    %v591 = vld [vmem:[%s571 + $0x4c] sm:$0xf]
    %v592 = vld [vmem:[%s571 + $0x50] sm:$0xf]
    %v593 = vld [vmem:[%s571 + $0x54] sm:$0xf]
    %v594 = vld [vmem:[%s571 + $0x58] sm:$0xf]
    %v595 = vld [vmem:[%s571 + $0x5c] sm:$0xf]
    %v596 = vld [vmem:[%s571 + $0x60] sm:$0xf]
    %v597 = vld [vmem:[%s571 + $0x64] sm:$0xf]
    %v598 = vld [vmem:[%s571 + $0x68] sm:$0xf]
    %v599 = vld [vmem:[%s571 + $0x6c] sm:$0xf]
    %v600 = vld [vmem:[%s571 + $0x70] sm:$0xf]
    %v601 = vld [vmem:[%s571 + $0x74] sm:$0xf]
    %v602 = vld [vmem:[%s571 + $0x78] sm:$0xf]
    %v603 = vld [vmem:[%s571 + $0x7c] sm:$0xf]
    %v604 = vld [vmem:[%s571 + $0x80] sm:$0xf]
    %v605 = vld [vmem:[%s571 + $0x84] sm:$0xf]
    %v606 = vld [vmem:[%s571 + $0x88] sm:$0xf]
    %v607 = vld [vmem:[%s571 + $0x8c] sm:$0xf]
    %v608 = vld [vmem:[%s571 + $0x90] sm:$0xf]
    %v609 = vld [vmem:[%s571 + $0x94] sm:$0xf]
    %v610 = vld [vmem:[%s571 + $0x98] sm:$0xf]
    %v611 = vld [vmem:[%s571 + $0x9c] sm:$0xf]
    %v612 = vld [vmem:[%s571 + $0xa0] sm:$0xf]
    %v613 = vld [vmem:[%s571 + $0xa4] sm:$0xf]
    %v614 = vld [vmem:[%s571 + $0xa8] sm:$0xf]
    %v615 = vld [vmem:[%s571 + $0xac] sm:$0xf]
    %v616 = vld [vmem:[%s571 + $0xb0] sm:$0xf]
    %v617 = vld [vmem:[%s571 + $0xb4] sm:$0xf]
    %v618 = vld [vmem:[%s571 + $0xb8] sm:$0xf]
    %v619 = vld [vmem:[%s571 + $0xbc] sm:$0xf]
    %v668 = vunpack.c.l.b16 %v572
    %v669 = vunpack.c.l.b16 %v573
    %v670 = vunpack.c.l.b16 %v574
    %v671 = vunpack.c.l.b16 %v575
    %v672 = vunpack.c.l.b16 %v576
    %v673 = vunpack.c.l.b16 %v577
    %v674 = vunpack.c.l.b16 %v578
    %v675 = vunpack.c.l.b16 %v579
    %v676 = vunpack.c.l.b16 %v580
    %v677 = vunpack.c.l.b16 %v581
    %v678 = vunpack.c.l.b16 %v582
    %v679 = vunpack.c.l.b16 %v583
    %v680 = vunpack.c.l.b16 %v584
    %v681 = vunpack.c.l.b16 %v585
    %v682 = vunpack.c.l.b16 %v586
    %v683 = vunpack.c.l.b16 %v587
    %v684 = vunpack.c.l.b16 %v588
    %v685 = vunpack.c.l.b16 %v589
    %v686 = vunpack.c.l.b16 %v590
    %v687 = vunpack.c.l.b16 %v591
    %v688 = vunpack.c.l.b16 %v592
    %v689 = vunpack.c.l.b16 %v593
    %v690 = vunpack.c.l.b16 %v594
    %v691 = vunpack.c.l.b16 %v595
    %v692 = vunpack.c.l.b16 %v596
    %v693 = vunpack.c.l.b16 %v597
    %v694 = vunpack.c.l.b16 %v598
    %v695 = vunpack.c.l.b16 %v599
    %v696 = vunpack.c.l.b16 %v600
    %v697 = vunpack.c.l.b16 %v601
    %v698 = vunpack.c.l.b16 %v602
    %v699 = vunpack.c.l.b16 %v603
    %v700 = vunpack.c.l.b16 %v604
    %v701 = vunpack.c.l.b16 %v605
    %v702 = vunpack.c.l.b16 %v606
    %v703 = vunpack.c.l.b16 %v607
    %v704 = vunpack.c.l.b16 %v608
    %v705 = vunpack.c.l.b16 %v609
    %v706 = vunpack.c.l.b16 %v610
    %v707 = vunpack.c.l.b16 %v611
    %v708 = vunpack.c.l.b16 %v612
    %v709 = vunpack.c.l.b16 %v613
    %v710 = vunpack.c.l.b16 %v614
    %v711 = vunpack.c.l.b16 %v615
    %v712 = vunpack.c.l.b16 %v616
    %v713 = vunpack.c.l.b16 %v617
    %v714 = vunpack.c.l.b16 %v618
    %v715 = vunpack.c.l.b16 %v619
    %v716 = vpack.c.b16 %v669, %v668
    %v717 = vpack.c.b16 %v671, %v670
    %v718 = vpack.c.b16 %v673, %v672
    %v719 = vpack.c.b16 %v675, %v674
    %v720 = vpack.c.b16 %v677, %v676
    %v721 = vpack.c.b16 %v679, %v678
    %v722 = vpack.c.b16 %v681, %v680
    %v723 = vpack.c.b16 %v683, %v682
    %v724 = vpack.c.b16 %v685, %v684
    %v725 = vpack.c.b16 %v687, %v686
    %v726 = vpack.c.b16 %v689, %v688
    %v727 = vpack.c.b16 %v691, %v690
    %v728 = vpack.c.b16 %v693, %v692
    %v729 = vpack.c.b16 %v695, %v694
    %v730 = vpack.c.b16 %v697, %v696
    %v731 = vpack.c.b16 %v699, %v698
    %v732 = vpack.c.b16 %v701, %v700
    %v733 = vpack.c.b16 %v703, %v702
    %v734 = vpack.c.b16 %v705, %v704
    %v735 = vpack.c.b16 %v707, %v706
    %v736 = vpack.c.b16 %v709, %v708
    %v737 = vpack.c.b16 %v711, %v710
    %v738 = vpack.c.b16 %v713, %v712
    %v739 = vpack.c.b16 %v715, %v714
    %764 = vmatpush.bf16.msra.mxu0 %v723
    %765 = vmatpush.bf16.msra.mxu0 %v722
    %766 = vmatpush.bf16.msra.mxu0 %v721
    %767 = vmatpush.bf16.msra.mxu0 %v720
    %768 = vmatpush.bf16.msra.mxu0 %v719
    %769 = vmatpush.bf16.msra.mxu0 %v718
    %770 = vmatpush.bf16.msra.mxu0 %v717
    %771 = vmatpush.bf16.msra.mxu0 %v716
    %772 = vmatmul.bf16.gmra.mxu0 %v543
    %v773 = vpop.f32.mrf.mxu0
    %v774 = vadd.f32 0.0, %v773
    %v775 = vpop.f32.mrf.mxu0
    %v776 = vadd.f32 0.0, %v775
    %777 = vmatmul.bf16.gmra.mxu0 %v544
    %v778 = vpop.f32.mrf.mxu0
    %v779 = vadd.f32 0.0, %v778
    %v780 = vpop.f32.mrf.mxu0
    %v781 = vadd.f32 0.0, %v780
    %782 = vdwg.mxu0
    %783 = vmatpush.bf16.msra.mxu0 %v731
    %784 = vmatpush.bf16.msra.mxu0 %v730
    %785 = vmatpush.bf16.msra.mxu0 %v729
    %786 = vmatpush.bf16.msra.mxu0 %v728
    %787 = vmatpush.bf16.msra.mxu0 %v727
    %788 = vmatpush.bf16.msra.mxu0 %v726
    %789 = vmatpush.bf16.msra.mxu0 %v725
    %790 = vmatpush.bf16.msra.mxu0 %v724
    %791 = vmatmul.bf16.gmra.mxu0 %v555
    %v792 = vpop.f32.mrf.mxu0
    %v793 = vadd.f32 %v774, %v792
    %v794 = vpop.f32.mrf.mxu0
    %v795 = vadd.f32 %v776, %v794
    %796 = vmatmul.bf16.gmra.mxu0 %v556
    %v797 = vpop.f32.mrf.mxu0
    %v798 = vadd.f32 %v779, %v797
    %v799 = vpop.f32.mrf.mxu0
    %v800 = vadd.f32 %v781, %v799
    %801 = vdwg.mxu0
    %802 = vmatpush.bf16.msra.mxu0 %v739
    %803 = vmatpush.bf16.msra.mxu0 %v738
    %804 = vmatpush.bf16.msra.mxu0 %v737
    %805 = vmatpush.bf16.msra.mxu0 %v736
    %806 = vmatpush.bf16.msra.mxu0 %v735
    %807 = vmatpush.bf16.msra.mxu0 %v734
    %808 = vmatpush.bf16.msra.mxu0 %v733
    %809 = vmatpush.bf16.msra.mxu0 %v732
    %810 = vmatmul.bf16.gmra.mxu0 %v567
    %v811 = vpop.f32.mrf.mxu0
    %v812 = vadd.f32 %v793, %v811
    %v813 = vpop.f32.mrf.mxu0
    %v814 = vadd.f32 %v795, %v813
    %815 = vmatmul.bf16.gmra.mxu0 %v568
    %v816 = vpop.f32.mrf.mxu0
    %v817 = vadd.f32 %v798, %v816
    %v818 = vpop.f32.mrf.mxu0
    %v819 = vadd.f32 %v800, %v818
    %820 = vdwg.mxu0
    %v821 = vld [vmem:[%s2 + $0x2] sm:$0x1]
    %v822 = vperm.slane %v821, 0
    %v823 = vmul.f32 %v812, %v822
    %v824 = vmul.f32 %v814, %v822
    %v825 = vmul.f32 %v817, %v822
    %v826 = vmul.f32 %v819, %v822
    %v827 = vld [vmem:[%s2 + $0x3] sm:$0x1]
    %v828 = vperm.slane %v827, 0
    %v829 = vadd.f32 %v823, %v828
    %v830 = vadd.f32 %v824, %v828
    %v831 = vadd.f32 %v825, %v828
    %v832 = vadd.f32 %v826, %v828
    %v833 = vadd.f32 %v829, %v156
    %v834 = vadd.f32 %v830, %v157
    %v835 = vadd.f32 %v831, %v158
    %v836 = vadd.f32 %v832, %v159
    %v837 = vmax.f32 %v833, 0.0
    %v838 = vmax.f32 %v834, 0.0
    %v839 = vmax.f32 %v835, 0.0
    %v840 = vmax.f32 %v836, 0.0
    %v841 = vrot.slane %v837, 7
    %v842 = vrot.slane %v838, 7
    %v843 = vrot.slane %v839, 7
    %v844 = vrot.slane %v840, 7
    %v845 = vsel %vm164, %v843, %v844
    %v846 = vsel %vm164, %v842, %v843
    %v847 = vsel %vm164, %v841, %v842
    %v848 = vsel %vm164, %v844, %v841
    %v849 = vsel %vm173, %v848, 0.0
    %v850 = vsel %vm174, %v847, 0.0
    %v851 = vsel %vm175, %v846, 0.0
    %v852 = vsel %vm176, %v845, 0.0
    %v853 = vrot.slane %v837, 1
    %v854 = vrot.slane %v838, 1
    %v855 = vrot.slane %v839, 1
    %v856 = vrot.slane %v840, 1
    %v857 = vsel %vm185, %v855, %v856
    %v858 = vsel %vm185, %v854, %v855
    %v859 = vsel %vm185, %v853, %v854
    %v860 = vsel %vm185, %v856, %v853
    %v861 = vsel %vm194, %v859, 0.0
    %v862 = vsel %vm195, %v858, 0.0
    %v863 = vsel %vm196, %v857, 0.0
    %v864 = vsel %vm197, %v860, 0.0
    %v865 = vpack.c.bf16 %v849, %v849
    %v866 = vpack.c.bf16 %v850, %v850
    %v867 = vpack.c.bf16 %v851, %v851
    %v868 = vpack.c.bf16 %v852, %v852
    %v869 = vpack.c.bf16 %v837, %v837
    %v870 = vpack.c.bf16 %v838, %v838
    %v871 = vpack.c.bf16 %v839, %v839
    %v872 = vpack.c.bf16 %v840, %v840
    %v873 = vpack.c.bf16 %v861, %v861
    %v874 = vpack.c.bf16 %v862, %v862
    %v875 = vpack.c.bf16 %v863, %v863
    %v876 = vpack.c.bf16 %v864, %v864
    %v881 = vunpack.c.l.b16 %v865
    %v882 = vunpack.c.l.b16 %v866
    %v883 = vunpack.c.l.b16 %v867
    %v884 = vunpack.c.l.b16 %v868
    %v885 = vpack.c.b16 %v882, %v881
    %v886 = vpack.c.b16 %v884, %v883
    %v893 = vunpack.c.l.b16 %v869
    %v894 = vunpack.c.l.b16 %v870
    %v895 = vunpack.c.l.b16 %v871
    %v896 = vunpack.c.l.b16 %v872
    %v897 = vpack.c.b16 %v894, %v893
    %v898 = vpack.c.b16 %v896, %v895
    %v905 = vunpack.c.l.b16 %v873
    %v906 = vunpack.c.l.b16 %v874
    %v907 = vunpack.c.l.b16 %v875
    %v908 = vunpack.c.l.b16 %v876
    %v909 = vpack.c.b16 %v906, %v905
    %v910 = vpack.c.b16 %v908, %v907
    %s913 = scalar_lea.vmem %s1, 576
    %v914 = vld [vmem:[%s913] sm:$0xf]
    %v915 = vld [vmem:[%s913 + $0x4] sm:$0xf]
    %v916 = vld [vmem:[%s913 + $0x8] sm:$0xf]
    %v917 = vld [vmem:[%s913 + $0xc] sm:$0xf]
    %v918 = vld [vmem:[%s913 + $0x10] sm:$0xf]
    %v919 = vld [vmem:[%s913 + $0x14] sm:$0xf]
    %v920 = vld [vmem:[%s913 + $0x18] sm:$0xf]
    %v921 = vld [vmem:[%s913 + $0x1c] sm:$0xf]
    %v922 = vld [vmem:[%s913 + $0x20] sm:$0xf]
    %v923 = vld [vmem:[%s913 + $0x24] sm:$0xf]
    %v924 = vld [vmem:[%s913 + $0x28] sm:$0xf]
    %v925 = vld [vmem:[%s913 + $0x2c] sm:$0xf]
    %v926 = vld [vmem:[%s913 + $0x30] sm:$0xf]
    %v927 = vld [vmem:[%s913 + $0x34] sm:$0xf]
    %v928 = vld [vmem:[%s913 + $0x38] sm:$0xf]
    %v929 = vld [vmem:[%s913 + $0x3c] sm:$0xf]
    %v930 = vld [vmem:[%s913 + $0x40] sm:$0xf]
    %v931 = vld [vmem:[%s913 + $0x44] sm:$0xf]
    %v932 = vld [vmem:[%s913 + $0x48] sm:$0xf]
    %v933 = vld [vmem:[%s913 + $0x4c] sm:$0xf]
    %v934 = vld [vmem:[%s913 + $0x50] sm:$0xf]
    %v935 = vld [vmem:[%s913 + $0x54] sm:$0xf]
    %v936 = vld [vmem:[%s913 + $0x58] sm:$0xf]
    %v937 = vld [vmem:[%s913 + $0x5c] sm:$0xf]
    %v938 = vld [vmem:[%s913 + $0x60] sm:$0xf]
    %v939 = vld [vmem:[%s913 + $0x64] sm:$0xf]
    %v940 = vld [vmem:[%s913 + $0x68] sm:$0xf]
    %v941 = vld [vmem:[%s913 + $0x6c] sm:$0xf]
    %v942 = vld [vmem:[%s913 + $0x70] sm:$0xf]
    %v943 = vld [vmem:[%s913 + $0x74] sm:$0xf]
    %v944 = vld [vmem:[%s913 + $0x78] sm:$0xf]
    %v945 = vld [vmem:[%s913 + $0x7c] sm:$0xf]
    %v946 = vld [vmem:[%s913 + $0x80] sm:$0xf]
    %v947 = vld [vmem:[%s913 + $0x84] sm:$0xf]
    %v948 = vld [vmem:[%s913 + $0x88] sm:$0xf]
    %v949 = vld [vmem:[%s913 + $0x8c] sm:$0xf]
    %v950 = vld [vmem:[%s913 + $0x90] sm:$0xf]
    %v951 = vld [vmem:[%s913 + $0x94] sm:$0xf]
    %v952 = vld [vmem:[%s913 + $0x98] sm:$0xf]
    %v953 = vld [vmem:[%s913 + $0x9c] sm:$0xf]
    %v954 = vld [vmem:[%s913 + $0xa0] sm:$0xf]
    %v955 = vld [vmem:[%s913 + $0xa4] sm:$0xf]
    %v956 = vld [vmem:[%s913 + $0xa8] sm:$0xf]
    %v957 = vld [vmem:[%s913 + $0xac] sm:$0xf]
    %v958 = vld [vmem:[%s913 + $0xb0] sm:$0xf]
    %v959 = vld [vmem:[%s913 + $0xb4] sm:$0xf]
    %v960 = vld [vmem:[%s913 + $0xb8] sm:$0xf]
    %v961 = vld [vmem:[%s913 + $0xbc] sm:$0xf]
    %v1010 = vunpack.c.l.b16 %v914
    %v1011 = vunpack.c.l.b16 %v915
    %v1012 = vunpack.c.l.b16 %v916
    %v1013 = vunpack.c.l.b16 %v917
    %v1014 = vunpack.c.l.b16 %v918
    %v1015 = vunpack.c.l.b16 %v919
    %v1016 = vunpack.c.l.b16 %v920
    %v1017 = vunpack.c.l.b16 %v921
    %v1018 = vunpack.c.l.b16 %v922
    %v1019 = vunpack.c.l.b16 %v923
    %v1020 = vunpack.c.l.b16 %v924
    %v1021 = vunpack.c.l.b16 %v925
    %v1022 = vunpack.c.l.b16 %v926
    %v1023 = vunpack.c.l.b16 %v927
    %v1024 = vunpack.c.l.b16 %v928
    %v1025 = vunpack.c.l.b16 %v929
    %v1026 = vunpack.c.l.b16 %v930
    %v1027 = vunpack.c.l.b16 %v931
    %v1028 = vunpack.c.l.b16 %v932
    %v1029 = vunpack.c.l.b16 %v933
    %v1030 = vunpack.c.l.b16 %v934
    %v1031 = vunpack.c.l.b16 %v935
    %v1032 = vunpack.c.l.b16 %v936
    %v1033 = vunpack.c.l.b16 %v937
    %v1034 = vunpack.c.l.b16 %v938
    %v1035 = vunpack.c.l.b16 %v939
    %v1036 = vunpack.c.l.b16 %v940
    %v1037 = vunpack.c.l.b16 %v941
    %v1038 = vunpack.c.l.b16 %v942
    %v1039 = vunpack.c.l.b16 %v943
    %v1040 = vunpack.c.l.b16 %v944
    %v1041 = vunpack.c.l.b16 %v945
    %v1042 = vunpack.c.l.b16 %v946
    %v1043 = vunpack.c.l.b16 %v947
    %v1044 = vunpack.c.l.b16 %v948
    %v1045 = vunpack.c.l.b16 %v949
    %v1046 = vunpack.c.l.b16 %v950
    %v1047 = vunpack.c.l.b16 %v951
    %v1048 = vunpack.c.l.b16 %v952
    %v1049 = vunpack.c.l.b16 %v953
    %v1050 = vunpack.c.l.b16 %v954
    %v1051 = vunpack.c.l.b16 %v955
    %v1052 = vunpack.c.l.b16 %v956
    %v1053 = vunpack.c.l.b16 %v957
    %v1054 = vunpack.c.l.b16 %v958
    %v1055 = vunpack.c.l.b16 %v959
    %v1056 = vunpack.c.l.b16 %v960
    %v1057 = vunpack.c.l.b16 %v961
    %v1058 = vpack.c.b16 %v1011, %v1010
    %v1059 = vpack.c.b16 %v1013, %v1012
    %v1060 = vpack.c.b16 %v1015, %v1014
    %v1061 = vpack.c.b16 %v1017, %v1016
    %v1062 = vpack.c.b16 %v1019, %v1018
    %v1063 = vpack.c.b16 %v1021, %v1020
    %v1064 = vpack.c.b16 %v1023, %v1022
    %v1065 = vpack.c.b16 %v1025, %v1024
    %v1066 = vpack.c.b16 %v1027, %v1026
    %v1067 = vpack.c.b16 %v1029, %v1028
    %v1068 = vpack.c.b16 %v1031, %v1030
    %v1069 = vpack.c.b16 %v1033, %v1032
    %v1070 = vpack.c.b16 %v1035, %v1034
    %v1071 = vpack.c.b16 %v1037, %v1036
    %v1072 = vpack.c.b16 %v1039, %v1038
    %v1073 = vpack.c.b16 %v1041, %v1040
    %v1074 = vpack.c.b16 %v1043, %v1042
    %v1075 = vpack.c.b16 %v1045, %v1044
    %v1076 = vpack.c.b16 %v1047, %v1046
    %v1077 = vpack.c.b16 %v1049, %v1048
    %v1078 = vpack.c.b16 %v1051, %v1050
    %v1079 = vpack.c.b16 %v1053, %v1052
    %v1080 = vpack.c.b16 %v1055, %v1054
    %v1081 = vpack.c.b16 %v1057, %v1056
    %1106 = vmatpush.bf16.msra.mxu0 %v1065
    %1107 = vmatpush.bf16.msra.mxu0 %v1064
    %1108 = vmatpush.bf16.msra.mxu0 %v1063
    %1109 = vmatpush.bf16.msra.mxu0 %v1062
    %1110 = vmatpush.bf16.msra.mxu0 %v1061
    %1111 = vmatpush.bf16.msra.mxu0 %v1060
    %1112 = vmatpush.bf16.msra.mxu0 %v1059
    %1113 = vmatpush.bf16.msra.mxu0 %v1058
    %1114 = vmatmul.bf16.gmra.mxu0 %v885
    %v1115 = vpop.f32.mrf.mxu0
    %v1116 = vadd.f32 0.0, %v1115
    %v1117 = vpop.f32.mrf.mxu0
    %v1118 = vadd.f32 0.0, %v1117
    %1119 = vmatmul.bf16.gmra.mxu0 %v886
    %v1120 = vpop.f32.mrf.mxu0
    %v1121 = vadd.f32 0.0, %v1120
    %v1122 = vpop.f32.mrf.mxu0
    %v1123 = vadd.f32 0.0, %v1122
    %1124 = vdwg.mxu0
    %1125 = vmatpush.bf16.msra.mxu0 %v1073
    %1126 = vmatpush.bf16.msra.mxu0 %v1072
    %1127 = vmatpush.bf16.msra.mxu0 %v1071
    %1128 = vmatpush.bf16.msra.mxu0 %v1070
    %1129 = vmatpush.bf16.msra.mxu0 %v1069
    %1130 = vmatpush.bf16.msra.mxu0 %v1068
    %1131 = vmatpush.bf16.msra.mxu0 %v1067
    %1132 = vmatpush.bf16.msra.mxu0 %v1066
    %1133 = vmatmul.bf16.gmra.mxu0 %v897
    %v1134 = vpop.f32.mrf.mxu0
    %v1135 = vadd.f32 %v1116, %v1134
    %v1136 = vpop.f32.mrf.mxu0
    %v1137 = vadd.f32 %v1118, %v1136
    %1138 = vmatmul.bf16.gmra.mxu0 %v898
    %v1139 = vpop.f32.mrf.mxu0
    %v1140 = vadd.f32 %v1121, %v1139
    %v1141 = vpop.f32.mrf.mxu0
    %v1142 = vadd.f32 %v1123, %v1141
    %1143 = vdwg.mxu0
    %1144 = vmatpush.bf16.msra.mxu0 %v1081
    %1145 = vmatpush.bf16.msra.mxu0 %v1080
    %1146 = vmatpush.bf16.msra.mxu0 %v1079
    %1147 = vmatpush.bf16.msra.mxu0 %v1078
    %1148 = vmatpush.bf16.msra.mxu0 %v1077
    %1149 = vmatpush.bf16.msra.mxu0 %v1076
    %1150 = vmatpush.bf16.msra.mxu0 %v1075
    %1151 = vmatpush.bf16.msra.mxu0 %v1074
    %1152 = vmatmul.bf16.gmra.mxu0 %v909
    %v1153 = vpop.f32.mrf.mxu0
    %v1154 = vadd.f32 %v1135, %v1153
    %v1155 = vpop.f32.mrf.mxu0
    %v1156 = vadd.f32 %v1137, %v1155
    %1157 = vmatmul.bf16.gmra.mxu0 %v910
    %v1158 = vpop.f32.mrf.mxu0
    %v1159 = vadd.f32 %v1140, %v1158
    %v1160 = vpop.f32.mrf.mxu0
    %v1161 = vadd.f32 %v1142, %v1160
    %1162 = vdwg.mxu0
    %v1163 = vld [vmem:[%s2 + $0x6] sm:$0x1]
    %v1164 = vperm.slane %v1163, 0
    %v1165 = vmul.f32 %v1154, %v1164
    %v1166 = vmul.f32 %v1156, %v1164
    %v1167 = vmul.f32 %v1159, %v1164
    %v1168 = vmul.f32 %v1161, %v1164
    %v1169 = vld [vmem:[%s2 + $0x7] sm:$0x1]
    %v1170 = vperm.slane %v1169, 0
    %v1171 = vadd.f32 %v1165, %v1170
    %v1172 = vadd.f32 %v1166, %v1170
    %v1173 = vadd.f32 %v1167, %v1170
    %v1174 = vadd.f32 %v1168, %v1170
    %v1175 = vmax.f32 %v1171, 0.0
    %v1176 = vmax.f32 %v1172, 0.0
    %v1177 = vmax.f32 %v1173, 0.0
    %v1178 = vmax.f32 %v1174, 0.0
    %v1179 = vrot.slane %v1175, 7
    %v1180 = vrot.slane %v1176, 7
    %v1181 = vrot.slane %v1177, 7
    %v1182 = vrot.slane %v1178, 7
    %v1183 = vsel %vm164, %v1181, %v1182
    %v1184 = vsel %vm164, %v1180, %v1181
    %v1185 = vsel %vm164, %v1179, %v1180
    %v1186 = vsel %vm164, %v1182, %v1179
    %v1187 = vsel %vm173, %v1186, 0.0
    %v1188 = vsel %vm174, %v1185, 0.0
    %v1189 = vsel %vm175, %v1184, 0.0
    %v1190 = vsel %vm176, %v1183, 0.0
    %v1191 = vrot.slane %v1175, 1
    %v1192 = vrot.slane %v1176, 1
    %v1193 = vrot.slane %v1177, 1
    %v1194 = vrot.slane %v1178, 1
    %v1195 = vsel %vm185, %v1193, %v1194
    %v1196 = vsel %vm185, %v1192, %v1193
    %v1197 = vsel %vm185, %v1191, %v1192
    %v1198 = vsel %vm185, %v1194, %v1191
    %v1199 = vsel %vm194, %v1197, 0.0
    %v1200 = vsel %vm195, %v1196, 0.0
    %v1201 = vsel %vm196, %v1195, 0.0
    %v1202 = vsel %vm197, %v1198, 0.0
    %v1203 = vpack.c.bf16 %v1187, %v1187
    %v1204 = vpack.c.bf16 %v1188, %v1188
    %v1205 = vpack.c.bf16 %v1189, %v1189
    %v1206 = vpack.c.bf16 %v1190, %v1190
    %v1207 = vpack.c.bf16 %v1175, %v1175
    %v1208 = vpack.c.bf16 %v1176, %v1176
    %v1209 = vpack.c.bf16 %v1177, %v1177
    %v1210 = vpack.c.bf16 %v1178, %v1178
    %v1211 = vpack.c.bf16 %v1199, %v1199
    %v1212 = vpack.c.bf16 %v1200, %v1200
    %v1213 = vpack.c.bf16 %v1201, %v1201
    %v1214 = vpack.c.bf16 %v1202, %v1202
    %v1219 = vunpack.c.l.b16 %v1203
    %v1220 = vunpack.c.l.b16 %v1204
    %v1221 = vunpack.c.l.b16 %v1205
    %v1222 = vunpack.c.l.b16 %v1206
    %v1223 = vpack.c.b16 %v1220, %v1219
    %v1224 = vpack.c.b16 %v1222, %v1221
    %v1231 = vunpack.c.l.b16 %v1207
    %v1232 = vunpack.c.l.b16 %v1208
    %v1233 = vunpack.c.l.b16 %v1209
    %v1234 = vunpack.c.l.b16 %v1210
    %v1235 = vpack.c.b16 %v1232, %v1231
    %v1236 = vpack.c.b16 %v1234, %v1233
    %v1243 = vunpack.c.l.b16 %v1211
    %v1244 = vunpack.c.l.b16 %v1212
    %v1245 = vunpack.c.l.b16 %v1213
    %v1246 = vunpack.c.l.b16 %v1214
    %v1247 = vpack.c.b16 %v1244, %v1243
    %v1248 = vpack.c.b16 %v1246, %v1245
    %s1251 = scalar_lea.vmem %s1, 768
    %v1252 = vld [vmem:[%s1251] sm:$0xf]
    %v1253 = vld [vmem:[%s1251 + $0x4] sm:$0xf]
    %v1254 = vld [vmem:[%s1251 + $0x8] sm:$0xf]
    %v1255 = vld [vmem:[%s1251 + $0xc] sm:$0xf]
    %v1256 = vld [vmem:[%s1251 + $0x10] sm:$0xf]
    %v1257 = vld [vmem:[%s1251 + $0x14] sm:$0xf]
    %v1258 = vld [vmem:[%s1251 + $0x18] sm:$0xf]
    %v1259 = vld [vmem:[%s1251 + $0x1c] sm:$0xf]
    %v1260 = vld [vmem:[%s1251 + $0x20] sm:$0xf]
    %v1261 = vld [vmem:[%s1251 + $0x24] sm:$0xf]
    %v1262 = vld [vmem:[%s1251 + $0x28] sm:$0xf]
    %v1263 = vld [vmem:[%s1251 + $0x2c] sm:$0xf]
    %v1264 = vld [vmem:[%s1251 + $0x30] sm:$0xf]
    %v1265 = vld [vmem:[%s1251 + $0x34] sm:$0xf]
    %v1266 = vld [vmem:[%s1251 + $0x38] sm:$0xf]
    %v1267 = vld [vmem:[%s1251 + $0x3c] sm:$0xf]
    %v1268 = vld [vmem:[%s1251 + $0x40] sm:$0xf]
    %v1269 = vld [vmem:[%s1251 + $0x44] sm:$0xf]
    %v1270 = vld [vmem:[%s1251 + $0x48] sm:$0xf]
    %v1271 = vld [vmem:[%s1251 + $0x4c] sm:$0xf]
    %v1272 = vld [vmem:[%s1251 + $0x50] sm:$0xf]
    %v1273 = vld [vmem:[%s1251 + $0x54] sm:$0xf]
    %v1274 = vld [vmem:[%s1251 + $0x58] sm:$0xf]
    %v1275 = vld [vmem:[%s1251 + $0x5c] sm:$0xf]
    %v1276 = vld [vmem:[%s1251 + $0x60] sm:$0xf]
    %v1277 = vld [vmem:[%s1251 + $0x64] sm:$0xf]
    %v1278 = vld [vmem:[%s1251 + $0x68] sm:$0xf]
    %v1279 = vld [vmem:[%s1251 + $0x6c] sm:$0xf]
    %v1280 = vld [vmem:[%s1251 + $0x70] sm:$0xf]
    %v1281 = vld [vmem:[%s1251 + $0x74] sm:$0xf]
    %v1282 = vld [vmem:[%s1251 + $0x78] sm:$0xf]
    %v1283 = vld [vmem:[%s1251 + $0x7c] sm:$0xf]
    %v1284 = vld [vmem:[%s1251 + $0x80] sm:$0xf]
    %v1285 = vld [vmem:[%s1251 + $0x84] sm:$0xf]
    %v1286 = vld [vmem:[%s1251 + $0x88] sm:$0xf]
    %v1287 = vld [vmem:[%s1251 + $0x8c] sm:$0xf]
    %v1288 = vld [vmem:[%s1251 + $0x90] sm:$0xf]
    %v1289 = vld [vmem:[%s1251 + $0x94] sm:$0xf]
    %v1290 = vld [vmem:[%s1251 + $0x98] sm:$0xf]
    %v1291 = vld [vmem:[%s1251 + $0x9c] sm:$0xf]
    %v1292 = vld [vmem:[%s1251 + $0xa0] sm:$0xf]
    %v1293 = vld [vmem:[%s1251 + $0xa4] sm:$0xf]
    %v1294 = vld [vmem:[%s1251 + $0xa8] sm:$0xf]
    %v1295 = vld [vmem:[%s1251 + $0xac] sm:$0xf]
    %v1296 = vld [vmem:[%s1251 + $0xb0] sm:$0xf]
    %v1297 = vld [vmem:[%s1251 + $0xb4] sm:$0xf]
    %v1298 = vld [vmem:[%s1251 + $0xb8] sm:$0xf]
    %v1299 = vld [vmem:[%s1251 + $0xbc] sm:$0xf]
    %v1348 = vunpack.c.l.b16 %v1252
    %v1349 = vunpack.c.l.b16 %v1253
    %v1350 = vunpack.c.l.b16 %v1254
    %v1351 = vunpack.c.l.b16 %v1255
    %v1352 = vunpack.c.l.b16 %v1256
    %v1353 = vunpack.c.l.b16 %v1257
    %v1354 = vunpack.c.l.b16 %v1258
    %v1355 = vunpack.c.l.b16 %v1259
    %v1356 = vunpack.c.l.b16 %v1260
    %v1357 = vunpack.c.l.b16 %v1261
    %v1358 = vunpack.c.l.b16 %v1262
    %v1359 = vunpack.c.l.b16 %v1263
    %v1360 = vunpack.c.l.b16 %v1264
    %v1361 = vunpack.c.l.b16 %v1265
    %v1362 = vunpack.c.l.b16 %v1266
    %v1363 = vunpack.c.l.b16 %v1267
    %v1364 = vunpack.c.l.b16 %v1268
    %v1365 = vunpack.c.l.b16 %v1269
    %v1366 = vunpack.c.l.b16 %v1270
    %v1367 = vunpack.c.l.b16 %v1271
    %v1368 = vunpack.c.l.b16 %v1272
    %v1369 = vunpack.c.l.b16 %v1273
    %v1370 = vunpack.c.l.b16 %v1274
    %v1371 = vunpack.c.l.b16 %v1275
    %v1372 = vunpack.c.l.b16 %v1276
    %v1373 = vunpack.c.l.b16 %v1277
    %v1374 = vunpack.c.l.b16 %v1278
    %v1375 = vunpack.c.l.b16 %v1279
    %v1376 = vunpack.c.l.b16 %v1280
    %v1377 = vunpack.c.l.b16 %v1281
    %v1378 = vunpack.c.l.b16 %v1282
    %v1379 = vunpack.c.l.b16 %v1283
    %v1380 = vunpack.c.l.b16 %v1284
    %v1381 = vunpack.c.l.b16 %v1285
    %v1382 = vunpack.c.l.b16 %v1286
    %v1383 = vunpack.c.l.b16 %v1287
    %v1384 = vunpack.c.l.b16 %v1288
    %v1385 = vunpack.c.l.b16 %v1289
    %v1386 = vunpack.c.l.b16 %v1290
    %v1387 = vunpack.c.l.b16 %v1291
    %v1388 = vunpack.c.l.b16 %v1292
    %v1389 = vunpack.c.l.b16 %v1293
    %v1390 = vunpack.c.l.b16 %v1294
    %v1391 = vunpack.c.l.b16 %v1295
    %v1392 = vunpack.c.l.b16 %v1296
    %v1393 = vunpack.c.l.b16 %v1297
    %v1394 = vunpack.c.l.b16 %v1298
    %v1395 = vunpack.c.l.b16 %v1299
    %v1396 = vpack.c.b16 %v1349, %v1348
    %v1397 = vpack.c.b16 %v1351, %v1350
    %v1398 = vpack.c.b16 %v1353, %v1352
    %v1399 = vpack.c.b16 %v1355, %v1354
    %v1400 = vpack.c.b16 %v1357, %v1356
    %v1401 = vpack.c.b16 %v1359, %v1358
    %v1402 = vpack.c.b16 %v1361, %v1360
    %v1403 = vpack.c.b16 %v1363, %v1362
    %v1404 = vpack.c.b16 %v1365, %v1364
    %v1405 = vpack.c.b16 %v1367, %v1366
    %v1406 = vpack.c.b16 %v1369, %v1368
    %v1407 = vpack.c.b16 %v1371, %v1370
    %v1408 = vpack.c.b16 %v1373, %v1372
    %v1409 = vpack.c.b16 %v1375, %v1374
    %v1410 = vpack.c.b16 %v1377, %v1376
    %v1411 = vpack.c.b16 %v1379, %v1378
    %v1412 = vpack.c.b16 %v1381, %v1380
    %v1413 = vpack.c.b16 %v1383, %v1382
    %v1414 = vpack.c.b16 %v1385, %v1384
    %v1415 = vpack.c.b16 %v1387, %v1386
    %v1416 = vpack.c.b16 %v1389, %v1388
    %v1417 = vpack.c.b16 %v1391, %v1390
    %v1418 = vpack.c.b16 %v1393, %v1392
    %v1419 = vpack.c.b16 %v1395, %v1394
    %1444 = vmatpush.bf16.msra.mxu0 %v1403
    %1445 = vmatpush.bf16.msra.mxu0 %v1402
    %1446 = vmatpush.bf16.msra.mxu0 %v1401
    %1447 = vmatpush.bf16.msra.mxu0 %v1400
    %1448 = vmatpush.bf16.msra.mxu0 %v1399
    %1449 = vmatpush.bf16.msra.mxu0 %v1398
    %1450 = vmatpush.bf16.msra.mxu0 %v1397
    %1451 = vmatpush.bf16.msra.mxu0 %v1396
    %1452 = vmatmul.bf16.gmra.mxu0 %v1223
    %v1453 = vpop.f32.mrf.mxu0
    %v1454 = vadd.f32 0.0, %v1453
    %v1455 = vpop.f32.mrf.mxu0
    %v1456 = vadd.f32 0.0, %v1455
    %1457 = vmatmul.bf16.gmra.mxu0 %v1224
    %v1458 = vpop.f32.mrf.mxu0
    %v1459 = vadd.f32 0.0, %v1458
    %v1460 = vpop.f32.mrf.mxu0
    %v1461 = vadd.f32 0.0, %v1460
    %1462 = vdwg.mxu0
    %1463 = vmatpush.bf16.msra.mxu0 %v1411
    %1464 = vmatpush.bf16.msra.mxu0 %v1410
    %1465 = vmatpush.bf16.msra.mxu0 %v1409
    %1466 = vmatpush.bf16.msra.mxu0 %v1408
    %1467 = vmatpush.bf16.msra.mxu0 %v1407
    %1468 = vmatpush.bf16.msra.mxu0 %v1406
    %1469 = vmatpush.bf16.msra.mxu0 %v1405
    %1470 = vmatpush.bf16.msra.mxu0 %v1404
    %1471 = vmatmul.bf16.gmra.mxu0 %v1235
    %v1472 = vpop.f32.mrf.mxu0
    %v1473 = vadd.f32 %v1454, %v1472
    %v1474 = vpop.f32.mrf.mxu0
    %v1475 = vadd.f32 %v1456, %v1474
    %1476 = vmatmul.bf16.gmra.mxu0 %v1236
    %v1477 = vpop.f32.mrf.mxu0
    %v1478 = vadd.f32 %v1459, %v1477
    %v1479 = vpop.f32.mrf.mxu0
    %v1480 = vadd.f32 %v1461, %v1479
    %1481 = vdwg.mxu0
    %1482 = vmatpush.bf16.msra.mxu0 %v1419
    %1483 = vmatpush.bf16.msra.mxu0 %v1418
    %1484 = vmatpush.bf16.msra.mxu0 %v1417
    %1485 = vmatpush.bf16.msra.mxu0 %v1416
    %1486 = vmatpush.bf16.msra.mxu0 %v1415
    %1487 = vmatpush.bf16.msra.mxu0 %v1414
    %1488 = vmatpush.bf16.msra.mxu0 %v1413
    %1489 = vmatpush.bf16.msra.mxu0 %v1412
    %1490 = vmatmul.bf16.gmra.mxu0 %v1247
    %v1491 = vpop.f32.mrf.mxu0
    %v1492 = vadd.f32 %v1473, %v1491
    %v1493 = vpop.f32.mrf.mxu0
    %v1494 = vadd.f32 %v1475, %v1493
    %1495 = vmatmul.bf16.gmra.mxu0 %v1248
    %v1496 = vpop.f32.mrf.mxu0
    %v1497 = vadd.f32 %v1478, %v1496
    %v1498 = vpop.f32.mrf.mxu0
    %v1499 = vadd.f32 %v1480, %v1498
    %1500 = vdwg.mxu0
    %v1501 = vld [vmem:[%s2 + $0x8] sm:$0x1]
    %v1502 = vperm.slane %v1501, 0
    %v1503 = vmul.f32 %v1492, %v1502
    %v1504 = vmul.f32 %v1494, %v1502
    %v1505 = vmul.f32 %v1497, %v1502
    %v1506 = vmul.f32 %v1499, %v1502
    %v1507 = vld [vmem:[%s2 + $0x9] sm:$0x1]
    %v1508 = vperm.slane %v1507, 0
    %v1509 = vadd.f32 %v1503, %v1508
    %v1510 = vadd.f32 %v1504, %v1508
    %v1511 = vadd.f32 %v1505, %v1508
    %v1512 = vadd.f32 %v1506, %v1508
    %v1513 = vadd.f32 %v1509, %v837
    %v1514 = vadd.f32 %v1510, %v838
    %v1515 = vadd.f32 %v1511, %v839
    %v1516 = vadd.f32 %v1512, %v840
    %v1517 = vmax.f32 %v1513, 0.0
    %v1518 = vmax.f32 %v1514, 0.0
    %v1519 = vmax.f32 %v1515, 0.0
    %v1520 = vmax.f32 %v1516, 0.0
    %s1521 = scalar_lea.vmem %s1, 1344
    %v1522 = vld [vmem:[%s1521 + $0x40] sm:$0xf]
    %v1523 = vld [vmem:[%s1521 + $0x44] sm:$0xf]
    %v1524 = vld [vmem:[%s1521 + $0x48] sm:$0xf]
    %v1525 = vld [vmem:[%s1521 + $0x4c] sm:$0xf]
    %v1526 = vld [vmem:[%s1521 + $0x50] sm:$0xf]
    %v1527 = vld [vmem:[%s1521 + $0x54] sm:$0xf]
    %v1528 = vld [vmem:[%s1521 + $0x58] sm:$0xf]
    %v1529 = vld [vmem:[%s1521 + $0x5c] sm:$0xf]
    %v1530 = vld [vmem:[%s1521 + $0x60] sm:$0xf]
    %v1531 = vld [vmem:[%s1521 + $0x64] sm:$0xf]
    %v1532 = vld [vmem:[%s1521 + $0x68] sm:$0xf]
    %v1533 = vld [vmem:[%s1521 + $0x6c] sm:$0xf]
    %v1534 = vld [vmem:[%s1521 + $0x70] sm:$0xf]
    %v1535 = vld [vmem:[%s1521 + $0x74] sm:$0xf]
    %v1536 = vld [vmem:[%s1521 + $0x78] sm:$0xf]
    %v1537 = vld [vmem:[%s1521 + $0x7c] sm:$0xf]
    %v1538 = vpack.c.bf16 %v1517, %v1517
    %v1539 = vpack.c.bf16 %v1518, %v1518
    %v1540 = vpack.c.bf16 %v1519, %v1519
    %v1541 = vpack.c.bf16 %v1520, %v1520
    %v1546 = vunpack.c.l.b16 %v1538
    %v1547 = vunpack.c.l.b16 %v1539
    %v1548 = vunpack.c.l.b16 %v1540
    %v1549 = vunpack.c.l.b16 %v1541
    %v1550 = vpack.c.b16 %v1547, %v1546
    %v1551 = vpack.c.b16 %v1549, %v1548
    %v1570 = vunpack.c.l.b16 %v1522
    %v1571 = vunpack.c.l.b16 %v1523
    %v1572 = vunpack.c.l.b16 %v1524
    %v1573 = vunpack.c.l.b16 %v1525
    %v1574 = vunpack.c.l.b16 %v1526
    %v1575 = vunpack.c.l.b16 %v1527
    %v1576 = vunpack.c.l.b16 %v1528
    %v1577 = vunpack.c.l.b16 %v1529
    %v1578 = vunpack.c.l.b16 %v1530
    %v1579 = vunpack.c.l.b16 %v1531
    %v1580 = vunpack.c.l.b16 %v1532
    %v1581 = vunpack.c.l.b16 %v1533
    %v1582 = vunpack.c.l.b16 %v1534
    %v1583 = vunpack.c.l.b16 %v1535
    %v1584 = vunpack.c.l.b16 %v1536
    %v1585 = vunpack.c.l.b16 %v1537
    %v1586 = vpack.c.b16 %v1571, %v1570
    %v1587 = vpack.c.b16 %v1573, %v1572
    %v1588 = vpack.c.b16 %v1575, %v1574
    %v1589 = vpack.c.b16 %v1577, %v1576
    %v1590 = vpack.c.b16 %v1579, %v1578
    %v1591 = vpack.c.b16 %v1581, %v1580
    %v1592 = vpack.c.b16 %v1583, %v1582
    %v1593 = vpack.c.b16 %v1585, %v1584
    %1602 = vmatpush.bf16.msra.mxu0 %v1593
    %1603 = vmatpush.bf16.msra.mxu0 %v1592
    %1604 = vmatpush.bf16.msra.mxu0 %v1591
    %1605 = vmatpush.bf16.msra.mxu0 %v1590
    %1606 = vmatpush.bf16.msra.mxu0 %v1589
    %1607 = vmatpush.bf16.msra.mxu0 %v1588
    %1608 = vmatpush.bf16.msra.mxu0 %v1587
    %1609 = vmatpush.bf16.msra.mxu0 %v1586
    %1610 = vmatmul.bf16.gmra.mxu0 %v1550
    %v1611 = vpop.f32.mrf.mxu0
    %v1612 = vadd.f32 0.0, %v1611
    %v1613 = vpop.f32.mrf.mxu0
    %v1614 = vadd.f32 0.0, %v1613
    %1615 = vmatmul.bf16.gmra.mxu0 %v1551
    %v1616 = vpop.f32.mrf.mxu0
    %v1617 = vadd.f32 0.0, %v1616
    %v1618 = vpop.f32.mrf.mxu0
    %v1619 = vadd.f32 0.0, %v1618
    %1620 = vdwg.mxu0
    %v1621 = vld [vmem:[%s2 + $0xe] sm:$0x1]
    %v1622 = vperm.slane %v1621, 0
    %v1623 = vmul.f32 %v1612, %v1622
    %v1624 = vmul.f32 %v1614, %v1622
    %v1625 = vmul.f32 %v1617, %v1622
    %v1626 = vmul.f32 %v1619, %v1622
    %v1627 = vld [vmem:[%s2 + $0xf] sm:$0x1]
    %v1628 = vperm.slane %v1627, 0
    %v1629 = vadd.f32 %v1623, %v1628
    %v1630 = vadd.f32 %v1624, %v1628
    %v1631 = vadd.f32 %v1625, %v1628
    %v1632 = vadd.f32 %v1626, %v1628
    %v1633 = vrot.slane %v1517, 7
    %v1634 = vrot.slane %v1518, 7
    %v1635 = vrot.slane %v1519, 7
    %v1636 = vrot.slane %v1520, 7
    %v1637 = vsel %vm164, %v1635, %v1636
    %v1638 = vsel %vm164, %v1634, %v1635
    %v1639 = vsel %vm164, %v1633, %v1634
    %v1640 = vsel %vm164, %v1636, %v1633
    %v1641 = vsel %vm173, %v1640, 0.0
    %v1642 = vsel %vm174, %v1639, 0.0
    %v1643 = vsel %vm175, %v1638, 0.0
    %v1644 = vsel %vm176, %v1637, 0.0
    %v1645 = vrot.slane %v1517, 1
    %v1646 = vrot.slane %v1518, 1
    %v1647 = vrot.slane %v1519, 1
    %v1648 = vrot.slane %v1520, 1
    %v1649 = vsel %vm185, %v1647, %v1648
    %v1650 = vsel %vm185, %v1646, %v1647
    %v1651 = vsel %vm185, %v1645, %v1646
    %v1652 = vsel %vm185, %v1648, %v1645
    %v1653 = vsel %vm194, %v1651, 0.0
    %v1654 = vsel %vm195, %v1650, 0.0
    %v1655 = vsel %vm196, %v1649, 0.0
    %v1656 = vsel %vm197, %v1652, 0.0
    %v1657 = vpack.c.bf16 %v1641, %v1641
    %v1658 = vpack.c.bf16 %v1642, %v1642
    %v1659 = vpack.c.bf16 %v1643, %v1643
    %v1660 = vpack.c.bf16 %v1644, %v1644
    %v1661 = vpack.c.bf16 %v1653, %v1653
    %v1662 = vpack.c.bf16 %v1654, %v1654
    %v1663 = vpack.c.bf16 %v1655, %v1655
    %v1664 = vpack.c.bf16 %v1656, %v1656
    %v1669 = vunpack.c.l.b16 %v1657
    %v1670 = vunpack.c.l.b16 %v1658
    %v1671 = vunpack.c.l.b16 %v1659
    %v1672 = vunpack.c.l.b16 %v1660
    %v1673 = vpack.c.b16 %v1670, %v1669
    %v1674 = vpack.c.b16 %v1672, %v1671
    %v1681 = vunpack.c.l.b16 %v1661
    %v1682 = vunpack.c.l.b16 %v1662
    %v1683 = vunpack.c.l.b16 %v1663
    %v1684 = vunpack.c.l.b16 %v1664
    %v1685 = vpack.c.b16 %v1682, %v1681
    %v1686 = vpack.c.b16 %v1684, %v1683
    %s1689 = scalar_lea.vmem %s1, 960
    %v1690 = vld [vmem:[%s1689] sm:$0xf]
    %v1691 = vld [vmem:[%s1689 + $0x4] sm:$0xf]
    %v1692 = vld [vmem:[%s1689 + $0x8] sm:$0xf]
    %v1693 = vld [vmem:[%s1689 + $0xc] sm:$0xf]
    %v1694 = vld [vmem:[%s1689 + $0x10] sm:$0xf]
    %v1695 = vld [vmem:[%s1689 + $0x14] sm:$0xf]
    %v1696 = vld [vmem:[%s1689 + $0x18] sm:$0xf]
    %v1697 = vld [vmem:[%s1689 + $0x1c] sm:$0xf]
    %v1698 = vld [vmem:[%s1689 + $0x20] sm:$0xf]
    %v1699 = vld [vmem:[%s1689 + $0x24] sm:$0xf]
    %v1700 = vld [vmem:[%s1689 + $0x28] sm:$0xf]
    %v1701 = vld [vmem:[%s1689 + $0x2c] sm:$0xf]
    %v1702 = vld [vmem:[%s1689 + $0x30] sm:$0xf]
    %v1703 = vld [vmem:[%s1689 + $0x34] sm:$0xf]
    %v1704 = vld [vmem:[%s1689 + $0x38] sm:$0xf]
    %v1705 = vld [vmem:[%s1689 + $0x3c] sm:$0xf]
    %v1706 = vld [vmem:[%s1689 + $0x40] sm:$0xf]
    %v1707 = vld [vmem:[%s1689 + $0x44] sm:$0xf]
    %v1708 = vld [vmem:[%s1689 + $0x48] sm:$0xf]
    %v1709 = vld [vmem:[%s1689 + $0x4c] sm:$0xf]
    %v1710 = vld [vmem:[%s1689 + $0x50] sm:$0xf]
    %v1711 = vld [vmem:[%s1689 + $0x54] sm:$0xf]
    %v1712 = vld [vmem:[%s1689 + $0x58] sm:$0xf]
    %v1713 = vld [vmem:[%s1689 + $0x5c] sm:$0xf]
    %v1714 = vld [vmem:[%s1689 + $0x60] sm:$0xf]
    %v1715 = vld [vmem:[%s1689 + $0x64] sm:$0xf]
    %v1716 = vld [vmem:[%s1689 + $0x68] sm:$0xf]
    %v1717 = vld [vmem:[%s1689 + $0x6c] sm:$0xf]
    %v1718 = vld [vmem:[%s1689 + $0x70] sm:$0xf]
    %v1719 = vld [vmem:[%s1689 + $0x74] sm:$0xf]
    %v1720 = vld [vmem:[%s1689 + $0x78] sm:$0xf]
    %v1721 = vld [vmem:[%s1689 + $0x7c] sm:$0xf]
    %v1722 = vld [vmem:[%s1689 + $0x80] sm:$0xf]
    %v1723 = vld [vmem:[%s1689 + $0x84] sm:$0xf]
    %v1724 = vld [vmem:[%s1689 + $0x88] sm:$0xf]
    %v1725 = vld [vmem:[%s1689 + $0x8c] sm:$0xf]
    %v1726 = vld [vmem:[%s1689 + $0x90] sm:$0xf]
    %v1727 = vld [vmem:[%s1689 + $0x94] sm:$0xf]
    %v1728 = vld [vmem:[%s1689 + $0x98] sm:$0xf]
    %v1729 = vld [vmem:[%s1689 + $0x9c] sm:$0xf]
    %v1730 = vld [vmem:[%s1689 + $0xa0] sm:$0xf]
    %v1731 = vld [vmem:[%s1689 + $0xa4] sm:$0xf]
    %v1732 = vld [vmem:[%s1689 + $0xa8] sm:$0xf]
    %v1733 = vld [vmem:[%s1689 + $0xac] sm:$0xf]
    %v1734 = vld [vmem:[%s1689 + $0xb0] sm:$0xf]
    %v1735 = vld [vmem:[%s1689 + $0xb4] sm:$0xf]
    %v1736 = vld [vmem:[%s1689 + $0xb8] sm:$0xf]
    %v1737 = vld [vmem:[%s1689 + $0xbc] sm:$0xf]
    %v1786 = vunpack.c.l.b16 %v1690
    %v1787 = vunpack.c.l.b16 %v1691
    %v1788 = vunpack.c.l.b16 %v1692
    %v1789 = vunpack.c.l.b16 %v1693
    %v1790 = vunpack.c.l.b16 %v1694
    %v1791 = vunpack.c.l.b16 %v1695
    %v1792 = vunpack.c.l.b16 %v1696
    %v1793 = vunpack.c.l.b16 %v1697
    %v1794 = vunpack.c.l.b16 %v1698
    %v1795 = vunpack.c.l.b16 %v1699
    %v1796 = vunpack.c.l.b16 %v1700
    %v1797 = vunpack.c.l.b16 %v1701
    %v1798 = vunpack.c.l.b16 %v1702
    %v1799 = vunpack.c.l.b16 %v1703
    %v1800 = vunpack.c.l.b16 %v1704
    %v1801 = vunpack.c.l.b16 %v1705
    %v1802 = vunpack.c.l.b16 %v1706
    %v1803 = vunpack.c.l.b16 %v1707
    %v1804 = vunpack.c.l.b16 %v1708
    %v1805 = vunpack.c.l.b16 %v1709
    %v1806 = vunpack.c.l.b16 %v1710
    %v1807 = vunpack.c.l.b16 %v1711
    %v1808 = vunpack.c.l.b16 %v1712
    %v1809 = vunpack.c.l.b16 %v1713
    %v1810 = vunpack.c.l.b16 %v1714
    %v1811 = vunpack.c.l.b16 %v1715
    %v1812 = vunpack.c.l.b16 %v1716
    %v1813 = vunpack.c.l.b16 %v1717
    %v1814 = vunpack.c.l.b16 %v1718
    %v1815 = vunpack.c.l.b16 %v1719
    %v1816 = vunpack.c.l.b16 %v1720
    %v1817 = vunpack.c.l.b16 %v1721
    %v1818 = vunpack.c.l.b16 %v1722
    %v1819 = vunpack.c.l.b16 %v1723
    %v1820 = vunpack.c.l.b16 %v1724
    %v1821 = vunpack.c.l.b16 %v1725
    %v1822 = vunpack.c.l.b16 %v1726
    %v1823 = vunpack.c.l.b16 %v1727
    %v1824 = vunpack.c.l.b16 %v1728
    %v1825 = vunpack.c.l.b16 %v1729
    %v1826 = vunpack.c.l.b16 %v1730
    %v1827 = vunpack.c.l.b16 %v1731
    %v1828 = vunpack.c.l.b16 %v1732
    %v1829 = vunpack.c.l.b16 %v1733
    %v1830 = vunpack.c.l.b16 %v1734
    %v1831 = vunpack.c.l.b16 %v1735
    %v1832 = vunpack.c.l.b16 %v1736
    %v1833 = vunpack.c.l.b16 %v1737
    %v1834 = vpack.c.b16 %v1787, %v1786
    %v1835 = vpack.c.b16 %v1789, %v1788
    %v1836 = vpack.c.b16 %v1791, %v1790
    %v1837 = vpack.c.b16 %v1793, %v1792
    %v1838 = vpack.c.b16 %v1795, %v1794
    %v1839 = vpack.c.b16 %v1797, %v1796
    %v1840 = vpack.c.b16 %v1799, %v1798
    %v1841 = vpack.c.b16 %v1801, %v1800
    %v1842 = vpack.c.b16 %v1803, %v1802
    %v1843 = vpack.c.b16 %v1805, %v1804
    %v1844 = vpack.c.b16 %v1807, %v1806
    %v1845 = vpack.c.b16 %v1809, %v1808
    %v1846 = vpack.c.b16 %v1811, %v1810
    %v1847 = vpack.c.b16 %v1813, %v1812
    %v1848 = vpack.c.b16 %v1815, %v1814
    %v1849 = vpack.c.b16 %v1817, %v1816
    %v1850 = vpack.c.b16 %v1819, %v1818
    %v1851 = vpack.c.b16 %v1821, %v1820
    %v1852 = vpack.c.b16 %v1823, %v1822
    %v1853 = vpack.c.b16 %v1825, %v1824
    %v1854 = vpack.c.b16 %v1827, %v1826
    %v1855 = vpack.c.b16 %v1829, %v1828
    %v1856 = vpack.c.b16 %v1831, %v1830
    %v1857 = vpack.c.b16 %v1833, %v1832
    %1882 = vmatpush.bf16.msra.mxu0 %v1841
    %1883 = vmatpush.bf16.msra.mxu0 %v1840
    %1884 = vmatpush.bf16.msra.mxu0 %v1839
    %1885 = vmatpush.bf16.msra.mxu0 %v1838
    %1886 = vmatpush.bf16.msra.mxu0 %v1837
    %1887 = vmatpush.bf16.msra.mxu0 %v1836
    %1888 = vmatpush.bf16.msra.mxu0 %v1835
    %1889 = vmatpush.bf16.msra.mxu0 %v1834
    %1890 = vmatmul.bf16.gmra.mxu0 %v1673
    %v1891 = vpop.f32.mrf.mxu0
    %v1892 = vadd.f32 0.0, %v1891
    %v1893 = vpop.f32.mrf.mxu0
    %v1894 = vadd.f32 0.0, %v1893
    %1895 = vmatmul.bf16.gmra.mxu0 %v1674
    %v1896 = vpop.f32.mrf.mxu0
    %v1897 = vadd.f32 0.0, %v1896
    %v1898 = vpop.f32.mrf.mxu0
    %v1899 = vadd.f32 0.0, %v1898
    %1900 = vdwg.mxu0
    %1901 = vmatpush.bf16.msra.mxu0 %v1849
    %1902 = vmatpush.bf16.msra.mxu0 %v1848
    %1903 = vmatpush.bf16.msra.mxu0 %v1847
    %1904 = vmatpush.bf16.msra.mxu0 %v1846
    %1905 = vmatpush.bf16.msra.mxu0 %v1845
    %1906 = vmatpush.bf16.msra.mxu0 %v1844
    %1907 = vmatpush.bf16.msra.mxu0 %v1843
    %1908 = vmatpush.bf16.msra.mxu0 %v1842
    %1909 = vmatmul.bf16.gmra.mxu0 %v1550
    %v1910 = vpop.f32.mrf.mxu0
    %v1911 = vadd.f32 %v1892, %v1910
    %v1912 = vpop.f32.mrf.mxu0
    %v1913 = vadd.f32 %v1894, %v1912
    %1914 = vmatmul.bf16.gmra.mxu0 %v1551
    %v1915 = vpop.f32.mrf.mxu0
    %v1916 = vadd.f32 %v1897, %v1915
    %v1917 = vpop.f32.mrf.mxu0
    %v1918 = vadd.f32 %v1899, %v1917
    %1919 = vdwg.mxu0
    %1920 = vmatpush.bf16.msra.mxu0 %v1857
    %1921 = vmatpush.bf16.msra.mxu0 %v1856
    %1922 = vmatpush.bf16.msra.mxu0 %v1855
    %1923 = vmatpush.bf16.msra.mxu0 %v1854
    %1924 = vmatpush.bf16.msra.mxu0 %v1853
    %1925 = vmatpush.bf16.msra.mxu0 %v1852
    %1926 = vmatpush.bf16.msra.mxu0 %v1851
    %1927 = vmatpush.bf16.msra.mxu0 %v1850
    %1928 = vmatmul.bf16.gmra.mxu0 %v1685
    %v1929 = vpop.f32.mrf.mxu0
    %v1930 = vadd.f32 %v1911, %v1929
    %v1931 = vpop.f32.mrf.mxu0
    %v1932 = vadd.f32 %v1913, %v1931
    %1933 = vmatmul.bf16.gmra.mxu0 %v1686
    %v1934 = vpop.f32.mrf.mxu0
    %v1935 = vadd.f32 %v1916, %v1934
    %v1936 = vpop.f32.mrf.mxu0
    %v1937 = vadd.f32 %v1918, %v1936
    %1938 = vdwg.mxu0
    %v1939 = vld [vmem:[%s2 + $0xa] sm:$0x1]
    %v1940 = vperm.slane %v1939, 0
    %v1941 = vmul.f32 %v1930, %v1940
    %v1942 = vmul.f32 %v1932, %v1940
    %v1943 = vmul.f32 %v1935, %v1940
    %v1944 = vmul.f32 %v1937, %v1940
    %v1945 = vld [vmem:[%s2 + $0xb] sm:$0x1]
    %v1946 = vperm.slane %v1945, 0
    %v1947 = vadd.f32 %v1941, %v1946
    %v1948 = vadd.f32 %v1942, %v1946
    %v1949 = vadd.f32 %v1943, %v1946
    %v1950 = vadd.f32 %v1944, %v1946
    %v1951 = vmax.f32 %v1947, 0.0
    %v1952 = vmax.f32 %v1948, 0.0
    %v1953 = vmax.f32 %v1949, 0.0
    %v1954 = vmax.f32 %v1950, 0.0
    %v1955 = vrot.slane %v1951, 7
    %v1956 = vrot.slane %v1952, 7
    %v1957 = vrot.slane %v1953, 7
    %v1958 = vrot.slane %v1954, 7
    %v1959 = vsel %vm164, %v1957, %v1958
    %v1960 = vsel %vm164, %v1956, %v1957
    %v1961 = vsel %vm164, %v1955, %v1956
    %v1962 = vsel %vm164, %v1958, %v1955
    %v1963 = vsel %vm173, %v1962, 0.0
    %v1964 = vsel %vm174, %v1961, 0.0
    %v1965 = vsel %vm175, %v1960, 0.0
    %v1966 = vsel %vm176, %v1959, 0.0
    %v1967 = vrot.slane %v1951, 1
    %v1968 = vrot.slane %v1952, 1
    %v1969 = vrot.slane %v1953, 1
    %v1970 = vrot.slane %v1954, 1
    %v1971 = vsel %vm185, %v1969, %v1970
    %v1972 = vsel %vm185, %v1968, %v1969
    %v1973 = vsel %vm185, %v1967, %v1968
    %v1974 = vsel %vm185, %v1970, %v1967
    %v1975 = vsel %vm194, %v1973, 0.0
    %v1976 = vsel %vm195, %v1972, 0.0
    %v1977 = vsel %vm196, %v1971, 0.0
    %v1978 = vsel %vm197, %v1974, 0.0
    %v1979 = vpack.c.bf16 %v1963, %v1963
    %v1980 = vpack.c.bf16 %v1964, %v1964
    %v1981 = vpack.c.bf16 %v1965, %v1965
    %v1982 = vpack.c.bf16 %v1966, %v1966
    %v1983 = vpack.c.bf16 %v1951, %v1951
    %v1984 = vpack.c.bf16 %v1952, %v1952
    %v1985 = vpack.c.bf16 %v1953, %v1953
    %v1986 = vpack.c.bf16 %v1954, %v1954
    %v1987 = vpack.c.bf16 %v1975, %v1975
    %v1988 = vpack.c.bf16 %v1976, %v1976
    %v1989 = vpack.c.bf16 %v1977, %v1977
    %v1990 = vpack.c.bf16 %v1978, %v1978
    %v1995 = vunpack.c.l.b16 %v1979
    %v1996 = vunpack.c.l.b16 %v1980
    %v1997 = vunpack.c.l.b16 %v1981
    %v1998 = vunpack.c.l.b16 %v1982
    %v1999 = vpack.c.b16 %v1996, %v1995
    %v2000 = vpack.c.b16 %v1998, %v1997
    %v2007 = vunpack.c.l.b16 %v1983
    %v2008 = vunpack.c.l.b16 %v1984
    %v2009 = vunpack.c.l.b16 %v1985
    %v2010 = vunpack.c.l.b16 %v1986
    %v2011 = vpack.c.b16 %v2008, %v2007
    %v2012 = vpack.c.b16 %v2010, %v2009
    %v2019 = vunpack.c.l.b16 %v1987
    %v2020 = vunpack.c.l.b16 %v1988
    %v2021 = vunpack.c.l.b16 %v1989
    %v2022 = vunpack.c.l.b16 %v1990
    %v2023 = vpack.c.b16 %v2020, %v2019
    %v2024 = vpack.c.b16 %v2022, %v2021
    %s2027 = scalar_lea.vmem %s1, 1152
    %v2028 = vld [vmem:[%s2027] sm:$0xf]
    %v2029 = vld [vmem:[%s2027 + $0x4] sm:$0xf]
    %v2030 = vld [vmem:[%s2027 + $0x8] sm:$0xf]
    %v2031 = vld [vmem:[%s2027 + $0xc] sm:$0xf]
    %v2032 = vld [vmem:[%s2027 + $0x10] sm:$0xf]
    %v2033 = vld [vmem:[%s2027 + $0x14] sm:$0xf]
    %v2034 = vld [vmem:[%s2027 + $0x18] sm:$0xf]
    %v2035 = vld [vmem:[%s2027 + $0x1c] sm:$0xf]
    %v2036 = vld [vmem:[%s2027 + $0x20] sm:$0xf]
    %v2037 = vld [vmem:[%s2027 + $0x24] sm:$0xf]
    %v2038 = vld [vmem:[%s2027 + $0x28] sm:$0xf]
    %v2039 = vld [vmem:[%s2027 + $0x2c] sm:$0xf]
    %v2040 = vld [vmem:[%s2027 + $0x30] sm:$0xf]
    %v2041 = vld [vmem:[%s2027 + $0x34] sm:$0xf]
    %v2042 = vld [vmem:[%s2027 + $0x38] sm:$0xf]
    %v2043 = vld [vmem:[%s2027 + $0x3c] sm:$0xf]
    %v2044 = vld [vmem:[%s2027 + $0x40] sm:$0xf]
    %v2045 = vld [vmem:[%s2027 + $0x44] sm:$0xf]
    %v2046 = vld [vmem:[%s2027 + $0x48] sm:$0xf]
    %v2047 = vld [vmem:[%s2027 + $0x4c] sm:$0xf]
    %v2048 = vld [vmem:[%s2027 + $0x50] sm:$0xf]
    %v2049 = vld [vmem:[%s2027 + $0x54] sm:$0xf]
    %v2050 = vld [vmem:[%s2027 + $0x58] sm:$0xf]
    %v2051 = vld [vmem:[%s2027 + $0x5c] sm:$0xf]
    %v2052 = vld [vmem:[%s2027 + $0x60] sm:$0xf]
    %v2053 = vld [vmem:[%s2027 + $0x64] sm:$0xf]
    %v2054 = vld [vmem:[%s2027 + $0x68] sm:$0xf]
    %v2055 = vld [vmem:[%s2027 + $0x6c] sm:$0xf]
    %v2056 = vld [vmem:[%s2027 + $0x70] sm:$0xf]
    %v2057 = vld [vmem:[%s2027 + $0x74] sm:$0xf]
    %v2058 = vld [vmem:[%s2027 + $0x78] sm:$0xf]
    %v2059 = vld [vmem:[%s2027 + $0x7c] sm:$0xf]
    %v2060 = vld [vmem:[%s2027 + $0x80] sm:$0xf]
    %v2061 = vld [vmem:[%s2027 + $0x84] sm:$0xf]
    %v2062 = vld [vmem:[%s2027 + $0x88] sm:$0xf]
    %v2063 = vld [vmem:[%s2027 + $0x8c] sm:$0xf]
    %v2064 = vld [vmem:[%s2027 + $0x90] sm:$0xf]
    %v2065 = vld [vmem:[%s2027 + $0x94] sm:$0xf]
    %v2066 = vld [vmem:[%s2027 + $0x98] sm:$0xf]
    %v2067 = vld [vmem:[%s2027 + $0x9c] sm:$0xf]
    %v2068 = vld [vmem:[%s2027 + $0xa0] sm:$0xf]
    %v2069 = vld [vmem:[%s2027 + $0xa4] sm:$0xf]
    %v2070 = vld [vmem:[%s2027 + $0xa8] sm:$0xf]
    %v2071 = vld [vmem:[%s2027 + $0xac] sm:$0xf]
    %v2072 = vld [vmem:[%s2027 + $0xb0] sm:$0xf]
    %v2073 = vld [vmem:[%s2027 + $0xb4] sm:$0xf]
    %v2074 = vld [vmem:[%s2027 + $0xb8] sm:$0xf]
    %v2075 = vld [vmem:[%s2027 + $0xbc] sm:$0xf]
    %v2124 = vunpack.c.l.b16 %v2028
    %v2125 = vunpack.c.l.b16 %v2029
    %v2126 = vunpack.c.l.b16 %v2030
    %v2127 = vunpack.c.l.b16 %v2031
    %v2128 = vunpack.c.l.b16 %v2032
    %v2129 = vunpack.c.l.b16 %v2033
    %v2130 = vunpack.c.l.b16 %v2034
    %v2131 = vunpack.c.l.b16 %v2035
    %v2132 = vunpack.c.l.b16 %v2036
    %v2133 = vunpack.c.l.b16 %v2037
    %v2134 = vunpack.c.l.b16 %v2038
    %v2135 = vunpack.c.l.b16 %v2039
    %v2136 = vunpack.c.l.b16 %v2040
    %v2137 = vunpack.c.l.b16 %v2041
    %v2138 = vunpack.c.l.b16 %v2042
    %v2139 = vunpack.c.l.b16 %v2043
    %v2140 = vunpack.c.l.b16 %v2044
    %v2141 = vunpack.c.l.b16 %v2045
    %v2142 = vunpack.c.l.b16 %v2046
    %v2143 = vunpack.c.l.b16 %v2047
    %v2144 = vunpack.c.l.b16 %v2048
    %v2145 = vunpack.c.l.b16 %v2049
    %v2146 = vunpack.c.l.b16 %v2050
    %v2147 = vunpack.c.l.b16 %v2051
    %v2148 = vunpack.c.l.b16 %v2052
    %v2149 = vunpack.c.l.b16 %v2053
    %v2150 = vunpack.c.l.b16 %v2054
    %v2151 = vunpack.c.l.b16 %v2055
    %v2152 = vunpack.c.l.b16 %v2056
    %v2153 = vunpack.c.l.b16 %v2057
    %v2154 = vunpack.c.l.b16 %v2058
    %v2155 = vunpack.c.l.b16 %v2059
    %v2156 = vunpack.c.l.b16 %v2060
    %v2157 = vunpack.c.l.b16 %v2061
    %v2158 = vunpack.c.l.b16 %v2062
    %v2159 = vunpack.c.l.b16 %v2063
    %v2160 = vunpack.c.l.b16 %v2064
    %v2161 = vunpack.c.l.b16 %v2065
    %v2162 = vunpack.c.l.b16 %v2066
    %v2163 = vunpack.c.l.b16 %v2067
    %v2164 = vunpack.c.l.b16 %v2068
    %v2165 = vunpack.c.l.b16 %v2069
    %v2166 = vunpack.c.l.b16 %v2070
    %v2167 = vunpack.c.l.b16 %v2071
    %v2168 = vunpack.c.l.b16 %v2072
    %v2169 = vunpack.c.l.b16 %v2073
    %v2170 = vunpack.c.l.b16 %v2074
    %v2171 = vunpack.c.l.b16 %v2075
    %v2172 = vpack.c.b16 %v2125, %v2124
    %v2173 = vpack.c.b16 %v2127, %v2126
    %v2174 = vpack.c.b16 %v2129, %v2128
    %v2175 = vpack.c.b16 %v2131, %v2130
    %v2176 = vpack.c.b16 %v2133, %v2132
    %v2177 = vpack.c.b16 %v2135, %v2134
    %v2178 = vpack.c.b16 %v2137, %v2136
    %v2179 = vpack.c.b16 %v2139, %v2138
    %v2180 = vpack.c.b16 %v2141, %v2140
    %v2181 = vpack.c.b16 %v2143, %v2142
    %v2182 = vpack.c.b16 %v2145, %v2144
    %v2183 = vpack.c.b16 %v2147, %v2146
    %v2184 = vpack.c.b16 %v2149, %v2148
    %v2185 = vpack.c.b16 %v2151, %v2150
    %v2186 = vpack.c.b16 %v2153, %v2152
    %v2187 = vpack.c.b16 %v2155, %v2154
    %v2188 = vpack.c.b16 %v2157, %v2156
    %v2189 = vpack.c.b16 %v2159, %v2158
    %v2190 = vpack.c.b16 %v2161, %v2160
    %v2191 = vpack.c.b16 %v2163, %v2162
    %v2192 = vpack.c.b16 %v2165, %v2164
    %v2193 = vpack.c.b16 %v2167, %v2166
    %v2194 = vpack.c.b16 %v2169, %v2168
    %v2195 = vpack.c.b16 %v2171, %v2170
    %2220 = vmatpush.bf16.msra.mxu0 %v2179
    %2221 = vmatpush.bf16.msra.mxu0 %v2178
    %2222 = vmatpush.bf16.msra.mxu0 %v2177
    %2223 = vmatpush.bf16.msra.mxu0 %v2176
    %2224 = vmatpush.bf16.msra.mxu0 %v2175
    %2225 = vmatpush.bf16.msra.mxu0 %v2174
    %2226 = vmatpush.bf16.msra.mxu0 %v2173
    %2227 = vmatpush.bf16.msra.mxu0 %v2172
    %2228 = vmatmul.bf16.gmra.mxu0 %v1999
    %v2229 = vpop.f32.mrf.mxu0
    %v2230 = vadd.f32 0.0, %v2229
    %v2231 = vpop.f32.mrf.mxu0
    %v2232 = vadd.f32 0.0, %v2231
    %2233 = vmatmul.bf16.gmra.mxu0 %v2000
    %v2234 = vpop.f32.mrf.mxu0
    %v2235 = vadd.f32 0.0, %v2234
    %v2236 = vpop.f32.mrf.mxu0
    %v2237 = vadd.f32 0.0, %v2236
    %2238 = vdwg.mxu0
    %2239 = vmatpush.bf16.msra.mxu0 %v2187
    %2240 = vmatpush.bf16.msra.mxu0 %v2186
    %2241 = vmatpush.bf16.msra.mxu0 %v2185
    %2242 = vmatpush.bf16.msra.mxu0 %v2184
    %2243 = vmatpush.bf16.msra.mxu0 %v2183
    %2244 = vmatpush.bf16.msra.mxu0 %v2182
    %2245 = vmatpush.bf16.msra.mxu0 %v2181
    %2246 = vmatpush.bf16.msra.mxu0 %v2180
    %2247 = vmatmul.bf16.gmra.mxu0 %v2011
    %v2248 = vpop.f32.mrf.mxu0
    %v2249 = vadd.f32 %v2230, %v2248
    %v2250 = vpop.f32.mrf.mxu0
    %v2251 = vadd.f32 %v2232, %v2250
    %2252 = vmatmul.bf16.gmra.mxu0 %v2012
    %v2253 = vpop.f32.mrf.mxu0
    %v2254 = vadd.f32 %v2235, %v2253
    %v2255 = vpop.f32.mrf.mxu0
    %v2256 = vadd.f32 %v2237, %v2255
    %2257 = vdwg.mxu0
    %2258 = vmatpush.bf16.msra.mxu0 %v2195
    %2259 = vmatpush.bf16.msra.mxu0 %v2194
    %2260 = vmatpush.bf16.msra.mxu0 %v2193
    %2261 = vmatpush.bf16.msra.mxu0 %v2192
    %2262 = vmatpush.bf16.msra.mxu0 %v2191
    %2263 = vmatpush.bf16.msra.mxu0 %v2190
    %2264 = vmatpush.bf16.msra.mxu0 %v2189
    %2265 = vmatpush.bf16.msra.mxu0 %v2188
    %2266 = vmatmul.bf16.gmra.mxu0 %v2023
    %v2267 = vpop.f32.mrf.mxu0
    %v2268 = vadd.f32 %v2249, %v2267
    %v2269 = vpop.f32.mrf.mxu0
    %v2270 = vadd.f32 %v2251, %v2269
    %2271 = vmatmul.bf16.gmra.mxu0 %v2024
    %v2272 = vpop.f32.mrf.mxu0
    %v2273 = vadd.f32 %v2254, %v2272
    %v2274 = vpop.f32.mrf.mxu0
    %v2275 = vadd.f32 %v2256, %v2274
    %2276 = vdwg.mxu0
    %v2277 = vld [vmem:[%s2 + $0xc] sm:$0x1]
    %v2278 = vperm.slane %v2277, 0
    %v2279 = vmul.f32 %v2268, %v2278
    %v2280 = vmul.f32 %v2270, %v2278
    %v2281 = vmul.f32 %v2273, %v2278
    %v2282 = vmul.f32 %v2275, %v2278
    %v2283 = vld [vmem:[%s2 + $0xd] sm:$0x1]
    %v2284 = vperm.slane %v2283, 0
    %v2285 = vadd.f32 %v2279, %v2284
    %v2286 = vadd.f32 %v2280, %v2284
    %v2287 = vadd.f32 %v2281, %v2284
    %v2288 = vadd.f32 %v2282, %v2284
    %v2289 = vadd.f32 %v2285, %v1629
    %v2290 = vadd.f32 %v2286, %v1630
    %v2291 = vadd.f32 %v2287, %v1631
    %v2292 = vadd.f32 %v2288, %v1632
    %v2293 = vmax.f32 %v2289, 0.0
    %v2294 = vmax.f32 %v2290, 0.0
    %v2295 = vmax.f32 %v2291, 0.0
    %v2296 = vmax.f32 %v2292, 0.0
    %v2297 = vrot.slane %v2293, 7
    %v2298 = vrot.slane %v2294, 7
    %v2299 = vrot.slane %v2295, 7
    %v2300 = vrot.slane %v2296, 7
    %v2301 = vsel %vm164, %v2299, %v2300
    %v2302 = vsel %vm164, %v2298, %v2299
    %v2303 = vsel %vm164, %v2297, %v2298
    %v2304 = vsel %vm164, %v2300, %v2297
    %v2305 = vsel %vm173, %v2304, 0.0
    %v2306 = vsel %vm174, %v2303, 0.0
    %v2307 = vsel %vm175, %v2302, 0.0
    %v2308 = vsel %vm176, %v2301, 0.0
    %v2309 = vrot.slane %v2293, 1
    %v2310 = vrot.slane %v2294, 1
    %v2311 = vrot.slane %v2295, 1
    %v2312 = vrot.slane %v2296, 1
    %v2313 = vsel %vm185, %v2311, %v2312
    %v2314 = vsel %vm185, %v2310, %v2311
    %v2315 = vsel %vm185, %v2309, %v2310
    %v2316 = vsel %vm185, %v2312, %v2309
    %v2317 = vsel %vm194, %v2315, 0.0
    %v2318 = vsel %vm195, %v2314, 0.0
    %v2319 = vsel %vm196, %v2313, 0.0
    %v2320 = vsel %vm197, %v2316, 0.0
    %v2321 = vpack.c.bf16 %v2305, %v2305
    %v2322 = vpack.c.bf16 %v2306, %v2306
    %v2323 = vpack.c.bf16 %v2307, %v2307
    %v2324 = vpack.c.bf16 %v2308, %v2308
    %v2325 = vpack.c.bf16 %v2293, %v2293
    %v2326 = vpack.c.bf16 %v2294, %v2294
    %v2327 = vpack.c.bf16 %v2295, %v2295
    %v2328 = vpack.c.bf16 %v2296, %v2296
    %v2329 = vpack.c.bf16 %v2317, %v2317
    %v2330 = vpack.c.bf16 %v2318, %v2318
    %v2331 = vpack.c.bf16 %v2319, %v2319
    %v2332 = vpack.c.bf16 %v2320, %v2320
    %v2337 = vunpack.c.l.b16 %v2321
    %v2338 = vunpack.c.l.b16 %v2322
    %v2339 = vunpack.c.l.b16 %v2323
    %v2340 = vunpack.c.l.b16 %v2324
    %v2341 = vpack.c.b16 %v2338, %v2337
    %v2342 = vpack.c.b16 %v2340, %v2339
    %v2349 = vunpack.c.l.b16 %v2325
    %v2350 = vunpack.c.l.b16 %v2326
    %v2351 = vunpack.c.l.b16 %v2327
    %v2352 = vunpack.c.l.b16 %v2328
    %v2353 = vpack.c.b16 %v2350, %v2349
    %v2354 = vpack.c.b16 %v2352, %v2351
    %v2361 = vunpack.c.l.b16 %v2329
    %v2362 = vunpack.c.l.b16 %v2330
    %v2363 = vunpack.c.l.b16 %v2331
    %v2364 = vunpack.c.l.b16 %v2332
    %v2365 = vpack.c.b16 %v2362, %v2361
    %v2366 = vpack.c.b16 %v2364, %v2363
    %s2369 = scalar_lea.vmem %s1, 1536
    %v2370 = vld [vmem:[%s2369] sm:$0xf]
    %v2371 = vld [vmem:[%s2369 + $0x4] sm:$0xf]
    %v2372 = vld [vmem:[%s2369 + $0x8] sm:$0xf]
    %v2373 = vld [vmem:[%s2369 + $0xc] sm:$0xf]
    %v2374 = vld [vmem:[%s2369 + $0x10] sm:$0xf]
    %v2375 = vld [vmem:[%s2369 + $0x14] sm:$0xf]
    %v2376 = vld [vmem:[%s2369 + $0x18] sm:$0xf]
    %v2377 = vld [vmem:[%s2369 + $0x1c] sm:$0xf]
    %v2378 = vld [vmem:[%s2369 + $0x20] sm:$0xf]
    %v2379 = vld [vmem:[%s2369 + $0x24] sm:$0xf]
    %v2380 = vld [vmem:[%s2369 + $0x28] sm:$0xf]
    %v2381 = vld [vmem:[%s2369 + $0x2c] sm:$0xf]
    %v2382 = vld [vmem:[%s2369 + $0x30] sm:$0xf]
    %v2383 = vld [vmem:[%s2369 + $0x34] sm:$0xf]
    %v2384 = vld [vmem:[%s2369 + $0x38] sm:$0xf]
    %v2385 = vld [vmem:[%s2369 + $0x3c] sm:$0xf]
    %v2386 = vld [vmem:[%s2369 + $0x40] sm:$0xf]
    %v2387 = vld [vmem:[%s2369 + $0x44] sm:$0xf]
    %v2388 = vld [vmem:[%s2369 + $0x48] sm:$0xf]
    %v2389 = vld [vmem:[%s2369 + $0x4c] sm:$0xf]
    %v2390 = vld [vmem:[%s2369 + $0x50] sm:$0xf]
    %v2391 = vld [vmem:[%s2369 + $0x54] sm:$0xf]
    %v2392 = vld [vmem:[%s2369 + $0x58] sm:$0xf]
    %v2393 = vld [vmem:[%s2369 + $0x5c] sm:$0xf]
    %v2394 = vld [vmem:[%s2369 + $0x60] sm:$0xf]
    %v2395 = vld [vmem:[%s2369 + $0x64] sm:$0xf]
    %v2396 = vld [vmem:[%s2369 + $0x68] sm:$0xf]
    %v2397 = vld [vmem:[%s2369 + $0x6c] sm:$0xf]
    %v2398 = vld [vmem:[%s2369 + $0x70] sm:$0xf]
    %v2399 = vld [vmem:[%s2369 + $0x74] sm:$0xf]
    %v2400 = vld [vmem:[%s2369 + $0x78] sm:$0xf]
    %v2401 = vld [vmem:[%s2369 + $0x7c] sm:$0xf]
    %v2402 = vld [vmem:[%s2369 + $0x80] sm:$0xf]
    %v2403 = vld [vmem:[%s2369 + $0x84] sm:$0xf]
    %v2404 = vld [vmem:[%s2369 + $0x88] sm:$0xf]
    %v2405 = vld [vmem:[%s2369 + $0x8c] sm:$0xf]
    %v2406 = vld [vmem:[%s2369 + $0x90] sm:$0xf]
    %v2407 = vld [vmem:[%s2369 + $0x94] sm:$0xf]
    %v2408 = vld [vmem:[%s2369 + $0x98] sm:$0xf]
    %v2409 = vld [vmem:[%s2369 + $0x9c] sm:$0xf]
    %v2410 = vld [vmem:[%s2369 + $0xa0] sm:$0xf]
    %v2411 = vld [vmem:[%s2369 + $0xa4] sm:$0xf]
    %v2412 = vld [vmem:[%s2369 + $0xa8] sm:$0xf]
    %v2413 = vld [vmem:[%s2369 + $0xac] sm:$0xf]
    %v2414 = vld [vmem:[%s2369 + $0xb0] sm:$0xf]
    %v2415 = vld [vmem:[%s2369 + $0xb4] sm:$0xf]
    %v2416 = vld [vmem:[%s2369 + $0xb8] sm:$0xf]
    %v2417 = vld [vmem:[%s2369 + $0xbc] sm:$0xf]
    %v2466 = vunpack.c.l.b16 %v2370
    %v2467 = vunpack.c.l.b16 %v2371
    %v2468 = vunpack.c.l.b16 %v2372
    %v2469 = vunpack.c.l.b16 %v2373
    %v2470 = vunpack.c.l.b16 %v2374
    %v2471 = vunpack.c.l.b16 %v2375
    %v2472 = vunpack.c.l.b16 %v2376
    %v2473 = vunpack.c.l.b16 %v2377
    %v2474 = vunpack.c.l.b16 %v2378
    %v2475 = vunpack.c.l.b16 %v2379
    %v2476 = vunpack.c.l.b16 %v2380
    %v2477 = vunpack.c.l.b16 %v2381
    %v2478 = vunpack.c.l.b16 %v2382
    %v2479 = vunpack.c.l.b16 %v2383
    %v2480 = vunpack.c.l.b16 %v2384
    %v2481 = vunpack.c.l.b16 %v2385
    %v2482 = vunpack.c.l.b16 %v2386
    %v2483 = vunpack.c.l.b16 %v2387
    %v2484 = vunpack.c.l.b16 %v2388
    %v2485 = vunpack.c.l.b16 %v2389
    %v2486 = vunpack.c.l.b16 %v2390
    %v2487 = vunpack.c.l.b16 %v2391
    %v2488 = vunpack.c.l.b16 %v2392
    %v2489 = vunpack.c.l.b16 %v2393
    %v2490 = vunpack.c.l.b16 %v2394
    %v2491 = vunpack.c.l.b16 %v2395
    %v2492 = vunpack.c.l.b16 %v2396
    %v2493 = vunpack.c.l.b16 %v2397
    %v2494 = vunpack.c.l.b16 %v2398
    %v2495 = vunpack.c.l.b16 %v2399
    %v2496 = vunpack.c.l.b16 %v2400
    %v2497 = vunpack.c.l.b16 %v2401
    %v2498 = vunpack.c.l.b16 %v2402
    %v2499 = vunpack.c.l.b16 %v2403
    %v2500 = vunpack.c.l.b16 %v2404
    %v2501 = vunpack.c.l.b16 %v2405
    %v2502 = vunpack.c.l.b16 %v2406
    %v2503 = vunpack.c.l.b16 %v2407
    %v2504 = vunpack.c.l.b16 %v2408
    %v2505 = vunpack.c.l.b16 %v2409
    %v2506 = vunpack.c.l.b16 %v2410
    %v2507 = vunpack.c.l.b16 %v2411
    %v2508 = vunpack.c.l.b16 %v2412
    %v2509 = vunpack.c.l.b16 %v2413
    %v2510 = vunpack.c.l.b16 %v2414
    %v2511 = vunpack.c.l.b16 %v2415
    %v2512 = vunpack.c.l.b16 %v2416
    %v2513 = vunpack.c.l.b16 %v2417
    %v2514 = vpack.c.b16 %v2467, %v2466
    %v2515 = vpack.c.b16 %v2469, %v2468
    %v2516 = vpack.c.b16 %v2471, %v2470
    %v2517 = vpack.c.b16 %v2473, %v2472
    %v2518 = vpack.c.b16 %v2475, %v2474
    %v2519 = vpack.c.b16 %v2477, %v2476
    %v2520 = vpack.c.b16 %v2479, %v2478
    %v2521 = vpack.c.b16 %v2481, %v2480
    %v2522 = vpack.c.b16 %v2483, %v2482
    %v2523 = vpack.c.b16 %v2485, %v2484
    %v2524 = vpack.c.b16 %v2487, %v2486
    %v2525 = vpack.c.b16 %v2489, %v2488
    %v2526 = vpack.c.b16 %v2491, %v2490
    %v2527 = vpack.c.b16 %v2493, %v2492
    %v2528 = vpack.c.b16 %v2495, %v2494
    %v2529 = vpack.c.b16 %v2497, %v2496
    %v2530 = vpack.c.b16 %v2499, %v2498
    %v2531 = vpack.c.b16 %v2501, %v2500
    %v2532 = vpack.c.b16 %v2503, %v2502
    %v2533 = vpack.c.b16 %v2505, %v2504
    %v2534 = vpack.c.b16 %v2507, %v2506
    %v2535 = vpack.c.b16 %v2509, %v2508
    %v2536 = vpack.c.b16 %v2511, %v2510
    %v2537 = vpack.c.b16 %v2513, %v2512
    %2562 = vmatpush.bf16.msra.mxu0 %v2521
    %2563 = vmatpush.bf16.msra.mxu0 %v2520
    %2564 = vmatpush.bf16.msra.mxu0 %v2519
    %2565 = vmatpush.bf16.msra.mxu0 %v2518
    %2566 = vmatpush.bf16.msra.mxu0 %v2517
    %2567 = vmatpush.bf16.msra.mxu0 %v2516
    %2568 = vmatpush.bf16.msra.mxu0 %v2515
    %2569 = vmatpush.bf16.msra.mxu0 %v2514
    %2570 = vmatmul.bf16.gmra.mxu0 %v2341
    %v2571 = vpop.f32.mrf.mxu0
    %v2572 = vadd.f32 0.0, %v2571
    %v2573 = vpop.f32.mrf.mxu0
    %v2574 = vadd.f32 0.0, %v2573
    %2575 = vmatmul.bf16.gmra.mxu0 %v2342
    %v2576 = vpop.f32.mrf.mxu0
    %v2577 = vadd.f32 0.0, %v2576
    %v2578 = vpop.f32.mrf.mxu0
    %v2579 = vadd.f32 0.0, %v2578
    %2580 = vdwg.mxu0
    %2581 = vmatpush.bf16.msra.mxu0 %v2529
    %2582 = vmatpush.bf16.msra.mxu0 %v2528
    %2583 = vmatpush.bf16.msra.mxu0 %v2527
    %2584 = vmatpush.bf16.msra.mxu0 %v2526
    %2585 = vmatpush.bf16.msra.mxu0 %v2525
    %2586 = vmatpush.bf16.msra.mxu0 %v2524
    %2587 = vmatpush.bf16.msra.mxu0 %v2523
    %2588 = vmatpush.bf16.msra.mxu0 %v2522
    %2589 = vmatmul.bf16.gmra.mxu0 %v2353
    %v2590 = vpop.f32.mrf.mxu0
    %v2591 = vadd.f32 %v2572, %v2590
    %v2592 = vpop.f32.mrf.mxu0
    %v2593 = vadd.f32 %v2574, %v2592
    %2594 = vmatmul.bf16.gmra.mxu0 %v2354
    %v2595 = vpop.f32.mrf.mxu0
    %v2596 = vadd.f32 %v2577, %v2595
    %v2597 = vpop.f32.mrf.mxu0
    %v2598 = vadd.f32 %v2579, %v2597
    %2599 = vdwg.mxu0
    %2600 = vmatpush.bf16.msra.mxu0 %v2537
    %2601 = vmatpush.bf16.msra.mxu0 %v2536
    %2602 = vmatpush.bf16.msra.mxu0 %v2535
    %2603 = vmatpush.bf16.msra.mxu0 %v2534
    %2604 = vmatpush.bf16.msra.mxu0 %v2533
    %2605 = vmatpush.bf16.msra.mxu0 %v2532
    %2606 = vmatpush.bf16.msra.mxu0 %v2531
    %2607 = vmatpush.bf16.msra.mxu0 %v2530
    %2608 = vmatmul.bf16.gmra.mxu0 %v2365
    %v2609 = vpop.f32.mrf.mxu0
    %v2610 = vadd.f32 %v2591, %v2609
    %v2611 = vpop.f32.mrf.mxu0
    %v2612 = vadd.f32 %v2593, %v2611
    %2613 = vmatmul.bf16.gmra.mxu0 %v2366
    %v2614 = vpop.f32.mrf.mxu0
    %v2615 = vadd.f32 %v2596, %v2614
    %v2616 = vpop.f32.mrf.mxu0
    %v2617 = vadd.f32 %v2598, %v2616
    %2618 = vdwg.mxu0
    %v2619 = vld [vmem:[%s2 + $0x10] sm:$0x1]
    %v2620 = vperm.slane %v2619, 0
    %v2621 = vmul.f32 %v2610, %v2620
    %v2622 = vmul.f32 %v2612, %v2620
    %v2623 = vmul.f32 %v2615, %v2620
    %v2624 = vmul.f32 %v2617, %v2620
    %v2625 = vld [vmem:[%s2 + $0x11] sm:$0x1]
    %v2626 = vperm.slane %v2625, 0
    %v2627 = vadd.f32 %v2621, %v2626
    %v2628 = vadd.f32 %v2622, %v2626
    %v2629 = vadd.f32 %v2623, %v2626
    %v2630 = vadd.f32 %v2624, %v2626
    %v2631 = vmax.f32 %v2627, 0.0
    %v2632 = vmax.f32 %v2628, 0.0
    %v2633 = vmax.f32 %v2629, 0.0
    %v2634 = vmax.f32 %v2630, 0.0
    %v2635 = vrot.slane %v2631, 7
    %v2636 = vrot.slane %v2632, 7
    %v2637 = vrot.slane %v2633, 7
    %v2638 = vrot.slane %v2634, 7
    %v2639 = vsel %vm164, %v2637, %v2638
    %v2640 = vsel %vm164, %v2636, %v2637
    %v2641 = vsel %vm164, %v2635, %v2636
    %v2642 = vsel %vm164, %v2638, %v2635
    %v2643 = vsel %vm173, %v2642, 0.0
    %v2644 = vsel %vm174, %v2641, 0.0
    %v2645 = vsel %vm175, %v2640, 0.0
    %v2646 = vsel %vm176, %v2639, 0.0
    %v2647 = vrot.slane %v2631, 1
    %v2648 = vrot.slane %v2632, 1
    %v2649 = vrot.slane %v2633, 1
    %v2650 = vrot.slane %v2634, 1
    %v2651 = vsel %vm185, %v2649, %v2650
    %v2652 = vsel %vm185, %v2648, %v2649
    %v2653 = vsel %vm185, %v2647, %v2648
    %v2654 = vsel %vm185, %v2650, %v2647
    %v2655 = vsel %vm194, %v2653, 0.0
    %v2656 = vsel %vm195, %v2652, 0.0
    %v2657 = vsel %vm196, %v2651, 0.0
    %v2658 = vsel %vm197, %v2654, 0.0
    %v2659 = vpack.c.bf16 %v2643, %v2643
    %v2660 = vpack.c.bf16 %v2644, %v2644
    %v2661 = vpack.c.bf16 %v2645, %v2645
    %v2662 = vpack.c.bf16 %v2646, %v2646
    %v2663 = vpack.c.bf16 %v2631, %v2631
    %v2664 = vpack.c.bf16 %v2632, %v2632
    %v2665 = vpack.c.bf16 %v2633, %v2633
    %v2666 = vpack.c.bf16 %v2634, %v2634
    %v2667 = vpack.c.bf16 %v2655, %v2655
    %v2668 = vpack.c.bf16 %v2656, %v2656
    %v2669 = vpack.c.bf16 %v2657, %v2657
    %v2670 = vpack.c.bf16 %v2658, %v2658
    %v2675 = vunpack.c.l.b16 %v2659
    %v2676 = vunpack.c.l.b16 %v2660
    %v2677 = vunpack.c.l.b16 %v2661
    %v2678 = vunpack.c.l.b16 %v2662
    %v2679 = vpack.c.b16 %v2676, %v2675
    %v2680 = vpack.c.b16 %v2678, %v2677
    %v2687 = vunpack.c.l.b16 %v2663
    %v2688 = vunpack.c.l.b16 %v2664
    %v2689 = vunpack.c.l.b16 %v2665
    %v2690 = vunpack.c.l.b16 %v2666
    %v2691 = vpack.c.b16 %v2688, %v2687
    %v2692 = vpack.c.b16 %v2690, %v2689
    %v2699 = vunpack.c.l.b16 %v2667
    %v2700 = vunpack.c.l.b16 %v2668
    %v2701 = vunpack.c.l.b16 %v2669
    %v2702 = vunpack.c.l.b16 %v2670
    %v2703 = vpack.c.b16 %v2700, %v2699
    %v2704 = vpack.c.b16 %v2702, %v2701
    %s2707 = scalar_lea.vmem %s1, 1728
    %v2708 = vld [vmem:[%s2707] sm:$0xf]
    %v2709 = vld [vmem:[%s2707 + $0x4] sm:$0xf]
    %v2710 = vld [vmem:[%s2707 + $0x8] sm:$0xf]
    %v2711 = vld [vmem:[%s2707 + $0xc] sm:$0xf]
    %v2712 = vld [vmem:[%s2707 + $0x10] sm:$0xf]
    %v2713 = vld [vmem:[%s2707 + $0x14] sm:$0xf]
    %v2714 = vld [vmem:[%s2707 + $0x18] sm:$0xf]
    %v2715 = vld [vmem:[%s2707 + $0x1c] sm:$0xf]
    %v2716 = vld [vmem:[%s2707 + $0x20] sm:$0xf]
    %v2717 = vld [vmem:[%s2707 + $0x24] sm:$0xf]
    %v2718 = vld [vmem:[%s2707 + $0x28] sm:$0xf]
    %v2719 = vld [vmem:[%s2707 + $0x2c] sm:$0xf]
    %v2720 = vld [vmem:[%s2707 + $0x30] sm:$0xf]
    %v2721 = vld [vmem:[%s2707 + $0x34] sm:$0xf]
    %v2722 = vld [vmem:[%s2707 + $0x38] sm:$0xf]
    %v2723 = vld [vmem:[%s2707 + $0x3c] sm:$0xf]
    %v2724 = vld [vmem:[%s2707 + $0x40] sm:$0xf]
    %v2725 = vld [vmem:[%s2707 + $0x44] sm:$0xf]
    %v2726 = vld [vmem:[%s2707 + $0x48] sm:$0xf]
    %v2727 = vld [vmem:[%s2707 + $0x4c] sm:$0xf]
    %v2728 = vld [vmem:[%s2707 + $0x50] sm:$0xf]
    %v2729 = vld [vmem:[%s2707 + $0x54] sm:$0xf]
    %v2730 = vld [vmem:[%s2707 + $0x58] sm:$0xf]
    %v2731 = vld [vmem:[%s2707 + $0x5c] sm:$0xf]
    %v2732 = vld [vmem:[%s2707 + $0x60] sm:$0xf]
    %v2733 = vld [vmem:[%s2707 + $0x64] sm:$0xf]
    %v2734 = vld [vmem:[%s2707 + $0x68] sm:$0xf]
    %v2735 = vld [vmem:[%s2707 + $0x6c] sm:$0xf]
    %v2736 = vld [vmem:[%s2707 + $0x70] sm:$0xf]
    %v2737 = vld [vmem:[%s2707 + $0x74] sm:$0xf]
    %v2738 = vld [vmem:[%s2707 + $0x78] sm:$0xf]
    %v2739 = vld [vmem:[%s2707 + $0x7c] sm:$0xf]
    %v2740 = vld [vmem:[%s2707 + $0x80] sm:$0xf]
    %v2741 = vld [vmem:[%s2707 + $0x84] sm:$0xf]
    %v2742 = vld [vmem:[%s2707 + $0x88] sm:$0xf]
    %v2743 = vld [vmem:[%s2707 + $0x8c] sm:$0xf]
    %v2744 = vld [vmem:[%s2707 + $0x90] sm:$0xf]
    %v2745 = vld [vmem:[%s2707 + $0x94] sm:$0xf]
    %v2746 = vld [vmem:[%s2707 + $0x98] sm:$0xf]
    %v2747 = vld [vmem:[%s2707 + $0x9c] sm:$0xf]
    %v2748 = vld [vmem:[%s2707 + $0xa0] sm:$0xf]
    %v2749 = vld [vmem:[%s2707 + $0xa4] sm:$0xf]
    %v2750 = vld [vmem:[%s2707 + $0xa8] sm:$0xf]
    %v2751 = vld [vmem:[%s2707 + $0xac] sm:$0xf]
    %v2752 = vld [vmem:[%s2707 + $0xb0] sm:$0xf]
    %v2753 = vld [vmem:[%s2707 + $0xb4] sm:$0xf]
    %v2754 = vld [vmem:[%s2707 + $0xb8] sm:$0xf]
    %v2755 = vld [vmem:[%s2707 + $0xbc] sm:$0xf]
    %v2804 = vunpack.c.l.b16 %v2708
    %v2805 = vunpack.c.l.b16 %v2709
    %v2806 = vunpack.c.l.b16 %v2710
    %v2807 = vunpack.c.l.b16 %v2711
    %v2808 = vunpack.c.l.b16 %v2712
    %v2809 = vunpack.c.l.b16 %v2713
    %v2810 = vunpack.c.l.b16 %v2714
    %v2811 = vunpack.c.l.b16 %v2715
    %v2812 = vunpack.c.l.b16 %v2716
    %v2813 = vunpack.c.l.b16 %v2717
    %v2814 = vunpack.c.l.b16 %v2718
    %v2815 = vunpack.c.l.b16 %v2719
    %v2816 = vunpack.c.l.b16 %v2720
    %v2817 = vunpack.c.l.b16 %v2721
    %v2818 = vunpack.c.l.b16 %v2722
    %v2819 = vunpack.c.l.b16 %v2723
    %v2820 = vunpack.c.l.b16 %v2724
    %v2821 = vunpack.c.l.b16 %v2725
    %v2822 = vunpack.c.l.b16 %v2726
    %v2823 = vunpack.c.l.b16 %v2727
    %v2824 = vunpack.c.l.b16 %v2728
    %v2825 = vunpack.c.l.b16 %v2729
    %v2826 = vunpack.c.l.b16 %v2730
    %v2827 = vunpack.c.l.b16 %v2731
    %v2828 = vunpack.c.l.b16 %v2732
    %v2829 = vunpack.c.l.b16 %v2733
    %v2830 = vunpack.c.l.b16 %v2734
    %v2831 = vunpack.c.l.b16 %v2735
    %v2832 = vunpack.c.l.b16 %v2736
    %v2833 = vunpack.c.l.b16 %v2737
    %v2834 = vunpack.c.l.b16 %v2738
    %v2835 = vunpack.c.l.b16 %v2739
    %v2836 = vunpack.c.l.b16 %v2740
    %v2837 = vunpack.c.l.b16 %v2741
    %v2838 = vunpack.c.l.b16 %v2742
    %v2839 = vunpack.c.l.b16 %v2743
    %v2840 = vunpack.c.l.b16 %v2744
    %v2841 = vunpack.c.l.b16 %v2745
    %v2842 = vunpack.c.l.b16 %v2746
    %v2843 = vunpack.c.l.b16 %v2747
    %v2844 = vunpack.c.l.b16 %v2748
    %v2845 = vunpack.c.l.b16 %v2749
    %v2846 = vunpack.c.l.b16 %v2750
    %v2847 = vunpack.c.l.b16 %v2751
    %v2848 = vunpack.c.l.b16 %v2752
    %v2849 = vunpack.c.l.b16 %v2753
    %v2850 = vunpack.c.l.b16 %v2754
    %v2851 = vunpack.c.l.b16 %v2755
    %v2852 = vpack.c.b16 %v2805, %v2804
    %v2853 = vpack.c.b16 %v2807, %v2806
    %v2854 = vpack.c.b16 %v2809, %v2808
    %v2855 = vpack.c.b16 %v2811, %v2810
    %v2856 = vpack.c.b16 %v2813, %v2812
    %v2857 = vpack.c.b16 %v2815, %v2814
    %v2858 = vpack.c.b16 %v2817, %v2816
    %v2859 = vpack.c.b16 %v2819, %v2818
    %v2860 = vpack.c.b16 %v2821, %v2820
    %v2861 = vpack.c.b16 %v2823, %v2822
    %v2862 = vpack.c.b16 %v2825, %v2824
    %v2863 = vpack.c.b16 %v2827, %v2826
    %v2864 = vpack.c.b16 %v2829, %v2828
    %v2865 = vpack.c.b16 %v2831, %v2830
    %v2866 = vpack.c.b16 %v2833, %v2832
    %v2867 = vpack.c.b16 %v2835, %v2834
    %v2868 = vpack.c.b16 %v2837, %v2836
    %v2869 = vpack.c.b16 %v2839, %v2838
    %v2870 = vpack.c.b16 %v2841, %v2840
    %v2871 = vpack.c.b16 %v2843, %v2842
    %v2872 = vpack.c.b16 %v2845, %v2844
    %v2873 = vpack.c.b16 %v2847, %v2846
    %v2874 = vpack.c.b16 %v2849, %v2848
    %v2875 = vpack.c.b16 %v2851, %v2850
    %2900 = vmatpush.bf16.msra.mxu0 %v2859
    %2901 = vmatpush.bf16.msra.mxu0 %v2858
    %2902 = vmatpush.bf16.msra.mxu0 %v2857
    %2903 = vmatpush.bf16.msra.mxu0 %v2856
    %2904 = vmatpush.bf16.msra.mxu0 %v2855
    %2905 = vmatpush.bf16.msra.mxu0 %v2854
    %2906 = vmatpush.bf16.msra.mxu0 %v2853
    %2907 = vmatpush.bf16.msra.mxu0 %v2852
    %2908 = vmatmul.bf16.gmra.mxu0 %v2679
    %v2909 = vpop.f32.mrf.mxu0
    %v2910 = vadd.f32 0.0, %v2909
    %v2911 = vpop.f32.mrf.mxu0
    %v2912 = vadd.f32 0.0, %v2911
    %2913 = vmatmul.bf16.gmra.mxu0 %v2680
    %v2914 = vpop.f32.mrf.mxu0
    %v2915 = vadd.f32 0.0, %v2914
    %v2916 = vpop.f32.mrf.mxu0
    %v2917 = vadd.f32 0.0, %v2916
    %2918 = vdwg.mxu0
    %2919 = vmatpush.bf16.msra.mxu0 %v2867
    %2920 = vmatpush.bf16.msra.mxu0 %v2866
    %2921 = vmatpush.bf16.msra.mxu0 %v2865
    %2922 = vmatpush.bf16.msra.mxu0 %v2864
    %2923 = vmatpush.bf16.msra.mxu0 %v2863
    %2924 = vmatpush.bf16.msra.mxu0 %v2862
    %2925 = vmatpush.bf16.msra.mxu0 %v2861
    %2926 = vmatpush.bf16.msra.mxu0 %v2860
    %2927 = vmatmul.bf16.gmra.mxu0 %v2691
    %v2928 = vpop.f32.mrf.mxu0
    %v2929 = vadd.f32 %v2910, %v2928
    %v2930 = vpop.f32.mrf.mxu0
    %v2931 = vadd.f32 %v2912, %v2930
    %2932 = vmatmul.bf16.gmra.mxu0 %v2692
    %v2933 = vpop.f32.mrf.mxu0
    %v2934 = vadd.f32 %v2915, %v2933
    %v2935 = vpop.f32.mrf.mxu0
    %v2936 = vadd.f32 %v2917, %v2935
    %2937 = vdwg.mxu0
    %2938 = vmatpush.bf16.msra.mxu0 %v2875
    %2939 = vmatpush.bf16.msra.mxu0 %v2874
    %2940 = vmatpush.bf16.msra.mxu0 %v2873
    %2941 = vmatpush.bf16.msra.mxu0 %v2872
    %2942 = vmatpush.bf16.msra.mxu0 %v2871
    %2943 = vmatpush.bf16.msra.mxu0 %v2870
    %2944 = vmatpush.bf16.msra.mxu0 %v2869
    %2945 = vmatpush.bf16.msra.mxu0 %v2868
    %2946 = vmatmul.bf16.gmra.mxu0 %v2703
    %v2947 = vpop.f32.mrf.mxu0
    %v2948 = vadd.f32 %v2929, %v2947
    %v2949 = vpop.f32.mrf.mxu0
    %v2950 = vadd.f32 %v2931, %v2949
    %2951 = vmatmul.bf16.gmra.mxu0 %v2704
    %v2952 = vpop.f32.mrf.mxu0
    %v2953 = vadd.f32 %v2934, %v2952
    %v2954 = vpop.f32.mrf.mxu0
    %v2955 = vadd.f32 %v2936, %v2954
    %2956 = vdwg.mxu0
    %v2957 = vld [vmem:[%s2 + $0x12] sm:$0x1]
    %v2958 = vperm.slane %v2957, 0
    %v2959 = vmul.f32 %v2948, %v2958
    %v2960 = vmul.f32 %v2950, %v2958
    %v2961 = vmul.f32 %v2953, %v2958
    %v2962 = vmul.f32 %v2955, %v2958
    %v2963 = vld [vmem:[%s2 + $0x13] sm:$0x1]
    %v2964 = vperm.slane %v2963, 0
    %v2965 = vadd.f32 %v2959, %v2964
    %v2966 = vadd.f32 %v2960, %v2964
    %v2967 = vadd.f32 %v2961, %v2964
    %v2968 = vadd.f32 %v2962, %v2964
    %v2969 = vadd.f32 %v2965, %v2293
    %v2970 = vadd.f32 %v2966, %v2294
    %v2971 = vadd.f32 %v2967, %v2295
    %v2972 = vadd.f32 %v2968, %v2296
    %v2973 = vmax.f32 %v2969, 0.0
    %v2974 = vmax.f32 %v2970, 0.0
    %v2975 = vmax.f32 %v2971, 0.0
    %v2976 = vmax.f32 %v2972, 0.0
    %s2977 = scalar_lea.vmem %s1, 2304
    %v2978 = vld [vmem:[%s2977 + $0x40] sm:$0xf]
    %v2979 = vld [vmem:[%s2977 + $0x44] sm:$0xf]
    %v2980 = vld [vmem:[%s2977 + $0x48] sm:$0xf]
    %v2981 = vld [vmem:[%s2977 + $0x4c] sm:$0xf]
    %v2982 = vld [vmem:[%s2977 + $0x50] sm:$0xf]
    %v2983 = vld [vmem:[%s2977 + $0x54] sm:$0xf]
    %v2984 = vld [vmem:[%s2977 + $0x58] sm:$0xf]
    %v2985 = vld [vmem:[%s2977 + $0x5c] sm:$0xf]
    %v2986 = vld [vmem:[%s2977 + $0x60] sm:$0xf]
    %v2987 = vld [vmem:[%s2977 + $0x64] sm:$0xf]
    %v2988 = vld [vmem:[%s2977 + $0x68] sm:$0xf]
    %v2989 = vld [vmem:[%s2977 + $0x6c] sm:$0xf]
    %v2990 = vld [vmem:[%s2977 + $0x70] sm:$0xf]
    %v2991 = vld [vmem:[%s2977 + $0x74] sm:$0xf]
    %v2992 = vld [vmem:[%s2977 + $0x78] sm:$0xf]
    %v2993 = vld [vmem:[%s2977 + $0x7c] sm:$0xf]
    %v2994 = vpack.c.bf16 %v2973, %v2973
    %v2995 = vpack.c.bf16 %v2974, %v2974
    %v2996 = vpack.c.bf16 %v2975, %v2975
    %v2997 = vpack.c.bf16 %v2976, %v2976
    %v3002 = vunpack.c.l.b16 %v2994
    %v3003 = vunpack.c.l.b16 %v2995
    %v3004 = vunpack.c.l.b16 %v2996
    %v3005 = vunpack.c.l.b16 %v2997
    %v3006 = vpack.c.b16 %v3003, %v3002
    %v3007 = vpack.c.b16 %v3005, %v3004
    %v3026 = vunpack.c.l.b16 %v2978
    %v3027 = vunpack.c.l.b16 %v2979
    %v3028 = vunpack.c.l.b16 %v2980
    %v3029 = vunpack.c.l.b16 %v2981
    %v3030 = vunpack.c.l.b16 %v2982
    %v3031 = vunpack.c.l.b16 %v2983
    %v3032 = vunpack.c.l.b16 %v2984
    %v3033 = vunpack.c.l.b16 %v2985
    %v3034 = vunpack.c.l.b16 %v2986
    %v3035 = vunpack.c.l.b16 %v2987
    %v3036 = vunpack.c.l.b16 %v2988
    %v3037 = vunpack.c.l.b16 %v2989
    %v3038 = vunpack.c.l.b16 %v2990
    %v3039 = vunpack.c.l.b16 %v2991
    %v3040 = vunpack.c.l.b16 %v2992
    %v3041 = vunpack.c.l.b16 %v2993
    %v3042 = vpack.c.b16 %v3027, %v3026
    %v3043 = vpack.c.b16 %v3029, %v3028
    %v3044 = vpack.c.b16 %v3031, %v3030
    %v3045 = vpack.c.b16 %v3033, %v3032
    %v3046 = vpack.c.b16 %v3035, %v3034
    %v3047 = vpack.c.b16 %v3037, %v3036
    %v3048 = vpack.c.b16 %v3039, %v3038
    %v3049 = vpack.c.b16 %v3041, %v3040
    %3058 = vmatpush.bf16.msra.mxu0 %v3049
    %3059 = vmatpush.bf16.msra.mxu0 %v3048
    %3060 = vmatpush.bf16.msra.mxu0 %v3047
    %3061 = vmatpush.bf16.msra.mxu0 %v3046
    %3062 = vmatpush.bf16.msra.mxu0 %v3045
    %3063 = vmatpush.bf16.msra.mxu0 %v3044
    %3064 = vmatpush.bf16.msra.mxu0 %v3043
    %3065 = vmatpush.bf16.msra.mxu0 %v3042
    %3066 = vmatmul.bf16.gmra.mxu0 %v3006
    %v3067 = vpop.f32.mrf.mxu0
    %v3068 = vadd.f32 0.0, %v3067
    %v3069 = vpop.f32.mrf.mxu0
    %v3070 = vadd.f32 0.0, %v3069
    %3071 = vmatmul.bf16.gmra.mxu0 %v3007
    %v3072 = vpop.f32.mrf.mxu0
    %v3073 = vadd.f32 0.0, %v3072
    %v3074 = vpop.f32.mrf.mxu0
    %v3075 = vadd.f32 0.0, %v3074
    %3076 = vdwg.mxu0
    %v3077 = vld [vmem:[%s2 + $0x18] sm:$0x1]
    %v3078 = vperm.slane %v3077, 0
    %v3079 = vmul.f32 %v3068, %v3078
    %v3080 = vmul.f32 %v3070, %v3078
    %v3081 = vmul.f32 %v3073, %v3078
    %v3082 = vmul.f32 %v3075, %v3078
    %v3083 = vld [vmem:[%s2 + $0x19] sm:$0x1]
    %v3084 = vperm.slane %v3083, 0
    %v3085 = vadd.f32 %v3079, %v3084
    %v3086 = vadd.f32 %v3080, %v3084
    %v3087 = vadd.f32 %v3081, %v3084
    %v3088 = vadd.f32 %v3082, %v3084
    %v3089 = vrot.slane %v2973, 7
    %v3090 = vrot.slane %v2974, 7
    %v3091 = vrot.slane %v2975, 7
    %v3092 = vrot.slane %v2976, 7
    %v3093 = vsel %vm164, %v3091, %v3092
    %v3094 = vsel %vm164, %v3090, %v3091
    %v3095 = vsel %vm164, %v3089, %v3090
    %v3096 = vsel %vm164, %v3092, %v3089
    %v3097 = vsel %vm173, %v3096, 0.0
    %v3098 = vsel %vm174, %v3095, 0.0
    %v3099 = vsel %vm175, %v3094, 0.0
    %v3100 = vsel %vm176, %v3093, 0.0
    %v3101 = vrot.slane %v2973, 1
    %v3102 = vrot.slane %v2974, 1
    %v3103 = vrot.slane %v2975, 1
    %v3104 = vrot.slane %v2976, 1
    %v3105 = vsel %vm185, %v3103, %v3104
    %v3106 = vsel %vm185, %v3102, %v3103
    %v3107 = vsel %vm185, %v3101, %v3102
    %v3108 = vsel %vm185, %v3104, %v3101
    %v3109 = vsel %vm194, %v3107, 0.0
    %v3110 = vsel %vm195, %v3106, 0.0
    %v3111 = vsel %vm196, %v3105, 0.0
    %v3112 = vsel %vm197, %v3108, 0.0
    %v3113 = vpack.c.bf16 %v3097, %v3097
    %v3114 = vpack.c.bf16 %v3098, %v3098
    %v3115 = vpack.c.bf16 %v3099, %v3099
    %v3116 = vpack.c.bf16 %v3100, %v3100
    %v3117 = vpack.c.bf16 %v3109, %v3109
    %v3118 = vpack.c.bf16 %v3110, %v3110
    %v3119 = vpack.c.bf16 %v3111, %v3111
    %v3120 = vpack.c.bf16 %v3112, %v3112
    %v3125 = vunpack.c.l.b16 %v3113
    %v3126 = vunpack.c.l.b16 %v3114
    %v3127 = vunpack.c.l.b16 %v3115
    %v3128 = vunpack.c.l.b16 %v3116
    %v3129 = vpack.c.b16 %v3126, %v3125
    %v3130 = vpack.c.b16 %v3128, %v3127
    %v3137 = vunpack.c.l.b16 %v3117
    %v3138 = vunpack.c.l.b16 %v3118
    %v3139 = vunpack.c.l.b16 %v3119
    %v3140 = vunpack.c.l.b16 %v3120
    %v3141 = vpack.c.b16 %v3138, %v3137
    %v3142 = vpack.c.b16 %v3140, %v3139
    %s3145 = scalar_lea.vmem %s1, 1920
    %v3146 = vld [vmem:[%s3145] sm:$0xf]
    %v3147 = vld [vmem:[%s3145 + $0x4] sm:$0xf]
    %v3148 = vld [vmem:[%s3145 + $0x8] sm:$0xf]
    %v3149 = vld [vmem:[%s3145 + $0xc] sm:$0xf]
    %v3150 = vld [vmem:[%s3145 + $0x10] sm:$0xf]
    %v3151 = vld [vmem:[%s3145 + $0x14] sm:$0xf]
    %v3152 = vld [vmem:[%s3145 + $0x18] sm:$0xf]
    %v3153 = vld [vmem:[%s3145 + $0x1c] sm:$0xf]
    %v3154 = vld [vmem:[%s3145 + $0x20] sm:$0xf]
    %v3155 = vld [vmem:[%s3145 + $0x24] sm:$0xf]
    %v3156 = vld [vmem:[%s3145 + $0x28] sm:$0xf]
    %v3157 = vld [vmem:[%s3145 + $0x2c] sm:$0xf]
    %v3158 = vld [vmem:[%s3145 + $0x30] sm:$0xf]
    %v3159 = vld [vmem:[%s3145 + $0x34] sm:$0xf]
    %v3160 = vld [vmem:[%s3145 + $0x38] sm:$0xf]
    %v3161 = vld [vmem:[%s3145 + $0x3c] sm:$0xf]
    %v3162 = vld [vmem:[%s3145 + $0x40] sm:$0xf]
    %v3163 = vld [vmem:[%s3145 + $0x44] sm:$0xf]
    %v3164 = vld [vmem:[%s3145 + $0x48] sm:$0xf]
    %v3165 = vld [vmem:[%s3145 + $0x4c] sm:$0xf]
    %v3166 = vld [vmem:[%s3145 + $0x50] sm:$0xf]
    %v3167 = vld [vmem:[%s3145 + $0x54] sm:$0xf]
    %v3168 = vld [vmem:[%s3145 + $0x58] sm:$0xf]
    %v3169 = vld [vmem:[%s3145 + $0x5c] sm:$0xf]
    %v3170 = vld [vmem:[%s3145 + $0x60] sm:$0xf]
    %v3171 = vld [vmem:[%s3145 + $0x64] sm:$0xf]
    %v3172 = vld [vmem:[%s3145 + $0x68] sm:$0xf]
    %v3173 = vld [vmem:[%s3145 + $0x6c] sm:$0xf]
    %v3174 = vld [vmem:[%s3145 + $0x70] sm:$0xf]
    %v3175 = vld [vmem:[%s3145 + $0x74] sm:$0xf]
    %v3176 = vld [vmem:[%s3145 + $0x78] sm:$0xf]
    %v3177 = vld [vmem:[%s3145 + $0x7c] sm:$0xf]
    %v3178 = vld [vmem:[%s3145 + $0x80] sm:$0xf]
    %v3179 = vld [vmem:[%s3145 + $0x84] sm:$0xf]
    %v3180 = vld [vmem:[%s3145 + $0x88] sm:$0xf]
    %v3181 = vld [vmem:[%s3145 + $0x8c] sm:$0xf]
    %v3182 = vld [vmem:[%s3145 + $0x90] sm:$0xf]
    %v3183 = vld [vmem:[%s3145 + $0x94] sm:$0xf]
    %v3184 = vld [vmem:[%s3145 + $0x98] sm:$0xf]
    %v3185 = vld [vmem:[%s3145 + $0x9c] sm:$0xf]
    %v3186 = vld [vmem:[%s3145 + $0xa0] sm:$0xf]
    %v3187 = vld [vmem:[%s3145 + $0xa4] sm:$0xf]
    %v3188 = vld [vmem:[%s3145 + $0xa8] sm:$0xf]
    %v3189 = vld [vmem:[%s3145 + $0xac] sm:$0xf]
    %v3190 = vld [vmem:[%s3145 + $0xb0] sm:$0xf]
    %v3191 = vld [vmem:[%s3145 + $0xb4] sm:$0xf]
    %v3192 = vld [vmem:[%s3145 + $0xb8] sm:$0xf]
    %v3193 = vld [vmem:[%s3145 + $0xbc] sm:$0xf]
    %v3242 = vunpack.c.l.b16 %v3146
    %v3243 = vunpack.c.l.b16 %v3147
    %v3244 = vunpack.c.l.b16 %v3148
    %v3245 = vunpack.c.l.b16 %v3149
    %v3246 = vunpack.c.l.b16 %v3150
    %v3247 = vunpack.c.l.b16 %v3151
    %v3248 = vunpack.c.l.b16 %v3152
    %v3249 = vunpack.c.l.b16 %v3153
    %v3250 = vunpack.c.l.b16 %v3154
    %v3251 = vunpack.c.l.b16 %v3155
    %v3252 = vunpack.c.l.b16 %v3156
    %v3253 = vunpack.c.l.b16 %v3157
    %v3254 = vunpack.c.l.b16 %v3158
    %v3255 = vunpack.c.l.b16 %v3159
    %v3256 = vunpack.c.l.b16 %v3160
    %v3257 = vunpack.c.l.b16 %v3161
    %v3258 = vunpack.c.l.b16 %v3162
    %v3259 = vunpack.c.l.b16 %v3163
    %v3260 = vunpack.c.l.b16 %v3164
    %v3261 = vunpack.c.l.b16 %v3165
    %v3262 = vunpack.c.l.b16 %v3166
    %v3263 = vunpack.c.l.b16 %v3167
    %v3264 = vunpack.c.l.b16 %v3168
    %v3265 = vunpack.c.l.b16 %v3169
    %v3266 = vunpack.c.l.b16 %v3170
    %v3267 = vunpack.c.l.b16 %v3171
    %v3268 = vunpack.c.l.b16 %v3172
    %v3269 = vunpack.c.l.b16 %v3173
    %v3270 = vunpack.c.l.b16 %v3174
    %v3271 = vunpack.c.l.b16 %v3175
    %v3272 = vunpack.c.l.b16 %v3176
    %v3273 = vunpack.c.l.b16 %v3177
    %v3274 = vunpack.c.l.b16 %v3178
    %v3275 = vunpack.c.l.b16 %v3179
    %v3276 = vunpack.c.l.b16 %v3180
    %v3277 = vunpack.c.l.b16 %v3181
    %v3278 = vunpack.c.l.b16 %v3182
    %v3279 = vunpack.c.l.b16 %v3183
    %v3280 = vunpack.c.l.b16 %v3184
    %v3281 = vunpack.c.l.b16 %v3185
    %v3282 = vunpack.c.l.b16 %v3186
    %v3283 = vunpack.c.l.b16 %v3187
    %v3284 = vunpack.c.l.b16 %v3188
    %v3285 = vunpack.c.l.b16 %v3189
    %v3286 = vunpack.c.l.b16 %v3190
    %v3287 = vunpack.c.l.b16 %v3191
    %v3288 = vunpack.c.l.b16 %v3192
    %v3289 = vunpack.c.l.b16 %v3193
    %v3290 = vpack.c.b16 %v3243, %v3242
    %v3291 = vpack.c.b16 %v3245, %v3244
    %v3292 = vpack.c.b16 %v3247, %v3246
    %v3293 = vpack.c.b16 %v3249, %v3248
    %v3294 = vpack.c.b16 %v3251, %v3250
    %v3295 = vpack.c.b16 %v3253, %v3252
    %v3296 = vpack.c.b16 %v3255, %v3254
    %v3297 = vpack.c.b16 %v3257, %v3256
    %v3298 = vpack.c.b16 %v3259, %v3258
    %v3299 = vpack.c.b16 %v3261, %v3260
    %v3300 = vpack.c.b16 %v3263, %v3262
    %v3301 = vpack.c.b16 %v3265, %v3264
    %v3302 = vpack.c.b16 %v3267, %v3266
    %v3303 = vpack.c.b16 %v3269, %v3268
    %v3304 = vpack.c.b16 %v3271, %v3270
    %v3305 = vpack.c.b16 %v3273, %v3272
    %v3306 = vpack.c.b16 %v3275, %v3274
    %v3307 = vpack.c.b16 %v3277, %v3276
    %v3308 = vpack.c.b16 %v3279, %v3278
    %v3309 = vpack.c.b16 %v3281, %v3280
    %v3310 = vpack.c.b16 %v3283, %v3282
    %v3311 = vpack.c.b16 %v3285, %v3284
    %v3312 = vpack.c.b16 %v3287, %v3286
    %v3313 = vpack.c.b16 %v3289, %v3288
    %3338 = vmatpush.bf16.msra.mxu0 %v3297
    %3339 = vmatpush.bf16.msra.mxu0 %v3296
    %3340 = vmatpush.bf16.msra.mxu0 %v3295
    %3341 = vmatpush.bf16.msra.mxu0 %v3294
    %3342 = vmatpush.bf16.msra.mxu0 %v3293
    %3343 = vmatpush.bf16.msra.mxu0 %v3292
    %3344 = vmatpush.bf16.msra.mxu0 %v3291
    %3345 = vmatpush.bf16.msra.mxu0 %v3290
    %3346 = vmatmul.bf16.gmra.mxu0 %v3129
    %v3347 = vpop.f32.mrf.mxu0
    %v3348 = vadd.f32 0.0, %v3347
    %v3349 = vpop.f32.mrf.mxu0
    %v3350 = vadd.f32 0.0, %v3349
    %3351 = vmatmul.bf16.gmra.mxu0 %v3130
    %v3352 = vpop.f32.mrf.mxu0
    %v3353 = vadd.f32 0.0, %v3352
    %v3354 = vpop.f32.mrf.mxu0
    %v3355 = vadd.f32 0.0, %v3354
    %3356 = vdwg.mxu0
    %3357 = vmatpush.bf16.msra.mxu0 %v3305
    %3358 = vmatpush.bf16.msra.mxu0 %v3304
    %3359 = vmatpush.bf16.msra.mxu0 %v3303
    %3360 = vmatpush.bf16.msra.mxu0 %v3302
    %3361 = vmatpush.bf16.msra.mxu0 %v3301
    %3362 = vmatpush.bf16.msra.mxu0 %v3300
    %3363 = vmatpush.bf16.msra.mxu0 %v3299
    %3364 = vmatpush.bf16.msra.mxu0 %v3298
    %3365 = vmatmul.bf16.gmra.mxu0 %v3006
    %v3366 = vpop.f32.mrf.mxu0
    %v3367 = vadd.f32 %v3348, %v3366
    %v3368 = vpop.f32.mrf.mxu0
    %v3369 = vadd.f32 %v3350, %v3368
    %3370 = vmatmul.bf16.gmra.mxu0 %v3007
    %v3371 = vpop.f32.mrf.mxu0
    %v3372 = vadd.f32 %v3353, %v3371
    %v3373 = vpop.f32.mrf.mxu0
    %v3374 = vadd.f32 %v3355, %v3373
    %3375 = vdwg.mxu0
    %3376 = vmatpush.bf16.msra.mxu0 %v3313
    %3377 = vmatpush.bf16.msra.mxu0 %v3312
    %3378 = vmatpush.bf16.msra.mxu0 %v3311
    %3379 = vmatpush.bf16.msra.mxu0 %v3310
    %3380 = vmatpush.bf16.msra.mxu0 %v3309
    %3381 = vmatpush.bf16.msra.mxu0 %v3308
    %3382 = vmatpush.bf16.msra.mxu0 %v3307
    %3383 = vmatpush.bf16.msra.mxu0 %v3306
    %3384 = vmatmul.bf16.gmra.mxu0 %v3141
    %v3385 = vpop.f32.mrf.mxu0
    %v3386 = vadd.f32 %v3367, %v3385
    %v3387 = vpop.f32.mrf.mxu0
    %v3388 = vadd.f32 %v3369, %v3387
    %3389 = vmatmul.bf16.gmra.mxu0 %v3142
    %v3390 = vpop.f32.mrf.mxu0
    %v3391 = vadd.f32 %v3372, %v3390
    %v3392 = vpop.f32.mrf.mxu0
    %v3393 = vadd.f32 %v3374, %v3392
    %3394 = vdwg.mxu0
    %v3395 = vld [vmem:[%s2 + $0x14] sm:$0x1]
    %v3396 = vperm.slane %v3395, 0
    %v3397 = vmul.f32 %v3386, %v3396
    %v3398 = vmul.f32 %v3388, %v3396
    %v3399 = vmul.f32 %v3391, %v3396
    %v3400 = vmul.f32 %v3393, %v3396
    %v3401 = vld [vmem:[%s2 + $0x15] sm:$0x1]
    %v3402 = vperm.slane %v3401, 0
    %v3403 = vadd.f32 %v3397, %v3402
    %v3404 = vadd.f32 %v3398, %v3402
    %v3405 = vadd.f32 %v3399, %v3402
    %v3406 = vadd.f32 %v3400, %v3402
    %v3407 = vmax.f32 %v3403, 0.0
    %v3408 = vmax.f32 %v3404, 0.0
    %v3409 = vmax.f32 %v3405, 0.0
    %v3410 = vmax.f32 %v3406, 0.0
    %v3411 = vrot.slane %v3407, 7
    %v3412 = vrot.slane %v3408, 7
    %v3413 = vrot.slane %v3409, 7
    %v3414 = vrot.slane %v3410, 7
    %v3415 = vsel %vm164, %v3413, %v3414
    %v3416 = vsel %vm164, %v3412, %v3413
    %v3417 = vsel %vm164, %v3411, %v3412
    %v3418 = vsel %vm164, %v3414, %v3411
    %v3419 = vsel %vm173, %v3418, 0.0
    %v3420 = vsel %vm174, %v3417, 0.0
    %v3421 = vsel %vm175, %v3416, 0.0
    %v3422 = vsel %vm176, %v3415, 0.0
    %v3423 = vrot.slane %v3407, 1
    %v3424 = vrot.slane %v3408, 1
    %v3425 = vrot.slane %v3409, 1
    %v3426 = vrot.slane %v3410, 1
    %v3427 = vsel %vm185, %v3425, %v3426
    %v3428 = vsel %vm185, %v3424, %v3425
    %v3429 = vsel %vm185, %v3423, %v3424
    %v3430 = vsel %vm185, %v3426, %v3423
    %v3431 = vsel %vm194, %v3429, 0.0
    %v3432 = vsel %vm195, %v3428, 0.0
    %v3433 = vsel %vm196, %v3427, 0.0
    %v3434 = vsel %vm197, %v3430, 0.0
    %v3435 = vpack.c.bf16 %v3419, %v3419
    %v3436 = vpack.c.bf16 %v3420, %v3420
    %v3437 = vpack.c.bf16 %v3421, %v3421
    %v3438 = vpack.c.bf16 %v3422, %v3422
    %v3439 = vpack.c.bf16 %v3407, %v3407
    %v3440 = vpack.c.bf16 %v3408, %v3408
    %v3441 = vpack.c.bf16 %v3409, %v3409
    %v3442 = vpack.c.bf16 %v3410, %v3410
    %v3443 = vpack.c.bf16 %v3431, %v3431
    %v3444 = vpack.c.bf16 %v3432, %v3432
    %v3445 = vpack.c.bf16 %v3433, %v3433
    %v3446 = vpack.c.bf16 %v3434, %v3434
    %v3451 = vunpack.c.l.b16 %v3435
    %v3452 = vunpack.c.l.b16 %v3436
    %v3453 = vunpack.c.l.b16 %v3437
    %v3454 = vunpack.c.l.b16 %v3438
    %v3455 = vpack.c.b16 %v3452, %v3451
    %v3456 = vpack.c.b16 %v3454, %v3453
    %v3463 = vunpack.c.l.b16 %v3439
    %v3464 = vunpack.c.l.b16 %v3440
    %v3465 = vunpack.c.l.b16 %v3441
    %v3466 = vunpack.c.l.b16 %v3442
    %v3467 = vpack.c.b16 %v3464, %v3463
    %v3468 = vpack.c.b16 %v3466, %v3465
    %v3475 = vunpack.c.l.b16 %v3443
    %v3476 = vunpack.c.l.b16 %v3444
    %v3477 = vunpack.c.l.b16 %v3445
    %v3478 = vunpack.c.l.b16 %v3446
    %v3479 = vpack.c.b16 %v3476, %v3475
    %v3480 = vpack.c.b16 %v3478, %v3477
    %s3483 = scalar_lea.vmem %s1, 2112
    %v3484 = vld [vmem:[%s3483] sm:$0xf]
    %v3485 = vld [vmem:[%s3483 + $0x4] sm:$0xf]
    %v3486 = vld [vmem:[%s3483 + $0x8] sm:$0xf]
    %v3487 = vld [vmem:[%s3483 + $0xc] sm:$0xf]
    %v3488 = vld [vmem:[%s3483 + $0x10] sm:$0xf]
    %v3489 = vld [vmem:[%s3483 + $0x14] sm:$0xf]
    %v3490 = vld [vmem:[%s3483 + $0x18] sm:$0xf]
    %v3491 = vld [vmem:[%s3483 + $0x1c] sm:$0xf]
    %v3492 = vld [vmem:[%s3483 + $0x20] sm:$0xf]
    %v3493 = vld [vmem:[%s3483 + $0x24] sm:$0xf]
    %v3494 = vld [vmem:[%s3483 + $0x28] sm:$0xf]
    %v3495 = vld [vmem:[%s3483 + $0x2c] sm:$0xf]
    %v3496 = vld [vmem:[%s3483 + $0x30] sm:$0xf]
    %v3497 = vld [vmem:[%s3483 + $0x34] sm:$0xf]
    %v3498 = vld [vmem:[%s3483 + $0x38] sm:$0xf]
    %v3499 = vld [vmem:[%s3483 + $0x3c] sm:$0xf]
    %v3500 = vld [vmem:[%s3483 + $0x40] sm:$0xf]
    %v3501 = vld [vmem:[%s3483 + $0x44] sm:$0xf]
    %v3502 = vld [vmem:[%s3483 + $0x48] sm:$0xf]
    %v3503 = vld [vmem:[%s3483 + $0x4c] sm:$0xf]
    %v3504 = vld [vmem:[%s3483 + $0x50] sm:$0xf]
    %v3505 = vld [vmem:[%s3483 + $0x54] sm:$0xf]
    %v3506 = vld [vmem:[%s3483 + $0x58] sm:$0xf]
    %v3507 = vld [vmem:[%s3483 + $0x5c] sm:$0xf]
    %v3508 = vld [vmem:[%s3483 + $0x60] sm:$0xf]
    %v3509 = vld [vmem:[%s3483 + $0x64] sm:$0xf]
    %v3510 = vld [vmem:[%s3483 + $0x68] sm:$0xf]
    %v3511 = vld [vmem:[%s3483 + $0x6c] sm:$0xf]
    %v3512 = vld [vmem:[%s3483 + $0x70] sm:$0xf]
    %v3513 = vld [vmem:[%s3483 + $0x74] sm:$0xf]
    %v3514 = vld [vmem:[%s3483 + $0x78] sm:$0xf]
    %v3515 = vld [vmem:[%s3483 + $0x7c] sm:$0xf]
    %v3516 = vld [vmem:[%s3483 + $0x80] sm:$0xf]
    %v3517 = vld [vmem:[%s3483 + $0x84] sm:$0xf]
    %v3518 = vld [vmem:[%s3483 + $0x88] sm:$0xf]
    %v3519 = vld [vmem:[%s3483 + $0x8c] sm:$0xf]
    %v3520 = vld [vmem:[%s3483 + $0x90] sm:$0xf]
    %v3521 = vld [vmem:[%s3483 + $0x94] sm:$0xf]
    %v3522 = vld [vmem:[%s3483 + $0x98] sm:$0xf]
    %v3523 = vld [vmem:[%s3483 + $0x9c] sm:$0xf]
    %v3524 = vld [vmem:[%s3483 + $0xa0] sm:$0xf]
    %v3525 = vld [vmem:[%s3483 + $0xa4] sm:$0xf]
    %v3526 = vld [vmem:[%s3483 + $0xa8] sm:$0xf]
    %v3527 = vld [vmem:[%s3483 + $0xac] sm:$0xf]
    %v3528 = vld [vmem:[%s3483 + $0xb0] sm:$0xf]
    %v3529 = vld [vmem:[%s3483 + $0xb4] sm:$0xf]
    %v3530 = vld [vmem:[%s3483 + $0xb8] sm:$0xf]
    %v3531 = vld [vmem:[%s3483 + $0xbc] sm:$0xf]
    %v3580 = vunpack.c.l.b16 %v3484
    %v3581 = vunpack.c.l.b16 %v3485
    %v3582 = vunpack.c.l.b16 %v3486
    %v3583 = vunpack.c.l.b16 %v3487
    %v3584 = vunpack.c.l.b16 %v3488
    %v3585 = vunpack.c.l.b16 %v3489
    %v3586 = vunpack.c.l.b16 %v3490
    %v3587 = vunpack.c.l.b16 %v3491
    %v3588 = vunpack.c.l.b16 %v3492
    %v3589 = vunpack.c.l.b16 %v3493
    %v3590 = vunpack.c.l.b16 %v3494
    %v3591 = vunpack.c.l.b16 %v3495
    %v3592 = vunpack.c.l.b16 %v3496
    %v3593 = vunpack.c.l.b16 %v3497
    %v3594 = vunpack.c.l.b16 %v3498
    %v3595 = vunpack.c.l.b16 %v3499
    %v3596 = vunpack.c.l.b16 %v3500
    %v3597 = vunpack.c.l.b16 %v3501
    %v3598 = vunpack.c.l.b16 %v3502
    %v3599 = vunpack.c.l.b16 %v3503
    %v3600 = vunpack.c.l.b16 %v3504
    %v3601 = vunpack.c.l.b16 %v3505
    %v3602 = vunpack.c.l.b16 %v3506
    %v3603 = vunpack.c.l.b16 %v3507
    %v3604 = vunpack.c.l.b16 %v3508
    %v3605 = vunpack.c.l.b16 %v3509
    %v3606 = vunpack.c.l.b16 %v3510
    %v3607 = vunpack.c.l.b16 %v3511
    %v3608 = vunpack.c.l.b16 %v3512
    %v3609 = vunpack.c.l.b16 %v3513
    %v3610 = vunpack.c.l.b16 %v3514
    %v3611 = vunpack.c.l.b16 %v3515
    %v3612 = vunpack.c.l.b16 %v3516
    %v3613 = vunpack.c.l.b16 %v3517
    %v3614 = vunpack.c.l.b16 %v3518
    %v3615 = vunpack.c.l.b16 %v3519
    %v3616 = vunpack.c.l.b16 %v3520
    %v3617 = vunpack.c.l.b16 %v3521
    %v3618 = vunpack.c.l.b16 %v3522
    %v3619 = vunpack.c.l.b16 %v3523
    %v3620 = vunpack.c.l.b16 %v3524
    %v3621 = vunpack.c.l.b16 %v3525
    %v3622 = vunpack.c.l.b16 %v3526
    %v3623 = vunpack.c.l.b16 %v3527
    %v3624 = vunpack.c.l.b16 %v3528
    %v3625 = vunpack.c.l.b16 %v3529
    %v3626 = vunpack.c.l.b16 %v3530
    %v3627 = vunpack.c.l.b16 %v3531
    %v3628 = vpack.c.b16 %v3581, %v3580
    %v3629 = vpack.c.b16 %v3583, %v3582
    %v3630 = vpack.c.b16 %v3585, %v3584
    %v3631 = vpack.c.b16 %v3587, %v3586
    %v3632 = vpack.c.b16 %v3589, %v3588
    %v3633 = vpack.c.b16 %v3591, %v3590
    %v3634 = vpack.c.b16 %v3593, %v3592
    %v3635 = vpack.c.b16 %v3595, %v3594
    %v3636 = vpack.c.b16 %v3597, %v3596
    %v3637 = vpack.c.b16 %v3599, %v3598
    %v3638 = vpack.c.b16 %v3601, %v3600
    %v3639 = vpack.c.b16 %v3603, %v3602
    %v3640 = vpack.c.b16 %v3605, %v3604
    %v3641 = vpack.c.b16 %v3607, %v3606
    %v3642 = vpack.c.b16 %v3609, %v3608
    %v3643 = vpack.c.b16 %v3611, %v3610
    %v3644 = vpack.c.b16 %v3613, %v3612
    %v3645 = vpack.c.b16 %v3615, %v3614
    %v3646 = vpack.c.b16 %v3617, %v3616
    %v3647 = vpack.c.b16 %v3619, %v3618
    %v3648 = vpack.c.b16 %v3621, %v3620
    %v3649 = vpack.c.b16 %v3623, %v3622
    %v3650 = vpack.c.b16 %v3625, %v3624
    %v3651 = vpack.c.b16 %v3627, %v3626
    %3676 = vmatpush.bf16.msra.mxu0 %v3635
    %3677 = vmatpush.bf16.msra.mxu0 %v3634
    %3678 = vmatpush.bf16.msra.mxu0 %v3633
    %3679 = vmatpush.bf16.msra.mxu0 %v3632
    %3680 = vmatpush.bf16.msra.mxu0 %v3631
    %3681 = vmatpush.bf16.msra.mxu0 %v3630
    %3682 = vmatpush.bf16.msra.mxu0 %v3629
    %3683 = vmatpush.bf16.msra.mxu0 %v3628
    %3684 = vmatmul.bf16.gmra.mxu0 %v3455
    %v3685 = vpop.f32.mrf.mxu0
    %v3686 = vadd.f32 0.0, %v3685
    %v3687 = vpop.f32.mrf.mxu0
    %v3688 = vadd.f32 0.0, %v3687
    %3689 = vmatmul.bf16.gmra.mxu0 %v3456
    %v3690 = vpop.f32.mrf.mxu0
    %v3691 = vadd.f32 0.0, %v3690
    %v3692 = vpop.f32.mrf.mxu0
    %v3693 = vadd.f32 0.0, %v3692
    %3694 = vdwg.mxu0
    %3695 = vmatpush.bf16.msra.mxu0 %v3643
    %3696 = vmatpush.bf16.msra.mxu0 %v3642
    %3697 = vmatpush.bf16.msra.mxu0 %v3641
    %3698 = vmatpush.bf16.msra.mxu0 %v3640
    %3699 = vmatpush.bf16.msra.mxu0 %v3639
    %3700 = vmatpush.bf16.msra.mxu0 %v3638
    %3701 = vmatpush.bf16.msra.mxu0 %v3637
    %3702 = vmatpush.bf16.msra.mxu0 %v3636
    %3703 = vmatmul.bf16.gmra.mxu0 %v3467
    %v3704 = vpop.f32.mrf.mxu0
    %v3705 = vadd.f32 %v3686, %v3704
    %v3706 = vpop.f32.mrf.mxu0
    %v3707 = vadd.f32 %v3688, %v3706
    %3708 = vmatmul.bf16.gmra.mxu0 %v3468
    %v3709 = vpop.f32.mrf.mxu0
    %v3710 = vadd.f32 %v3691, %v3709
    %v3711 = vpop.f32.mrf.mxu0
    %v3712 = vadd.f32 %v3693, %v3711
    %3713 = vdwg.mxu0
    %3714 = vmatpush.bf16.msra.mxu0 %v3651
    %3715 = vmatpush.bf16.msra.mxu0 %v3650
    %3716 = vmatpush.bf16.msra.mxu0 %v3649
    %3717 = vmatpush.bf16.msra.mxu0 %v3648
    %3718 = vmatpush.bf16.msra.mxu0 %v3647
    %3719 = vmatpush.bf16.msra.mxu0 %v3646
    %3720 = vmatpush.bf16.msra.mxu0 %v3645
    %3721 = vmatpush.bf16.msra.mxu0 %v3644
    %3722 = vmatmul.bf16.gmra.mxu0 %v3479
    %v3723 = vpop.f32.mrf.mxu0
    %v3724 = vadd.f32 %v3705, %v3723
    %v3725 = vpop.f32.mrf.mxu0
    %v3726 = vadd.f32 %v3707, %v3725
    %3727 = vmatmul.bf16.gmra.mxu0 %v3480
    %v3728 = vpop.f32.mrf.mxu0
    %v3729 = vadd.f32 %v3710, %v3728
    %v3730 = vpop.f32.mrf.mxu0
    %v3731 = vadd.f32 %v3712, %v3730
    %3732 = vdwg.mxu0
    %v3733 = vld [vmem:[%s2 + $0x16] sm:$0x1]
    %v3734 = vperm.slane %v3733, 0
    %v3735 = vmul.f32 %v3724, %v3734
    %v3736 = vmul.f32 %v3726, %v3734
    %v3737 = vmul.f32 %v3729, %v3734
    %v3738 = vmul.f32 %v3731, %v3734
    %v3739 = vld [vmem:[%s2 + $0x17] sm:$0x1]
    %v3740 = vperm.slane %v3739, 0
    %v3741 = vadd.f32 %v3735, %v3740
    %v3742 = vadd.f32 %v3736, %v3740
    %v3743 = vadd.f32 %v3737, %v3740
    %v3744 = vadd.f32 %v3738, %v3740
    %v3745 = vadd.f32 %v3741, %v3085
    %v3746 = vadd.f32 %v3742, %v3086
    %v3747 = vadd.f32 %v3743, %v3087
    %v3748 = vadd.f32 %v3744, %v3088
    %v3749 = vmax.f32 %v3745, 0.0
    %v3750 = vmax.f32 %v3746, 0.0
    %v3751 = vmax.f32 %v3747, 0.0
    %v3752 = vmax.f32 %v3748, 0.0
    %v3753 = vrot.slane %v3749, 7
    %v3754 = vrot.slane %v3750, 7
    %v3755 = vrot.slane %v3751, 7
    %v3756 = vrot.slane %v3752, 7
    %v3757 = vsel %vm164, %v3755, %v3756
    %v3758 = vsel %vm164, %v3754, %v3755
    %v3759 = vsel %vm164, %v3753, %v3754
    %v3760 = vsel %vm164, %v3756, %v3753
    %v3761 = vsel %vm173, %v3760, 0.0
    %v3762 = vsel %vm174, %v3759, 0.0
    %v3763 = vsel %vm175, %v3758, 0.0
    %v3764 = vsel %vm176, %v3757, 0.0
    %v3765 = vrot.slane %v3749, 1
    %v3766 = vrot.slane %v3750, 1
    %v3767 = vrot.slane %v3751, 1
    %v3768 = vrot.slane %v3752, 1
    %v3769 = vsel %vm185, %v3767, %v3768
    %v3770 = vsel %vm185, %v3766, %v3767
    %v3771 = vsel %vm185, %v3765, %v3766
    %v3772 = vsel %vm185, %v3768, %v3765
    %v3773 = vsel %vm194, %v3771, 0.0
    %v3774 = vsel %vm195, %v3770, 0.0
    %v3775 = vsel %vm196, %v3769, 0.0
    %v3776 = vsel %vm197, %v3772, 0.0
    %v3777 = vpack.c.bf16 %v3761, %v3761
    %v3778 = vpack.c.bf16 %v3762, %v3762
    %v3779 = vpack.c.bf16 %v3763, %v3763
    %v3780 = vpack.c.bf16 %v3764, %v3764
    %v3781 = vpack.c.bf16 %v3749, %v3749
    %v3782 = vpack.c.bf16 %v3750, %v3750
    %v3783 = vpack.c.bf16 %v3751, %v3751
    %v3784 = vpack.c.bf16 %v3752, %v3752
    %v3785 = vpack.c.bf16 %v3773, %v3773
    %v3786 = vpack.c.bf16 %v3774, %v3774
    %v3787 = vpack.c.bf16 %v3775, %v3775
    %v3788 = vpack.c.bf16 %v3776, %v3776
    %v3793 = vunpack.c.l.b16 %v3777
    %v3794 = vunpack.c.l.b16 %v3778
    %v3795 = vunpack.c.l.b16 %v3779
    %v3796 = vunpack.c.l.b16 %v3780
    %v3797 = vpack.c.b16 %v3794, %v3793
    %v3798 = vpack.c.b16 %v3796, %v3795
    %v3805 = vunpack.c.l.b16 %v3781
    %v3806 = vunpack.c.l.b16 %v3782
    %v3807 = vunpack.c.l.b16 %v3783
    %v3808 = vunpack.c.l.b16 %v3784
    %v3809 = vpack.c.b16 %v3806, %v3805
    %v3810 = vpack.c.b16 %v3808, %v3807
    %v3817 = vunpack.c.l.b16 %v3785
    %v3818 = vunpack.c.l.b16 %v3786
    %v3819 = vunpack.c.l.b16 %v3787
    %v3820 = vunpack.c.l.b16 %v3788
    %v3821 = vpack.c.b16 %v3818, %v3817
    %v3822 = vpack.c.b16 %v3820, %v3819
    %s3825 = scalar_lea.vmem %s1, 2496
    %v3826 = vld [vmem:[%s3825] sm:$0xf]
    %v3827 = vld [vmem:[%s3825 + $0x4] sm:$0xf]
    %v3828 = vld [vmem:[%s3825 + $0x8] sm:$0xf]
    %v3829 = vld [vmem:[%s3825 + $0xc] sm:$0xf]
    %v3830 = vld [vmem:[%s3825 + $0x10] sm:$0xf]
    %v3831 = vld [vmem:[%s3825 + $0x14] sm:$0xf]
    %v3832 = vld [vmem:[%s3825 + $0x18] sm:$0xf]
    %v3833 = vld [vmem:[%s3825 + $0x1c] sm:$0xf]
    %v3834 = vld [vmem:[%s3825 + $0x20] sm:$0xf]
    %v3835 = vld [vmem:[%s3825 + $0x24] sm:$0xf]
    %v3836 = vld [vmem:[%s3825 + $0x28] sm:$0xf]
    %v3837 = vld [vmem:[%s3825 + $0x2c] sm:$0xf]
    %v3838 = vld [vmem:[%s3825 + $0x30] sm:$0xf]
    %v3839 = vld [vmem:[%s3825 + $0x34] sm:$0xf]
    %v3840 = vld [vmem:[%s3825 + $0x38] sm:$0xf]
    %v3841 = vld [vmem:[%s3825 + $0x3c] sm:$0xf]
    %v3842 = vld [vmem:[%s3825 + $0x40] sm:$0xf]
    %v3843 = vld [vmem:[%s3825 + $0x44] sm:$0xf]
    %v3844 = vld [vmem:[%s3825 + $0x48] sm:$0xf]
    %v3845 = vld [vmem:[%s3825 + $0x4c] sm:$0xf]
    %v3846 = vld [vmem:[%s3825 + $0x50] sm:$0xf]
    %v3847 = vld [vmem:[%s3825 + $0x54] sm:$0xf]
    %v3848 = vld [vmem:[%s3825 + $0x58] sm:$0xf]
    %v3849 = vld [vmem:[%s3825 + $0x5c] sm:$0xf]
    %v3850 = vld [vmem:[%s3825 + $0x60] sm:$0xf]
    %v3851 = vld [vmem:[%s3825 + $0x64] sm:$0xf]
    %v3852 = vld [vmem:[%s3825 + $0x68] sm:$0xf]
    %v3853 = vld [vmem:[%s3825 + $0x6c] sm:$0xf]
    %v3854 = vld [vmem:[%s3825 + $0x70] sm:$0xf]
    %v3855 = vld [vmem:[%s3825 + $0x74] sm:$0xf]
    %v3856 = vld [vmem:[%s3825 + $0x78] sm:$0xf]
    %v3857 = vld [vmem:[%s3825 + $0x7c] sm:$0xf]
    %v3858 = vld [vmem:[%s3825 + $0x80] sm:$0xf]
    %v3859 = vld [vmem:[%s3825 + $0x84] sm:$0xf]
    %v3860 = vld [vmem:[%s3825 + $0x88] sm:$0xf]
    %v3861 = vld [vmem:[%s3825 + $0x8c] sm:$0xf]
    %v3862 = vld [vmem:[%s3825 + $0x90] sm:$0xf]
    %v3863 = vld [vmem:[%s3825 + $0x94] sm:$0xf]
    %v3864 = vld [vmem:[%s3825 + $0x98] sm:$0xf]
    %v3865 = vld [vmem:[%s3825 + $0x9c] sm:$0xf]
    %v3866 = vld [vmem:[%s3825 + $0xa0] sm:$0xf]
    %v3867 = vld [vmem:[%s3825 + $0xa4] sm:$0xf]
    %v3868 = vld [vmem:[%s3825 + $0xa8] sm:$0xf]
    %v3869 = vld [vmem:[%s3825 + $0xac] sm:$0xf]
    %v3870 = vld [vmem:[%s3825 + $0xb0] sm:$0xf]
    %v3871 = vld [vmem:[%s3825 + $0xb4] sm:$0xf]
    %v3872 = vld [vmem:[%s3825 + $0xb8] sm:$0xf]
    %v3873 = vld [vmem:[%s3825 + $0xbc] sm:$0xf]
    %v3922 = vunpack.c.l.b16 %v3826
    %v3923 = vunpack.c.l.b16 %v3827
    %v3924 = vunpack.c.l.b16 %v3828
    %v3925 = vunpack.c.l.b16 %v3829
    %v3926 = vunpack.c.l.b16 %v3830
    %v3927 = vunpack.c.l.b16 %v3831
    %v3928 = vunpack.c.l.b16 %v3832
    %v3929 = vunpack.c.l.b16 %v3833
    %v3930 = vunpack.c.l.b16 %v3834
    %v3931 = vunpack.c.l.b16 %v3835
    %v3932 = vunpack.c.l.b16 %v3836
    %v3933 = vunpack.c.l.b16 %v3837
    %v3934 = vunpack.c.l.b16 %v3838
    %v3935 = vunpack.c.l.b16 %v3839
    %v3936 = vunpack.c.l.b16 %v3840
    %v3937 = vunpack.c.l.b16 %v3841
    %v3938 = vunpack.c.l.b16 %v3842
    %v3939 = vunpack.c.l.b16 %v3843
    %v3940 = vunpack.c.l.b16 %v3844
    %v3941 = vunpack.c.l.b16 %v3845
    %v3942 = vunpack.c.l.b16 %v3846
    %v3943 = vunpack.c.l.b16 %v3847
    %v3944 = vunpack.c.l.b16 %v3848
    %v3945 = vunpack.c.l.b16 %v3849
    %v3946 = vunpack.c.l.b16 %v3850
    %v3947 = vunpack.c.l.b16 %v3851
    %v3948 = vunpack.c.l.b16 %v3852
    %v3949 = vunpack.c.l.b16 %v3853
    %v3950 = vunpack.c.l.b16 %v3854
    %v3951 = vunpack.c.l.b16 %v3855
    %v3952 = vunpack.c.l.b16 %v3856
    %v3953 = vunpack.c.l.b16 %v3857
    %v3954 = vunpack.c.l.b16 %v3858
    %v3955 = vunpack.c.l.b16 %v3859
    %v3956 = vunpack.c.l.b16 %v3860
    %v3957 = vunpack.c.l.b16 %v3861
    %v3958 = vunpack.c.l.b16 %v3862
    %v3959 = vunpack.c.l.b16 %v3863
    %v3960 = vunpack.c.l.b16 %v3864
    %v3961 = vunpack.c.l.b16 %v3865
    %v3962 = vunpack.c.l.b16 %v3866
    %v3963 = vunpack.c.l.b16 %v3867
    %v3964 = vunpack.c.l.b16 %v3868
    %v3965 = vunpack.c.l.b16 %v3869
    %v3966 = vunpack.c.l.b16 %v3870
    %v3967 = vunpack.c.l.b16 %v3871
    %v3968 = vunpack.c.l.b16 %v3872
    %v3969 = vunpack.c.l.b16 %v3873
    %v3970 = vpack.c.b16 %v3923, %v3922
    %v3971 = vpack.c.b16 %v3925, %v3924
    %v3972 = vpack.c.b16 %v3927, %v3926
    %v3973 = vpack.c.b16 %v3929, %v3928
    %v3974 = vpack.c.b16 %v3931, %v3930
    %v3975 = vpack.c.b16 %v3933, %v3932
    %v3976 = vpack.c.b16 %v3935, %v3934
    %v3977 = vpack.c.b16 %v3937, %v3936
    %v3978 = vpack.c.b16 %v3939, %v3938
    %v3979 = vpack.c.b16 %v3941, %v3940
    %v3980 = vpack.c.b16 %v3943, %v3942
    %v3981 = vpack.c.b16 %v3945, %v3944
    %v3982 = vpack.c.b16 %v3947, %v3946
    %v3983 = vpack.c.b16 %v3949, %v3948
    %v3984 = vpack.c.b16 %v3951, %v3950
    %v3985 = vpack.c.b16 %v3953, %v3952
    %v3986 = vpack.c.b16 %v3955, %v3954
    %v3987 = vpack.c.b16 %v3957, %v3956
    %v3988 = vpack.c.b16 %v3959, %v3958
    %v3989 = vpack.c.b16 %v3961, %v3960
    %v3990 = vpack.c.b16 %v3963, %v3962
    %v3991 = vpack.c.b16 %v3965, %v3964
    %v3992 = vpack.c.b16 %v3967, %v3966
    %v3993 = vpack.c.b16 %v3969, %v3968
    %4018 = vmatpush.bf16.msra.mxu0 %v3977
    %4019 = vmatpush.bf16.msra.mxu0 %v3976
    %4020 = vmatpush.bf16.msra.mxu0 %v3975
    %4021 = vmatpush.bf16.msra.mxu0 %v3974
    %4022 = vmatpush.bf16.msra.mxu0 %v3973
    %4023 = vmatpush.bf16.msra.mxu0 %v3972
    %4024 = vmatpush.bf16.msra.mxu0 %v3971
    %4025 = vmatpush.bf16.msra.mxu0 %v3970
    %4026 = vmatmul.bf16.gmra.mxu0 %v3797
    %v4027 = vpop.f32.mrf.mxu0
    %v4028 = vadd.f32 0.0, %v4027
    %v4029 = vpop.f32.mrf.mxu0
    %v4030 = vadd.f32 0.0, %v4029
    %4031 = vmatmul.bf16.gmra.mxu0 %v3798
    %v4032 = vpop.f32.mrf.mxu0
    %v4033 = vadd.f32 0.0, %v4032
    %v4034 = vpop.f32.mrf.mxu0
    %v4035 = vadd.f32 0.0, %v4034
    %4036 = vdwg.mxu0
    %4037 = vmatpush.bf16.msra.mxu0 %v3985
    %4038 = vmatpush.bf16.msra.mxu0 %v3984
    %4039 = vmatpush.bf16.msra.mxu0 %v3983
    %4040 = vmatpush.bf16.msra.mxu0 %v3982
    %4041 = vmatpush.bf16.msra.mxu0 %v3981
    %4042 = vmatpush.bf16.msra.mxu0 %v3980
    %4043 = vmatpush.bf16.msra.mxu0 %v3979
    %4044 = vmatpush.bf16.msra.mxu0 %v3978
    %4045 = vmatmul.bf16.gmra.mxu0 %v3809
    %v4046 = vpop.f32.mrf.mxu0
    %v4047 = vadd.f32 %v4028, %v4046
    %v4048 = vpop.f32.mrf.mxu0
    %v4049 = vadd.f32 %v4030, %v4048
    %4050 = vmatmul.bf16.gmra.mxu0 %v3810
    %v4051 = vpop.f32.mrf.mxu0
    %v4052 = vadd.f32 %v4033, %v4051
    %v4053 = vpop.f32.mrf.mxu0
    %v4054 = vadd.f32 %v4035, %v4053
    %4055 = vdwg.mxu0
    %4056 = vmatpush.bf16.msra.mxu0 %v3993
    %4057 = vmatpush.bf16.msra.mxu0 %v3992
    %4058 = vmatpush.bf16.msra.mxu0 %v3991
    %4059 = vmatpush.bf16.msra.mxu0 %v3990
    %4060 = vmatpush.bf16.msra.mxu0 %v3989
    %4061 = vmatpush.bf16.msra.mxu0 %v3988
    %4062 = vmatpush.bf16.msra.mxu0 %v3987
    %4063 = vmatpush.bf16.msra.mxu0 %v3986
    %4064 = vmatmul.bf16.gmra.mxu0 %v3821
    %v4065 = vpop.f32.mrf.mxu0
    %v4066 = vadd.f32 %v4047, %v4065
    %v4067 = vpop.f32.mrf.mxu0
    %v4068 = vadd.f32 %v4049, %v4067
    %4069 = vmatmul.bf16.gmra.mxu0 %v3822
    %v4070 = vpop.f32.mrf.mxu0
    %v4071 = vadd.f32 %v4052, %v4070
    %v4072 = vpop.f32.mrf.mxu0
    %v4073 = vadd.f32 %v4054, %v4072
    %4074 = vdwg.mxu0
    %v4075 = vld [vmem:[%s2 + $0x1a] sm:$0x1]
    %v4076 = vperm.slane %v4075, 0
    %v4077 = vmul.f32 %v4066, %v4076
    %v4078 = vmul.f32 %v4068, %v4076
    %v4079 = vmul.f32 %v4071, %v4076
    %v4080 = vmul.f32 %v4073, %v4076
    %v4081 = vld [vmem:[%s2 + $0x1b] sm:$0x1]
    %v4082 = vperm.slane %v4081, 0
    %v4083 = vadd.f32 %v4077, %v4082
    %v4084 = vadd.f32 %v4078, %v4082
    %v4085 = vadd.f32 %v4079, %v4082
    %v4086 = vadd.f32 %v4080, %v4082
    %v4087 = vmax.f32 %v4083, 0.0
    %v4088 = vmax.f32 %v4084, 0.0
    %v4089 = vmax.f32 %v4085, 0.0
    %v4090 = vmax.f32 %v4086, 0.0
    %v4091 = vrot.slane %v4087, 7
    %v4092 = vrot.slane %v4088, 7
    %v4093 = vrot.slane %v4089, 7
    %v4094 = vrot.slane %v4090, 7
    %v4095 = vsel %vm164, %v4093, %v4094
    %v4096 = vsel %vm164, %v4092, %v4093
    %v4097 = vsel %vm164, %v4091, %v4092
    %v4098 = vsel %vm164, %v4094, %v4091
    %v4099 = vsel %vm173, %v4098, 0.0
    %v4100 = vsel %vm174, %v4097, 0.0
    %v4101 = vsel %vm175, %v4096, 0.0
    %v4102 = vsel %vm176, %v4095, 0.0
    %v4103 = vrot.slane %v4087, 1
    %v4104 = vrot.slane %v4088, 1
    %v4105 = vrot.slane %v4089, 1
    %v4106 = vrot.slane %v4090, 1
    %v4107 = vsel %vm185, %v4105, %v4106
    %v4108 = vsel %vm185, %v4104, %v4105
    %v4109 = vsel %vm185, %v4103, %v4104
    %v4110 = vsel %vm185, %v4106, %v4103
    %v4111 = vsel %vm194, %v4109, 0.0
    %v4112 = vsel %vm195, %v4108, 0.0
    %v4113 = vsel %vm196, %v4107, 0.0
    %v4114 = vsel %vm197, %v4110, 0.0
    %v4115 = vpack.c.bf16 %v4099, %v4099
    %v4116 = vpack.c.bf16 %v4100, %v4100
    %v4117 = vpack.c.bf16 %v4101, %v4101
    %v4118 = vpack.c.bf16 %v4102, %v4102
    %v4119 = vpack.c.bf16 %v4087, %v4087
    %v4120 = vpack.c.bf16 %v4088, %v4088
    %v4121 = vpack.c.bf16 %v4089, %v4089
    %v4122 = vpack.c.bf16 %v4090, %v4090
    %v4123 = vpack.c.bf16 %v4111, %v4111
    %v4124 = vpack.c.bf16 %v4112, %v4112
    %v4125 = vpack.c.bf16 %v4113, %v4113
    %v4126 = vpack.c.bf16 %v4114, %v4114
    %v4131 = vunpack.c.l.b16 %v4115
    %v4132 = vunpack.c.l.b16 %v4116
    %v4133 = vunpack.c.l.b16 %v4117
    %v4134 = vunpack.c.l.b16 %v4118
    %v4135 = vpack.c.b16 %v4132, %v4131
    %v4136 = vpack.c.b16 %v4134, %v4133
    %v4143 = vunpack.c.l.b16 %v4119
    %v4144 = vunpack.c.l.b16 %v4120
    %v4145 = vunpack.c.l.b16 %v4121
    %v4146 = vunpack.c.l.b16 %v4122
    %v4147 = vpack.c.b16 %v4144, %v4143
    %v4148 = vpack.c.b16 %v4146, %v4145
    %v4155 = vunpack.c.l.b16 %v4123
    %v4156 = vunpack.c.l.b16 %v4124
    %v4157 = vunpack.c.l.b16 %v4125
    %v4158 = vunpack.c.l.b16 %v4126
    %v4159 = vpack.c.b16 %v4156, %v4155
    %v4160 = vpack.c.b16 %v4158, %v4157
    %s4163 = scalar_lea.vmem %s1, 2688
    %v4164 = vld [vmem:[%s4163] sm:$0xf]
    %v4165 = vld [vmem:[%s4163 + $0x4] sm:$0xf]
    %v4166 = vld [vmem:[%s4163 + $0x8] sm:$0xf]
    %v4167 = vld [vmem:[%s4163 + $0xc] sm:$0xf]
    %v4168 = vld [vmem:[%s4163 + $0x10] sm:$0xf]
    %v4169 = vld [vmem:[%s4163 + $0x14] sm:$0xf]
    %v4170 = vld [vmem:[%s4163 + $0x18] sm:$0xf]
    %v4171 = vld [vmem:[%s4163 + $0x1c] sm:$0xf]
    %v4172 = vld [vmem:[%s4163 + $0x20] sm:$0xf]
    %v4173 = vld [vmem:[%s4163 + $0x24] sm:$0xf]
    %v4174 = vld [vmem:[%s4163 + $0x28] sm:$0xf]
    %v4175 = vld [vmem:[%s4163 + $0x2c] sm:$0xf]
    %v4176 = vld [vmem:[%s4163 + $0x30] sm:$0xf]
    %v4177 = vld [vmem:[%s4163 + $0x34] sm:$0xf]
    %v4178 = vld [vmem:[%s4163 + $0x38] sm:$0xf]
    %v4179 = vld [vmem:[%s4163 + $0x3c] sm:$0xf]
    %v4180 = vld [vmem:[%s4163 + $0x40] sm:$0xf]
    %v4181 = vld [vmem:[%s4163 + $0x44] sm:$0xf]
    %v4182 = vld [vmem:[%s4163 + $0x48] sm:$0xf]
    %v4183 = vld [vmem:[%s4163 + $0x4c] sm:$0xf]
    %v4184 = vld [vmem:[%s4163 + $0x50] sm:$0xf]
    %v4185 = vld [vmem:[%s4163 + $0x54] sm:$0xf]
    %v4186 = vld [vmem:[%s4163 + $0x58] sm:$0xf]
    %v4187 = vld [vmem:[%s4163 + $0x5c] sm:$0xf]
    %v4188 = vld [vmem:[%s4163 + $0x60] sm:$0xf]
    %v4189 = vld [vmem:[%s4163 + $0x64] sm:$0xf]
    %v4190 = vld [vmem:[%s4163 + $0x68] sm:$0xf]
    %v4191 = vld [vmem:[%s4163 + $0x6c] sm:$0xf]
    %v4192 = vld [vmem:[%s4163 + $0x70] sm:$0xf]
    %v4193 = vld [vmem:[%s4163 + $0x74] sm:$0xf]
    %v4194 = vld [vmem:[%s4163 + $0x78] sm:$0xf]
    %v4195 = vld [vmem:[%s4163 + $0x7c] sm:$0xf]
    %v4196 = vld [vmem:[%s4163 + $0x80] sm:$0xf]
    %v4197 = vld [vmem:[%s4163 + $0x84] sm:$0xf]
    %v4198 = vld [vmem:[%s4163 + $0x88] sm:$0xf]
    %v4199 = vld [vmem:[%s4163 + $0x8c] sm:$0xf]
    %v4200 = vld [vmem:[%s4163 + $0x90] sm:$0xf]
    %v4201 = vld [vmem:[%s4163 + $0x94] sm:$0xf]
    %v4202 = vld [vmem:[%s4163 + $0x98] sm:$0xf]
    %v4203 = vld [vmem:[%s4163 + $0x9c] sm:$0xf]
    %v4204 = vld [vmem:[%s4163 + $0xa0] sm:$0xf]
    %v4205 = vld [vmem:[%s4163 + $0xa4] sm:$0xf]
    %v4206 = vld [vmem:[%s4163 + $0xa8] sm:$0xf]
    %v4207 = vld [vmem:[%s4163 + $0xac] sm:$0xf]
    %v4208 = vld [vmem:[%s4163 + $0xb0] sm:$0xf]
    %v4209 = vld [vmem:[%s4163 + $0xb4] sm:$0xf]
    %v4210 = vld [vmem:[%s4163 + $0xb8] sm:$0xf]
    %v4211 = vld [vmem:[%s4163 + $0xbc] sm:$0xf]
    %v4260 = vunpack.c.l.b16 %v4164
    %v4261 = vunpack.c.l.b16 %v4165
    %v4262 = vunpack.c.l.b16 %v4166
    %v4263 = vunpack.c.l.b16 %v4167
    %v4264 = vunpack.c.l.b16 %v4168
    %v4265 = vunpack.c.l.b16 %v4169
    %v4266 = vunpack.c.l.b16 %v4170
    %v4267 = vunpack.c.l.b16 %v4171
    %v4268 = vunpack.c.l.b16 %v4172
    %v4269 = vunpack.c.l.b16 %v4173
    %v4270 = vunpack.c.l.b16 %v4174
    %v4271 = vunpack.c.l.b16 %v4175
    %v4272 = vunpack.c.l.b16 %v4176
    %v4273 = vunpack.c.l.b16 %v4177
    %v4274 = vunpack.c.l.b16 %v4178
    %v4275 = vunpack.c.l.b16 %v4179
    %v4276 = vunpack.c.l.b16 %v4180
    %v4277 = vunpack.c.l.b16 %v4181
    %v4278 = vunpack.c.l.b16 %v4182
    %v4279 = vunpack.c.l.b16 %v4183
    %v4280 = vunpack.c.l.b16 %v4184
    %v4281 = vunpack.c.l.b16 %v4185
    %v4282 = vunpack.c.l.b16 %v4186
    %v4283 = vunpack.c.l.b16 %v4187
    %v4284 = vunpack.c.l.b16 %v4188
    %v4285 = vunpack.c.l.b16 %v4189
    %v4286 = vunpack.c.l.b16 %v4190
    %v4287 = vunpack.c.l.b16 %v4191
    %v4288 = vunpack.c.l.b16 %v4192
    %v4289 = vunpack.c.l.b16 %v4193
    %v4290 = vunpack.c.l.b16 %v4194
    %v4291 = vunpack.c.l.b16 %v4195
    %v4292 = vunpack.c.l.b16 %v4196
    %v4293 = vunpack.c.l.b16 %v4197
    %v4294 = vunpack.c.l.b16 %v4198
    %v4295 = vunpack.c.l.b16 %v4199
    %v4296 = vunpack.c.l.b16 %v4200
    %v4297 = vunpack.c.l.b16 %v4201
    %v4298 = vunpack.c.l.b16 %v4202
    %v4299 = vunpack.c.l.b16 %v4203
    %v4300 = vunpack.c.l.b16 %v4204
    %v4301 = vunpack.c.l.b16 %v4205
    %v4302 = vunpack.c.l.b16 %v4206
    %v4303 = vunpack.c.l.b16 %v4207
    %v4304 = vunpack.c.l.b16 %v4208
    %v4305 = vunpack.c.l.b16 %v4209
    %v4306 = vunpack.c.l.b16 %v4210
    %v4307 = vunpack.c.l.b16 %v4211
    %v4308 = vpack.c.b16 %v4261, %v4260
    %v4309 = vpack.c.b16 %v4263, %v4262
    %v4310 = vpack.c.b16 %v4265, %v4264
    %v4311 = vpack.c.b16 %v4267, %v4266
    %v4312 = vpack.c.b16 %v4269, %v4268
    %v4313 = vpack.c.b16 %v4271, %v4270
    %v4314 = vpack.c.b16 %v4273, %v4272
    %v4315 = vpack.c.b16 %v4275, %v4274
    %v4316 = vpack.c.b16 %v4277, %v4276
    %v4317 = vpack.c.b16 %v4279, %v4278
    %v4318 = vpack.c.b16 %v4281, %v4280
    %v4319 = vpack.c.b16 %v4283, %v4282
    %v4320 = vpack.c.b16 %v4285, %v4284
    %v4321 = vpack.c.b16 %v4287, %v4286
    %v4322 = vpack.c.b16 %v4289, %v4288
    %v4323 = vpack.c.b16 %v4291, %v4290
    %v4324 = vpack.c.b16 %v4293, %v4292
    %v4325 = vpack.c.b16 %v4295, %v4294
    %v4326 = vpack.c.b16 %v4297, %v4296
    %v4327 = vpack.c.b16 %v4299, %v4298
    %v4328 = vpack.c.b16 %v4301, %v4300
    %v4329 = vpack.c.b16 %v4303, %v4302
    %v4330 = vpack.c.b16 %v4305, %v4304
    %v4331 = vpack.c.b16 %v4307, %v4306
    %4356 = vmatpush.bf16.msra.mxu0 %v4315
    %4357 = vmatpush.bf16.msra.mxu0 %v4314
    %4358 = vmatpush.bf16.msra.mxu0 %v4313
    %4359 = vmatpush.bf16.msra.mxu0 %v4312
    %4360 = vmatpush.bf16.msra.mxu0 %v4311
    %4361 = vmatpush.bf16.msra.mxu0 %v4310
    %4362 = vmatpush.bf16.msra.mxu0 %v4309
    %4363 = vmatpush.bf16.msra.mxu0 %v4308
    %4364 = vmatmul.bf16.gmra.mxu0 %v4135
    %v4365 = vpop.f32.mrf.mxu0
    %v4366 = vadd.f32 0.0, %v4365
    %v4367 = vpop.f32.mrf.mxu0
    %v4368 = vadd.f32 0.0, %v4367
    %4369 = vmatmul.bf16.gmra.mxu0 %v4136
    %v4370 = vpop.f32.mrf.mxu0
    %v4371 = vadd.f32 0.0, %v4370
    %v4372 = vpop.f32.mrf.mxu0
    %v4373 = vadd.f32 0.0, %v4372
    %4374 = vdwg.mxu0
    %4375 = vmatpush.bf16.msra.mxu0 %v4323
    %4376 = vmatpush.bf16.msra.mxu0 %v4322
    %4377 = vmatpush.bf16.msra.mxu0 %v4321
    %4378 = vmatpush.bf16.msra.mxu0 %v4320
    %4379 = vmatpush.bf16.msra.mxu0 %v4319
    %4380 = vmatpush.bf16.msra.mxu0 %v4318
    %4381 = vmatpush.bf16.msra.mxu0 %v4317
    %4382 = vmatpush.bf16.msra.mxu0 %v4316
    %4383 = vmatmul.bf16.gmra.mxu0 %v4147
    %v4384 = vpop.f32.mrf.mxu0
    %v4385 = vadd.f32 %v4366, %v4384
    %v4386 = vpop.f32.mrf.mxu0
    %v4387 = vadd.f32 %v4368, %v4386
    %4388 = vmatmul.bf16.gmra.mxu0 %v4148
    %v4389 = vpop.f32.mrf.mxu0
    %v4390 = vadd.f32 %v4371, %v4389
    %v4391 = vpop.f32.mrf.mxu0
    %v4392 = vadd.f32 %v4373, %v4391
    %4393 = vdwg.mxu0
    %4394 = vmatpush.bf16.msra.mxu0 %v4331
    %4395 = vmatpush.bf16.msra.mxu0 %v4330
    %4396 = vmatpush.bf16.msra.mxu0 %v4329
    %4397 = vmatpush.bf16.msra.mxu0 %v4328
    %4398 = vmatpush.bf16.msra.mxu0 %v4327
    %4399 = vmatpush.bf16.msra.mxu0 %v4326
    %4400 = vmatpush.bf16.msra.mxu0 %v4325
    %4401 = vmatpush.bf16.msra.mxu0 %v4324
    %4402 = vmatmul.bf16.gmra.mxu0 %v4159
    %v4403 = vpop.f32.mrf.mxu0
    %v4404 = vadd.f32 %v4385, %v4403
    %v4405 = vpop.f32.mrf.mxu0
    %v4406 = vadd.f32 %v4387, %v4405
    %4407 = vmatmul.bf16.gmra.mxu0 %v4160
    %v4408 = vpop.f32.mrf.mxu0
    %v4409 = vadd.f32 %v4390, %v4408
    %v4410 = vpop.f32.mrf.mxu0
    %v4411 = vadd.f32 %v4392, %v4410
    %4412 = vdwg.mxu0
    %v4413 = vld [vmem:[%s2 + $0x1c] sm:$0x1]
    %v4414 = vperm.slane %v4413, 0
    %v4415 = vmul.f32 %v4404, %v4414
    %v4416 = vmul.f32 %v4406, %v4414
    %v4417 = vmul.f32 %v4409, %v4414
    %v4418 = vmul.f32 %v4411, %v4414
    %v4419 = vld [vmem:[%s2 + $0x1d] sm:$0x1]
    %v4420 = vperm.slane %v4419, 0
    %v4421 = vadd.f32 %v4415, %v4420
    %v4422 = vadd.f32 %v4416, %v4420
    %v4423 = vadd.f32 %v4417, %v4420
    %v4424 = vadd.f32 %v4418, %v4420
    %v4425 = vadd.f32 %v4421, %v3749
    %v4426 = vadd.f32 %v4422, %v3750
    %v4427 = vadd.f32 %v4423, %v3751
    %v4428 = vadd.f32 %v4424, %v3752
    %v4429 = vmax.f32 %v4425, 0.0
    %v4430 = vmax.f32 %v4426, 0.0
    %v4431 = vmax.f32 %v4427, 0.0
    %v4432 = vmax.f32 %v4428, 0.0
    %v4433 = vsel %vm38, 1, 0
    %v4434 = vsel %vm39, 1, 0
    %v4435 = vsel %vm40, 1, 0
    %v4436 = vsel %vm41, 1, 0
    %vm4437 = vcmp.eq.s32.totalorder %v4433, 1
    %vm4438 = vcmp.eq.s32.totalorder %v4434, 1
    %vm4439 = vcmp.eq.s32.totalorder %v4435, 1
    %vm4440 = vcmp.eq.s32.totalorder %v4436, 1
    %v4441 = vsel %vm4437, %v4429, 0.0
    %v4442 = vsel %vm4438, %v4430, 0.0
    %v4443 = vsel %vm4439, %v4431, 0.0
    %v4444 = vsel %vm4440, %v4432, 0.0
    %v4445 = vadd.f32 %v4441, %v4442
    %v4446 = vrot.slane %v4445, 4
    %v4447 = vadd.f32 %v4445, %v4446
    %v4448 = vrot.slane %v4447, 2
    %v4449 = vadd.f32 %v4447, %v4448
    %v4450 = vrot.slane %v4449, 1
    %v4451 = vadd.f32 %v4449, %v4450
    %v4452 = vadd.f32 %v4443, %v4444
    %v4453 = vrot.slane %v4452, 4
    %v4454 = vadd.f32 %v4452, %v4453
    %v4455 = vrot.slane %v4454, 2
    %v4456 = vadd.f32 %v4454, %v4455
    %v4457 = vrot.slane %v4456, 1
    %v4458 = vadd.f32 %v4456, %v4457
    %v4459 = vmul.f32 %v4451, 0.11111111
    %v4460 = vmul.f32 %v4458, 0.11111111
    %v4461 = vld [vmem:[%s2 + $0x1e] sm:$0x1]
    %v4462 = vperm.slane %v4461, 0
    %v4463 = vmul.f32 %v4459, %v4462
    %v4464 = vmul.f32 %v4460, %v4462
    %v4465 = vld [vmem:[%s2 + $0x1f] sm:$0x1]
    %v4466 = vperm.slane %v4465, 0
    %v4467 = vadd.f32 %v4463, %v4466
    %v4468 = vadd.f32 %v4464, %v4466
    %v4469 = vld [vmem:[%s2 + $0x20] sm:$0x1]
    %v4470 = vperm.slane %v4469, 0
    %v4471 = vmul.f32 %v4459, %v4470
    %v4472 = vmul.f32 %v4460, %v4470
    %v4473 = vld [vmem:[%s2 + $0x21] sm:$0x1]
    %v4474 = vperm.slane %v4473, 0
    %v4475 = vadd.f32 %v4471, %v4474
    %v4476 = vadd.f32 %v4472, %v4474
    %v4479 = vrot.slane %v4468, 7
    %vm4480 = vcmask 1041409
    %v4481 = vsel %vm4480, %v4479, %v4467
    %v4485 = vrot.slane %v4476, 7
    %v4486 = vsel %vm4480, %v4485, %v4475
    %v4488 = vpack.c.bf16 %v4481, %v4481
    %v4489 = vpack.c.bf16 %v4486, %v4486
    %v4490 = vld [vmem:[%s3] sm:$0xf]
    %v4491 = vld [vmem:[%s3 + $0x4] sm:$0xf]
    %v4492 = vld [vmem:[%s3 + $0x8] sm:$0xf]
    %v4493 = vld [vmem:[%s3 + $0xc] sm:$0xf]
    %v4494 = vld [vmem:[%s3 + $0x10] sm:$0xf]
    %v4495 = vld [vmem:[%s3 + $0x14] sm:$0xf]
    %v4496 = vld [vmem:[%s3 + $0x18] sm:$0xf]
    %v4497 = vld [vmem:[%s3 + $0x1c] sm:$0xf]
    %v4498 = vld [vmem:[%s3 + $0x20] sm:$0xf]
    %v4499 = vld [vmem:[%s3 + $0x24] sm:$0xf]
    %v4500 = vld [vmem:[%s3 + $0x28] sm:$0xf]
    %v4501 = vld [vmem:[%s3 + $0x2c] sm:$0xf]
    %v4502 = vld [vmem:[%s3 + $0x30] sm:$0xf]
    %v4503 = vld [vmem:[%s3 + $0x34] sm:$0xf]
    %v4504 = vld [vmem:[%s3 + $0x38] sm:$0xf]
    %v4505 = vld [vmem:[%s3 + $0x3c] sm:$0xf]
    %v4506 = vld [vmem:[%s3 + $0x40] sm:$0xf]
    %v4507 = vld [vmem:[%s3 + $0x44] sm:$0xf]
    %v4508 = vld [vmem:[%s3 + $0x48] sm:$0xf]
    %v4509 = vld [vmem:[%s3 + $0x4c] sm:$0xf]
    %v4510 = vld [vmem:[%s3 + $0x50] sm:$0xf]
    %v4511 = vld [vmem:[%s3 + $0x54] sm:$0xf]
    %v4512 = vld [vmem:[%s3 + $0x58] sm:$0xf]
    %v4513 = vld [vmem:[%s3 + $0x5c] sm:$0xf]
    %v4514 = vld [vmem:[%s3 + $0x60] sm:$0xf]
    %v4515 = vld [vmem:[%s3 + $0x64] sm:$0xf]
    %v4516 = vld [vmem:[%s3 + $0x68] sm:$0xf]
    %v4517 = vld [vmem:[%s3 + $0x6c] sm:$0xf]
    %v4518 = vld [vmem:[%s3 + $0x70] sm:$0xf]
    %v4519 = vld [vmem:[%s3 + $0x74] sm:$0xf]
    %v4520 = vld [vmem:[%s3 + $0x78] sm:$0xf]
    %v4521 = vld [vmem:[%s3 + $0x7c] sm:$0xf]
    %v4522 = vld [vmem:[%s3 + $0x80] sm:$0xf]
    %v4523 = vld [vmem:[%s3 + $0x84] sm:$0xf]
    %v4524 = vld [vmem:[%s3 + $0x88] sm:$0xf]
    %v4525 = vld [vmem:[%s3 + $0x8c] sm:$0xf]
    %v4526 = vld [vmem:[%s3 + $0x90] sm:$0xf]
    %v4527 = vld [vmem:[%s3 + $0x94] sm:$0xf]
    %v4528 = vld [vmem:[%s3 + $0x98] sm:$0xf]
    %v4529 = vld [vmem:[%s3 + $0x9c] sm:$0xf]
    %v4530 = vld [vmem:[%s3 + $0xa0] sm:$0xf]
    %v4531 = vld [vmem:[%s3 + $0xa4] sm:$0xf]
    %v4532 = vld [vmem:[%s3 + $0xa8] sm:$0xf]
    %v4533 = vld [vmem:[%s3 + $0xac] sm:$0xf]
    %v4534 = vld [vmem:[%s3 + $0xb0] sm:$0xf]
    %v4535 = vld [vmem:[%s3 + $0xb4] sm:$0xf]
    %v4536 = vld [vmem:[%s3 + $0xb8] sm:$0xf]
    %v4537 = vld [vmem:[%s3 + $0xbc] sm:$0xf]
    %v4538 = vld [vmem:[%s3 + $0xc0] sm:$0xf]
    %v4539 = vld [vmem:[%s3 + $0xc4] sm:$0xf]
    %v4540 = vld [vmem:[%s3 + $0xc8] sm:$0xf]
    %v4541 = vld [vmem:[%s3 + $0xcc] sm:$0xf]
    %v4542 = vld [vmem:[%s3 + $0xd0] sm:$0xf]
    %v4543 = vld [vmem:[%s3 + $0xd4] sm:$0xf]
    %v4544 = vld [vmem:[%s3 + $0xd8] sm:$0xf]
    %v4545 = vld [vmem:[%s3 + $0xdc] sm:$0xf]
    %v4546 = vld [vmem:[%s3 + $0xe0] sm:$0xf]
    %v4547 = vld [vmem:[%s3 + $0xe4] sm:$0xf]
    %v4548 = vld [vmem:[%s3 + $0xe8] sm:$0xf]
    %v4549 = vld [vmem:[%s3 + $0xec] sm:$0xf]
    %v4550 = vld [vmem:[%s3 + $0xf0] sm:$0xf]
    %v4551 = vld [vmem:[%s3 + $0xf4] sm:$0xf]
    %v4552 = vld [vmem:[%s3 + $0xf8] sm:$0xf]
    %v4553 = vld [vmem:[%s3 + $0xfc] sm:$0xf]
    %v4554 = vld [vmem:[%s4] sm:$0x1]
    %v4555 = vperm.slane %v4554, 0
    %v4604 = vunpack.c.l.b16 %v4490
    %v4605 = vunpack.c.l.b16 %v4491
    %v4606 = vunpack.c.l.b16 %v4492
    %v4607 = vunpack.c.l.b16 %v4493
    %v4608 = vunpack.c.l.b16 %v4494
    %v4609 = vunpack.c.l.b16 %v4495
    %v4610 = vunpack.c.l.b16 %v4496
    %v4611 = vunpack.c.l.b16 %v4497
    %v4612 = vunpack.c.l.b16 %v4498
    %v4613 = vunpack.c.l.b16 %v4499
    %v4614 = vunpack.c.l.b16 %v4500
    %v4615 = vunpack.c.l.b16 %v4501
    %v4616 = vunpack.c.l.b16 %v4502
    %v4617 = vunpack.c.l.b16 %v4503
    %v4618 = vunpack.c.l.b16 %v4504
    %v4619 = vunpack.c.l.b16 %v4505
    %v4620 = vunpack.c.l.b16 %v4506
    %v4621 = vunpack.c.l.b16 %v4507
    %v4622 = vunpack.c.l.b16 %v4508
    %v4623 = vunpack.c.l.b16 %v4509
    %v4624 = vunpack.c.l.b16 %v4510
    %v4625 = vunpack.c.l.b16 %v4511
    %v4626 = vunpack.c.l.b16 %v4512
    %v4627 = vunpack.c.l.b16 %v4513
    %v4628 = vunpack.c.l.b16 %v4514
    %v4629 = vunpack.c.l.b16 %v4515
    %v4630 = vunpack.c.l.b16 %v4516
    %v4631 = vunpack.c.l.b16 %v4517
    %v4632 = vunpack.c.l.b16 %v4518
    %v4633 = vunpack.c.l.b16 %v4519
    %v4634 = vunpack.c.l.b16 %v4520
    %v4635 = vunpack.c.l.b16 %v4521
    %v4636 = vunpack.c.l.b16 %v4522
    %v4637 = vunpack.c.l.b16 %v4523
    %v4638 = vunpack.c.l.b16 %v4524
    %v4639 = vunpack.c.l.b16 %v4525
    %v4640 = vunpack.c.l.b16 %v4526
    %v4641 = vunpack.c.l.b16 %v4527
    %v4642 = vunpack.c.l.b16 %v4528
    %v4643 = vunpack.c.l.b16 %v4529
    %v4644 = vunpack.c.l.b16 %v4530
    %v4645 = vunpack.c.l.b16 %v4531
    %v4646 = vunpack.c.l.b16 %v4532
    %v4647 = vunpack.c.l.b16 %v4533
    %v4648 = vunpack.c.l.b16 %v4534
    %v4649 = vunpack.c.l.b16 %v4535
    %v4650 = vunpack.c.l.b16 %v4536
    %v4651 = vunpack.c.l.b16 %v4537
    %v4652 = vpack.c.b16 %v4605, %v4604
    %v4653 = vpack.c.b16 %v4607, %v4606
    %v4654 = vpack.c.b16 %v4609, %v4608
    %v4655 = vpack.c.b16 %v4611, %v4610
    %v4656 = vpack.c.b16 %v4613, %v4612
    %v4657 = vpack.c.b16 %v4615, %v4614
    %v4658 = vpack.c.b16 %v4617, %v4616
    %v4659 = vpack.c.b16 %v4619, %v4618
    %v4660 = vpack.c.b16 %v4621, %v4620
    %v4661 = vpack.c.b16 %v4623, %v4622
    %v4662 = vpack.c.b16 %v4625, %v4624
    %v4663 = vpack.c.b16 %v4627, %v4626
    %v4664 = vpack.c.b16 %v4629, %v4628
    %v4665 = vpack.c.b16 %v4631, %v4630
    %v4666 = vpack.c.b16 %v4633, %v4632
    %v4667 = vpack.c.b16 %v4635, %v4634
    %v4668 = vpack.c.b16 %v4637, %v4636
    %v4669 = vpack.c.b16 %v4639, %v4638
    %v4670 = vpack.c.b16 %v4641, %v4640
    %v4671 = vpack.c.b16 %v4643, %v4642
    %v4672 = vpack.c.b16 %v4645, %v4644
    %v4673 = vpack.c.b16 %v4647, %v4646
    %v4674 = vpack.c.b16 %v4649, %v4648
    %v4675 = vpack.c.b16 %v4651, %v4650
    %4700 = vmatpush.bf16.msra.mxu0 %v4659
    %4701 = vmatpush.bf16.msra.mxu0 %v4658
    %4702 = vmatpush.bf16.msra.mxu0 %v4657
    %4703 = vmatpush.bf16.msra.mxu0 %v4656
    %4704 = vmatpush.bf16.msra.mxu0 %v4655
    %4705 = vmatpush.bf16.msra.mxu0 %v4654
    %4706 = vmatpush.bf16.msra.mxu0 %v4653
    %4707 = vmatpush.bf16.msra.mxu0 %v4652
    %4708 = vmatmul.bf16.gmra.mxu0 %v4488
    %v4709 = vpop.f32.mrf.mxu0
    %v4710 = vadd.f32 %v4555, %v4709
    %v4711 = vpop.f32.mrf.mxu0
    %4712 = vdwg.mxu0
    %4713 = vmatpush.bf16.msra.mxu0 %v4667
    %4714 = vmatpush.bf16.msra.mxu0 %v4666
    %4715 = vmatpush.bf16.msra.mxu0 %v4665
    %4716 = vmatpush.bf16.msra.mxu0 %v4664
    %4717 = vmatpush.bf16.msra.mxu0 %v4663
    %4718 = vmatpush.bf16.msra.mxu0 %v4662
    %4719 = vmatpush.bf16.msra.mxu0 %v4661
    %4720 = vmatpush.bf16.msra.mxu0 %v4660
    %4721 = vmatmul.bf16.gmra.mxu0 %v4489
    %v4722 = vpop.f32.mrf.mxu0
    %v4723 = vadd.f32 %v4710, %v4722
    %v4724 = vpop.f32.mrf.mxu0
    %4725 = vdwg.mxu0
    %4726 = vmatpush.bf16.msra.mxu0 %v4675
    %4727 = vmatpush.bf16.msra.mxu0 %v4674
    %4728 = vmatpush.bf16.msra.mxu0 %v4673
    %4729 = vmatpush.bf16.msra.mxu0 %v4672
    %4730 = vmatpush.bf16.msra.mxu0 %v4671
    %4731 = vmatpush.bf16.msra.mxu0 %v4670
    %4732 = vmatpush.bf16.msra.mxu0 %v4669
    %4733 = vmatpush.bf16.msra.mxu0 %v4668
    %4734 = vmatmul.bf16.gmra.mxu0 %v4489
    %v4735 = vpop.f32.mrf.mxu0
    %v4736 = vadd.f32 %v4723, %v4735
    %v4737 = vpop.f32.mrf.mxu0
    %4738 = vdwg.mxu0
    %v4739 = vmax.f32 %v4736, 0.0
    %v4740 = vpack.c.bf16 %v4739, %v4739
    %v4741 = vld [vmem:[%s4 + $0x1] sm:$0x1]
    %v4742 = vperm.slane %v4741, 0
    %v4759 = vunpack.c.l.b16 %v4538
    %v4760 = vunpack.c.l.b16 %v4539
    %v4761 = vunpack.c.l.b16 %v4540
    %v4762 = vunpack.c.l.b16 %v4541
    %v4763 = vunpack.c.l.b16 %v4542
    %v4764 = vunpack.c.l.b16 %v4543
    %v4765 = vunpack.c.l.b16 %v4544
    %v4766 = vunpack.c.l.b16 %v4545
    %v4767 = vunpack.c.l.b16 %v4546
    %v4768 = vunpack.c.l.b16 %v4547
    %v4769 = vunpack.c.l.b16 %v4548
    %v4770 = vunpack.c.l.b16 %v4549
    %v4771 = vunpack.c.l.b16 %v4550
    %v4772 = vunpack.c.l.b16 %v4551
    %v4773 = vunpack.c.l.b16 %v4552
    %v4774 = vunpack.c.l.b16 %v4553
    %v4775 = vpack.c.b16 %v4760, %v4759
    %v4776 = vpack.c.b16 %v4762, %v4761
    %v4777 = vpack.c.b16 %v4764, %v4763
    %v4778 = vpack.c.b16 %v4766, %v4765
    %v4779 = vpack.c.b16 %v4768, %v4767
    %v4780 = vpack.c.b16 %v4770, %v4769
    %v4781 = vpack.c.b16 %v4772, %v4771
    %v4782 = vpack.c.b16 %v4774, %v4773
    %4791 = vmatpush.bf16.msra.mxu0 %v4782
    %4792 = vmatpush.bf16.msra.mxu0 %v4781
    %4793 = vmatpush.bf16.msra.mxu0 %v4780
    %4794 = vmatpush.bf16.msra.mxu0 %v4779
    %4795 = vmatpush.bf16.msra.mxu0 %v4778
    %4796 = vmatpush.bf16.msra.mxu0 %v4777
    %4797 = vmatpush.bf16.msra.mxu0 %v4776
    %4798 = vmatpush.bf16.msra.mxu0 %v4775
    %4799 = vmatmul.bf16.gmra.mxu0 %v4740
    %v4800 = vpop.f32.mrf.mxu0
    %v4801 = vadd.f32 %v4742, %v4800
    %v4802 = vpop.f32.mrf.mxu0
    %4803 = vdwg.mxu0
    %vm4804 = vcmp.lt.s32.totalorder %v43, 2
    %v4805 = vsel %vm4804, 1, 0
    %vm4806 = vcmp.eq.s32.totalorder %v4805, 1
    %v4807 = vsel %vm4806, %v4801, -1e+30
    %vm4808 = vcmask 1041408
    %v4809 = vsel %vm4808, %v4807, -inf
    %4810 = vmax.xlane.f32.xlu0 %v4809
    %v4811 = vpop.xlane.xlu0 %4810
    %v4812 = vsub.f32 %v4807, %v4811
    %v4813 = vmul.f32 %v4812, 1.442695
    %v4814 = vpow.pop %v4813
    %v4815 = vsel %vm4808, %v4814, 0.0
    %4816 = vadd.xlane.f32.xlu0 %v4815
    %v4817 = vpop.xlane.xlu0 %4816
    %v4818 = vrcp.pop %v4817
    %v4819 = vmul.f32 %v4817, %v4818
    %v4820 = vsub.f32 1.0, %v4819
    %v4821 = vmul.f32 %v4818, %v4820
    %v4822 = vadd.f32 %v4818, %v4821
    %vm4823 = vweird.f32 %v4817
    %vm4824 = vweird.f32 %v4818
    %vm4825 = vmor %vm4823, %vm4824
    %v4826 = vsel %vm4825, %v4818, %v4822
    %v4827 = vand.u32 2147483647, %v4817
    %vm4828 = vcmp.eq.f32.partialorder %v4827, 8.507059e+37
    %v4829 = vand.u32 %v4817, 2147483648
    %v4830 = vor.u32 1.1754944e-38, %v4829
    %v4831 = vsel %vm4828, %v4830, %v4826
    %v4832 = vmul.f32 %v4814, %v4831
    %4833 = vst [vmem:[#allocation2] sm:$0x3] %v4832
    // Predicated region
    $region22: #{resnet5_big_forward.1} parent=1 // pred_check
      _
    $region23: #{resnet5_big_forward.1} parent=1 // pred_check_branch
      %4835 = sbr.rel (0) target = $region25
    $region24: #{resnet5_big_forward.1} parent=1 // pred_region
      %4837 = vsyncadd [#allocation3], 0
      %s4839 = sshll.u32 [#allocation2], 4
      %s4840 = int_to_ptr.vmem [resolvable:$true] %s4839
      %s4841 = sshll.u32 %s5, 4
      %s4842 = int_to_ptr.hbm [resolvable:$true] %s4841
      %4844 = dma.vmem_to_hbm [thread:$0]  %s4840, 32, %s4842, [#allocation3]
    $region25: #{resnet5_big_forward.1} parent=1 // pred_fallthru
      _
    // Predicated region
    $region26: #{resnet5_big_forward.1} parent=1 // pred_check
      _
    $region27: #{resnet5_big_forward.1} parent=1 // pred_check_branch
      %4846 = sbr.rel (0) target = $region29
    $region28: #{resnet5_big_forward.1} parent=1 // pred_region
      %4848 = dma.done [#allocation3], 32
    $region29: #{resnet5_big_forward.1} parent=1 // pred_fallthru
      _
    %4849 = vsyncpa [#allocation3], 1

</llo_original>
